<compile_context>
chip_gen: v5e
topology: v5e:2x2
jax: 0.10.0
libtpu: 0.0.40
codegen_flags: <defaults>
</compile_context>

<pallas_src>
import jax
import jax.numpy as jnp
from jax.experimental import pallas as pl
from jax.experimental.pallas import tpu as pltpu

N_WIRES = 3606
HIDDEN = 512
ENCODED_DIM = 32
TILE = 1024                                           # n_wires tile (multiple of 128)
N_WIRES_PAD = ((N_WIRES + TILE - 1) // TILE) * TILE   # 4096 = 4 tiles
SUBLANE = 8


def _round_up(x, m):
    return ((x + m - 1) // m) * m


# ---------------------------------------------------------------------------
# Encoder (+ fused dec.lin1) kernel, K-reduction over n_wires tiles:
#   acc  = sum_k mask(x[:, k-tile]) @ W1[k-tile, :]   (accumulated in h2_ref)
#   h    = leaky_relu(acc + b1, 0.2)
#   z    = tanh(h @ W2 + b2)
#   h2   = relu(z @ W3 + b3)                          (decoder first layer)
# ---------------------------------------------------------------------------
def _enc_kernel(x_ref, w1_ref, b1_ref, w2_ref, b2_ref, w3_ref, b3_ref, h2_ref):
    k = pl.program_id(0)

    @pl.when(k == 0)
    def _():
        h2_ref[...] = jnp.zeros_like(h2_ref)

    # x is NOT padded on the wire axis; the last tile is ragged (534 valid
    # columns).  OOB lane contents are unspecified, so zero them before the
    # dot (the matching W1 rows are zero-padded, so this is exact).
    col = k * TILE + jax.lax.broadcasted_iota(jnp.int32, (1, TILE), 1)
    xt = jnp.where(col < N_WIRES, x_ref[...], 0.0).astype(jnp.bfloat16)

    # bf16 x bf16 -> f32 accumulate, directly into the resident output block.
    h2_ref[...] += jnp.dot(xt, w1_ref[...], preferred_element_type=jnp.float32)

    @pl.when(k == pl.num_programs(0) - 1)
    def _():
        h = h2_ref[...] + b1_ref[...]
        h = jnp.where(h > 0, h, 0.2 * h)                        # LeakyReLU(0.2)
        z = jnp.tanh(jnp.dot(h, w2_ref[...],
                             preferred_element_type=jnp.float32) + b2_ref[...])
        h2 = jnp.dot(z, w3_ref[...],
                     preferred_element_type=jnp.float32) + b3_ref[...]
        h2_ref[...] = jnp.maximum(h2, 0.0)                      # ReLU


# ---------------------------------------------------------------------------
# Decoder kernel: y[:, n-tile] = h2 @ W4[:, n-tile] + b4[n-tile]
# Every grid step is independent -> "parallel" grid axis.
# ---------------------------------------------------------------------------
def _dec_kernel(h2_ref, w4_ref, b4_ref, y_ref):
    y_ref[...] = (jnp.dot(h2_ref[...].astype(jnp.bfloat16), w4_ref[...],
                          preferred_element_type=jnp.float32)
                  + b4_ref[...]).astype(y_ref.dtype)


def prepare_params(params):
    """Pad W1/W4/b4 to the padded n_wires size and cast the big weights to
    bf16.  Call ONCE, outside jit."""
    w1, b1, w2, b2, w3, b3, w4, b4 = params
    pad = N_WIRES_PAD - N_WIRES
    w1_p = jnp.pad(w1, ((0, pad), (0, 0))).astype(jnp.bfloat16)
    w4_p = jnp.pad(w4, ((0, 0), (0, pad))).astype(jnp.bfloat16)
    b4_p = jnp.pad(b4, ((0, 0), (0, pad)))
    return (w1_p, b1, w2, b2, w3, b3, w4_p, b4_p)


@jax.jit
def vae_forward(x, padded_params):
    """x: (B, N_WIRES) float32 -> y: (B, N_WIRES) float32."""
    w1, b1, w2, b2, w3, b3, w4, b4 = padded_params
    B = x.shape[0]
    B_pad = _round_up(B, SUBLANE)

    # Pad only the (cheap) batch dimension; the wire axis stays ragged and is
    # masked in-kernel.
    x_p = jnp.pad(x, ((0, B_pad - B), (0, 0)))

    n_tiles = pl.cdiv(N_WIRES, TILE)   # 4

    # NOTE(large batch): the x block (B_pad, TILE) and the resident h2/output
    # blocks grow linearly with batch; for B >~ 1024 add a batch grid axis or
    # raise vmem_limit_bytes explicitly (v7x scoped VMEM is 32 MiB).

    # ---------------- encoder (+ fused dec.lin1) ----------------
    enc_cost = pl.CostEstimate(
        flops=2 * B_pad * N_WIRES_PAD * HIDDEN + 4 * B_pad * HIDDEN * ENCODED_DIM,
        transcendentals=B_pad * ENCODED_DIM,
        bytes_accessed=(4 * B_pad * N_WIRES                     # x (f32)
                        + 2 * N_WIRES_PAD * HIDDEN              # W1 (bf16)
                        + 4 * (2 * HIDDEN * ENCODED_DIM + 2 * HIDDEN + ENCODED_DIM)
                        + 4 * B_pad * HIDDEN))                  # h2 out (f32)

    h2 = pl.pallas_call(
        _enc_kernel,
        out_shape=jax.ShapeDtypeStruct((B_pad, HIDDEN), jnp.float32),
        grid_spec=pltpu.PrefetchScalarGridSpec(
            num_scalar_prefetch=0,
            grid=(n_tiles,),
            in_specs=[
                pl.BlockSpec((B_pad, TILE), lambda k: (0, k)),          # x chunk
                pl.BlockSpec((TILE, HIDDEN), lambda k: (k, 0)),         # W1 chunk (bf16)
                pl.BlockSpec((1, HIDDEN), lambda k: (0, 0)),            # b1
                pl.BlockSpec((HIDDEN, ENCODED_DIM), lambda k: (0, 0)),  # W2
                pl.BlockSpec((1, ENCODED_DIM), lambda k: (0, 0)),       # b2
                pl.BlockSpec((ENCODED_DIM, HIDDEN), lambda k: (0, 0)),  # W3
                pl.BlockSpec((1, HIDDEN), lambda k: (0, 0)),            # b3
            ],
            out_specs=pl.BlockSpec((B_pad, HIDDEN), lambda k: (0, 0)),  # resident acc
        ),
        compiler_params=pltpu.CompilerParams(
            dimension_semantics=("arbitrary",)),
        cost_estimate=enc_cost,
    )(x_p, w1, b1, w2, b2, w3, b3)

    # ---------------- decoder (second layer only) ----------------
    dec_cost = pl.CostEstimate(
        flops=2 * B_pad * HIDDEN * N_WIRES_PAD,
        transcendentals=0,
        bytes_accessed=(4 * B_pad * HIDDEN                      # h2 (f32)
                        + 2 * HIDDEN * N_WIRES_PAD              # W4 (bf16)
                        + 4 * N_WIRES_PAD                       # b4
                        + 4 * B_pad * N_WIRES))                 # y (f32)

    y_p = pl.pallas_call(
        _dec_kernel,
        out_shape=jax.ShapeDtypeStruct((B_pad, N_WIRES), jnp.float32),
        grid_spec=pltpu.PrefetchScalarGridSpec(
            num_scalar_prefetch=0,
            grid=(n_tiles,),
            in_specs=[
                pl.BlockSpec((B_pad, HIDDEN), lambda n: (0, 0)),        # h2 (resident)
                pl.BlockSpec((HIDDEN, TILE), lambda n: (0, n)),         # W4 cols (bf16)
                pl.BlockSpec((1, TILE), lambda n: (0, n)),              # b4 cols
            ],
            out_specs=pl.BlockSpec((B_pad, TILE), lambda n: (0, n)),    # ragged last
        ),
        compiler_params=pltpu.CompilerParams(
            dimension_semantics=("parallel",)),       # steps independent
        cost_estimate=dec_cost,
    )(h2, w4, b4)

    return y_p[:B]


def init_params(key):
    """PyTorch nn.Linear default init: U(-1/sqrt(fan_in), 1/sqrt(fan_in))."""
    def linear(key, fan_in, fan_out):
        kw, kb = jax.random.split(key)
        bound = 1.0 / jnp.sqrt(float(fan_in))
        w = jax.random.uniform(kw, (fan_in, fan_out), jnp.float32, -bound, bound)
        b = jax.random.uniform(kb, (1, fan_out), jnp.float32, -bound, bound)
        return w, b

    k1, k2, k3, k4 = jax.random.split(key, 4)
    w1, b1 = linear(k1, N_WIRES, HIDDEN)        # enc.lin1
    w2, b2 = linear(k2, HIDDEN, ENCODED_DIM)    # enc.lin2
    w3, b3 = linear(k3, ENCODED_DIM, HIDDEN)    # dec.lin1
    w4, b4 = linear(k4, HIDDEN, N_WIRES)        # dec.lin2
    return (w1, b1, w2, b2, w3, b3, w4, b4)


def vae_forward_ref_mixed(x, params):
    """Pure-JAX reference mirroring the kernel's mixed precision
    (bf16 weight/activation operands for the big dots, f32 accumulation)."""
    w1, b1, w2, b2, w3, b3, w4, b4 = params
    h = jnp.dot(x.astype(jnp.bfloat16), w1.astype(jnp.bfloat16),
                preferred_element_type=jnp.float32) + b1
    h = jnp.where(h > 0, h, 0.2 * h)
    z = jnp.tanh(jnp.dot(h, w2, preferred_element_type=jnp.float32) + b2)
    h2 = jnp.maximum(jnp.dot(z, w3, preferred_element_type=jnp.float32) + b3, 0.0)
    return jnp.dot(h2.astype(jnp.bfloat16), w4.astype(jnp.bfloat16),
                   preferred_element_type=jnp.float32) + b4


if __name__ == "__main__":
    key = jax.random.PRNGKey(0)
    kx, kp = jax.random.split(key)

    B = 4
    x = jax.random.normal(kx, (B, N_WIRES), jnp.float32)
    params = init_params(kp)
    padded_params = prepare_params(params)     # pad + bf16-cast once, outside jit

    y = vae_forward(x, padded_params)
    y = jax.block_until_ready(y)

    y_ref = vae_forward_ref_mixed(x, params)
    assert y.shape == (B, N_WIRES)
    max_err = float(jnp.max(jnp.abs(y - y_ref)))
    assert jnp.allclose(y, y_ref, atol=5e-3, rtol=5e-3), max_err

    print("KERNEL_OK")
</pallas_src>

<mosaic_0001>
module attributes {stable_mosaic.version = 11 : i64} {
  func.func @_enc_kernel(%arg0: i32, %arg1: memref<8x1024xf32, #tpu.memory_space<vmem>>, %arg2: memref<1024x512xbf16, #tpu.memory_space<vmem>>, %arg3: memref<1x512xf32, #tpu.memory_space<vmem>>, %arg4: memref<512x32xf32, #tpu.memory_space<vmem>>, %arg5: memref<1x32xf32, #tpu.memory_space<vmem>>, %arg6: memref<32x512xf32, #tpu.memory_space<vmem>>, %arg7: memref<1x512xf32, #tpu.memory_space<vmem>>, %arg8: memref<8x512xf32, #tpu.memory_space<vmem>>) attributes {dimension_semantics = [#tpu.dimension_semantics<arbitrary>], iteration_bounds = array<i64: 4>, scalar_prefetch = 0 : i64, scratch_operands = 0 : i64, tpu.core_type = #tpu.core_type<tc>, window_params = [{transform_indices = @transform_0, window_bounds = array<i64: 8, 1024>}, {transform_indices = @transform_1, window_bounds = array<i64: 1024, 512>}, {pipeline_mode = #tpu.pipeline_mode<synchronous>, transform_indices = @transform_2, window_bounds = array<i64: 1, 512>}, {pipeline_mode = #tpu.pipeline_mode<synchronous>, transform_indices = @transform_3, window_bounds = array<i64: 512, 32>}, {pipeline_mode = #tpu.pipeline_mode<synchronous>, transform_indices = @transform_4, window_bounds = array<i64: 1, 32>}, {pipeline_mode = #tpu.pipeline_mode<synchronous>, transform_indices = @transform_5, window_bounds = array<i64: 32, 512>}, {pipeline_mode = #tpu.pipeline_mode<synchronous>, transform_indices = @transform_6, window_bounds = array<i64: 1, 512>}, {pipeline_mode = #tpu.pipeline_mode<synchronous>, transform_indices = @transform_7, window_bounds = array<i64: 8, 512>}]} {
    %c0_i32 = arith.constant 0 : i32
    %0 = arith.cmpi eq, %arg0, %c0_i32 : i32
    %1 = arith.extui %0 : i1 to i32
    %c0_i32_0 = arith.constant 0 : i32
    %2 = arith.cmpi ne, %1, %c0_i32_0 : i32
    scf.if %2 {
      %cst_10 = arith.constant 0.000000e+00 : f32
      %23 = vector.broadcast %cst_10 : f32 to vector<8x512xf32>
      %c0_11 = arith.constant 0 : index
      %c0_12 = arith.constant 0 : index
      %24 = vector.load %arg8[%c0_11, %c0_12] : memref<8x512xf32, #tpu.memory_space<vmem>>, vector<8x512xf32>
      tpu.vector_store %arg8[%c0_11, %c0_12], %23 {strides = array<i32>} : memref<8x512xf32, #tpu.memory_space<vmem>>, vector<8x512xf32>,
    } else {
    }
    %c1024_i32 = arith.constant 1024 : i32
    %3 = arith.muli %arg0, %c1024_i32 : i32
    %4 = tpu.iota {dimensions = array<i32: 1>} : vector<1x1024xi32>
    %5 = vector.broadcast %3 : i32 to vector<1x1024xi32>
    %6 = arith.addi %5, %4 : vector<1x1024xi32>
    %c3606_i32 = arith.constant 3606 : i32
    %7 = vector.broadcast %c3606_i32 : i32 to vector<1x1024xi32>
    %8 = arith.cmpi slt, %6, %7 : vector<1x1024xi32>
    %c0 = arith.constant 0 : index
    %c0_1 = arith.constant 0 : index
    %9 = vector.load %arg1[%c0, %c0_1] : memref<8x1024xf32, #tpu.memory_space<vmem>>, vector<8x1024xf32>
    %cst = arith.constant 0.000000e+00 : f32
    %10 = vector.shape_cast %8 : vector<1x1024xi1> to vector<1x1024xi1>
    %11 = vector.broadcast %10 : vector<1x1024xi1> to vector<8x1024xi1>
    %12 = vector.broadcast %cst : f32 to vector<8x1024xf32>
    %13 = arith.select %11, %9, %12 : vector<8x1024xi1>, vector<8x1024xf32>
    %14 = arith.truncf %13 : vector<8x1024xf32> to vector<8x1024xbf16>
    %c0_2 = arith.constant 0 : index
    %c0_3 = arith.constant 0 : index
    %15 = vector.load %arg8[%c0_2, %c0_3] : memref<8x512xf32, #tpu.memory_space<vmem>>, vector<8x512xf32>
    %c0_4 = arith.constant 0 : index
    %c0_5 = arith.constant 0 : index
    %16 = vector.load %arg2[%c0_4, %c0_5] : memref<1024x512xbf16, #tpu.memory_space<vmem>>, vector<1024x512xbf16>
    %cst_6 = arith.constant dense<0.000000e+00> : vector<8x512xf32>
    %17 = tpu.matmul %14, %16, %cst_6 {dimension_numbers = #tpu.dot_dimension_numbers<[1], [0], [0], [1], [0, 0, 1, 1], [], []>} : vector<8x1024xbf16>, vector<1024x512xbf16>, vector<8x512xf32> -> vector<8x512xf32>
    %18 = arith.addf %15, %17 : vector<8x512xf32>
    %c0_7 = arith.constant 0 : index
    %c0_8 = arith.constant 0 : index
    %19 = vector.load %arg8[%c0_7, %c0_8] : memref<8x512xf32, #tpu.memory_space<vmem>>, vector<8x512xf32>
    tpu.vector_store %arg8[%c0_7, %c0_8], %18 {strides = array<i32>} : memref<8x512xf32, #tpu.memory_space<vmem>>, vector<8x512xf32>,
    %c3_i32 = arith.constant 3 : i32
    %20 = arith.cmpi eq, %arg0, %c3_i32 : i32
    %21 = arith.extui %20 : i1 to i32
    %c0_i32_9 = arith.constant 0 : i32
    %22 = arith.cmpi ne, %21, %c0_i32_9 : i32
    scf.if %22 {
      %c0_10 = arith.constant 0 : index
      %c0_11 = arith.constant 0 : index
      %23 = vector.load %arg8[%c0_10, %c0_11] : memref<8x512xf32, #tpu.memory_space<vmem>>, vector<8x512xf32>
      %c0_12 = arith.constant 0 : index
      %c0_13 = arith.constant 0 : index
      %24 = vector.load %arg3[%c0_12, %c0_13] : memref<1x512xf32, #tpu.memory_space<vmem>>, vector<1x512xf32>
      %25 = vector.broadcast %24 : vector<1x512xf32> to vector<8x512xf32>
      %26 = arith.addf %23, %25 : vector<8x512xf32>
      %cst_14 = arith.constant 0.000000e+00 : f32
      %27 = vector.broadcast %cst_14 : f32 to vector<8x512xf32>
      %28 = arith.cmpf ogt, %26, %27 : vector<8x512xf32>
      %cst_15 = arith.constant 2.000000e-01 : f32
      %29 = vector.broadcast %cst_15 : f32 to vector<8x512xf32>
      %30 = arith.mulf %29, %26 : vector<8x512xf32>
      %31 = arith.select %28, %26, %30 : vector<8x512xi1>, vector<8x512xf32>
      %c0_16 = arith.constant 0 : index
      %c0_17 = arith.constant 0 : index
      %32 = vector.load %arg4[%c0_16, %c0_17] : memref<512x32xf32, #tpu.memory_space<vmem>>, vector<512x32xf32>
      %cst_18 = arith.constant dense<0.000000e+00> : vector<8x32xf32>
      %33 = tpu.matmul %31, %32, %cst_18 {dimension_numbers = #tpu.dot_dimension_numbers<[1], [0], [0], [1], [0, 0, 1, 1], [], []>} : vector<8x512xf32>, vector<512x32xf32>, vector<8x32xf32> -> vector<8x32xf32>
      %c0_19 = arith.constant 0 : index
      %c0_20 = arith.constant 0 : index
      %34 = vector.load %arg5[%c0_19, %c0_20] : memref<1x32xf32, #tpu.memory_space<vmem>>, vector<1x32xf32>
      %35 = vector.broadcast %34 : vector<1x32xf32> to vector<8x32xf32>
      %36 = arith.addf %33, %35 : vector<8x32xf32>
      %37 = math.tanh %36 : vector<8x32xf32>
      %c0_21 = arith.constant 0 : index
      %c0_22 = arith.constant 0 : index
      %38 = vector.load %arg6[%c0_21, %c0_22] : memref<32x512xf32, #tpu.memory_space<vmem>>, vector<32x512xf32>
      %cst_23 = arith.constant dense<0.000000e+00> : vector<8x512xf32>
      %39 = tpu.matmul %37, %38, %cst_23 {dimension_numbers = #tpu.dot_dimension_numbers<[1], [0], [0], [1], [0, 0, 1, 1], [], []>} : vector<8x32xf32>, vector<32x512xf32>, vector<8x512xf32> -> vector<8x512xf32>
      %c0_24 = arith.constant 0 : index
      %c0_25 = arith.constant 0 : index
      %40 = vector.load %arg7[%c0_24, %c0_25] : memref<1x512xf32, #tpu.memory_space<vmem>>, vector<1x512xf32>
      %41 = vector.broadcast %40 : vector<1x512xf32> to vector<8x512xf32>
      %42 = arith.addf %39, %41 : vector<8x512xf32>
      %cst_26 = arith.constant 0.000000e+00 : f32
      %43 = vector.broadcast %cst_26 : f32 to vector<8x512xf32>
      %44 = arith.maximumf %42, %43 : vector<8x512xf32>
      %c0_27 = arith.constant 0 : index
      %c0_28 = arith.constant 0 : index
      %45 = vector.load %arg8[%c0_27, %c0_28] : memref<8x512xf32, #tpu.memory_space<vmem>>, vector<8x512xf32>
      tpu.vector_store %arg8[%c0_27, %c0_28], %44 {strides = array<i32>} : memref<8x512xf32, #tpu.memory_space<vmem>>, vector<8x512xf32>,
    } else {
    }
    return
  }
  func.func @transform_0(%arg0: i32) -> (i32, i32) {
    %c0_i32 = arith.constant 0 : i32
    %c0_i32_0 = arith.constant 0 : i32
    return %c0_i32, %arg0 : i32, i32
  }
  func.func @transform_1(%arg0: i32) -> (i32, i32) {
    %c0_i32 = arith.constant 0 : i32
    %c0_i32_0 = arith.constant 0 : i32
    return %arg0, %c0_i32 : i32, i32
  }
  func.func @transform_2(%arg0: i32) -> (i32, i32) {
    %c0_i32 = arith.constant 0 : i32
    %c0_i32_0 = arith.constant 0 : i32
    %c0_i32_1 = arith.constant 0 : i32
    return %c0_i32, %c0_i32_0 : i32, i32
  }
  func.func @transform_3(%arg0: i32) -> (i32, i32) {
    %c0_i32 = arith.constant 0 : i32
    %c0_i32_0 = arith.constant 0 : i32
    %c0_i32_1 = arith.constant 0 : i32
    return %c0_i32, %c0_i32_0 : i32, i32
  }
  func.func @transform_4(%arg0: i32) -> (i32, i32) {
    %c0_i32 = arith.constant 0 : i32
    %c0_i32_0 = arith.constant 0 : i32
    %c0_i32_1 = arith.constant 0 : i32
    return %c0_i32, %c0_i32_0 : i32, i32
  }
  func.func @transform_5(%arg0: i32) -> (i32, i32) {
    %c0_i32 = arith.constant 0 : i32
    %c0_i32_0 = arith.constant 0 : i32
    %c0_i32_1 = arith.constant 0 : i32
    return %c0_i32, %c0_i32_0 : i32, i32
  }
  func.func @transform_6(%arg0: i32) -> (i32, i32) {
    %c0_i32 = arith.constant 0 : i32
    %c0_i32_0 = arith.constant 0 : i32
    %c0_i32_1 = arith.constant 0 : i32
    return %c0_i32, %c0_i32_0 : i32, i32
  }
  func.func @transform_7(%arg0: i32) -> (i32, i32) {
    %c0_i32 = arith.constant 0 : i32
    %c0_i32_0 = arith.constant 0 : i32
    %c0_i32_1 = arith.constant 0 : i32
    return %c0_i32, %c0_i32_0 : i32, i32
  }
}

module attributes {stable_mosaic.version = 11 : i64} {
  func.func @_dec_kernel(%arg0: i32, %arg1: memref<8x512xf32, #tpu.memory_space<vmem>>, %arg2: memref<512x1024xbf16, #tpu.memory_space<vmem>>, %arg3: memref<1x1024xf32, #tpu.memory_space<vmem>>, %arg4: memref<8x1024xf32, #tpu.memory_space<vmem>>) attributes {dimension_semantics = [#tpu.dimension_semantics<parallel>], iteration_bounds = array<i64: 4>, scalar_prefetch = 0 : i64, scratch_operands = 0 : i64, tpu.core_type = #tpu.core_type<tc>, window_params = [{pipeline_mode = #tpu.pipeline_mode<synchronous>, transform_indices = @transform_0, window_bounds = array<i64: 8, 512>}, {transform_indices = @transform_1, window_bounds = array<i64: 512, 1024>}, {transform_indices = @transform_2, window_bounds = array<i64: 1, 1024>}, {transform_indices = @transform_3, window_bounds = array<i64: 8, 1024>}]} {
    %c0 = arith.constant 0 : index
    %c0_0 = arith.constant 0 : index
    %0 = vector.load %arg1[%c0, %c0_0] : memref<8x512xf32, #tpu.memory_space<vmem>>, vector<8x512xf32>
    %1 = arith.truncf %0 : vector<8x512xf32> to vector<8x512xbf16>
    %c0_1 = arith.constant 0 : index
    %c0_2 = arith.constant 0 : index
    %2 = vector.load %arg2[%c0_1, %c0_2] : memref<512x1024xbf16, #tpu.memory_space<vmem>>, vector<512x1024xbf16>
    %cst = arith.constant dense<0.000000e+00> : vector<8x1024xf32>
    %3 = tpu.matmul %1, %2, %cst {dimension_numbers = #tpu.dot_dimension_numbers<[1], [0], [0], [1], [0, 0, 1, 1], [], []>} : vector<8x512xbf16>, vector<512x1024xbf16>, vector<8x1024xf32> -> vector<8x1024xf32>
    %c0_3 = arith.constant 0 : index
    %c0_4 = arith.constant 0 : index
    %4 = vector.load %arg3[%c0_3, %c0_4] : memref<1x1024xf32, #tpu.memory_space<vmem>>, vector<1x1024xf32>
    %5 = vector.broadcast %4 : vector<1x1024xf32> to vector<8x1024xf32>
    %6 = arith.addf %3, %5 : vector<8x1024xf32>
    %c0_5 = arith.constant 0 : index
    %c0_6 = arith.constant 0 : index
    %7 = vector.load %arg4[%c0_5, %c0_6] : memref<8x1024xf32, #tpu.memory_space<vmem>>, vector<8x1024xf32>
    tpu.vector_store %arg4[%c0_5, %c0_6], %6 {strides = array<i32>} : memref<8x1024xf32, #tpu.memory_space<vmem>>, vector<8x1024xf32>,
    return
  }
  func.func @transform_0(%arg0: i32) -> (i32, i32) {
    %c0_i32 = arith.constant 0 : i32
    %c0_i32_0 = arith.constant 0 : i32
    %c0_i32_1 = arith.constant 0 : i32
    return %c0_i32, %c0_i32_0 : i32, i32
  }
  func.func @transform_1(%arg0: i32) -> (i32, i32) {
    %c0_i32 = arith.constant 0 : i32
    %c0_i32_0 = arith.constant 0 : i32
    return %c0_i32, %arg0 : i32, i32
  }
  func.func @transform_2(%arg0: i32) -> (i32, i32) {
    %c0_i32 = arith.constant 0 : i32
    %c0_i32_0 = arith.constant 0 : i32
    return %c0_i32, %arg0 : i32, i32
  }
  func.func @transform_3(%arg0: i32) -> (i32, i32) {
    %c0_i32 = arith.constant 0 : i32
    %c0_i32_0 = arith.constant 0 : i32
    return %c0_i32, %arg0 : i32, i32
  }
}

</mosaic_0001>

<llo_original>
// kernel: vae_forward.3
$region0: #{vae_forward.3}
  #allocation0 [shape = 'u32[]', space=smem, size = 0x4, offset = 0x4, fixed_abs, tag = 'smem constant byte address 0x4 - core index']
  #allocation1 [shape = 'u32[72,128]{1,0:T(1,128)}', space=vmem, size = 0x9000, scoped, tag = 'internal scratch']
  %s0 = inlined_call_operand.vmem [shape: f32[8,512], index: 0, kind: input, shape index: {}]
  %s1 = inlined_call_operand.vmem [shape: bf16[512,4096], index: 1, kind: input, shape index: {}]
  %s2 = inlined_call_operand.vmem [shape: f32[1,4096], index: 2, kind: input, shape index: {}]
  %s3 = inlined_call_operand.vmem [shape: f32[8,3606], index: 3, kind: output, shape index: {}]
  %s4 = sld [smem:[#allocation0]]
  $region130: #{vae_forward.3} parent=0
    _
  %s6 = ssub.s32 1, %s4
  %s7 = scalar_select 0, %s6, %s4
  $region1: #{vae_forward.3} parent=0
    #allocation2 [shape = 'u8[2097152]{0}', space=vmem, size = 0x200000, scoped, tag = 'input window, operand 1']
    #allocation3 [shape = 'u8[65536]{0}', space=vmem, size = 0x10000, scoped, tag = 'output window, operand 0']
    loop: start=0, step=1, limit=6
    $region2: #{vae_forward.3} parent=1 // loop_pre_header
      _
    $region3: #{vae_forward.3} parent=1 // loop_header
      %s9 = sphi 0, %s13
      %p10 = scmp.ge.s32.totalorder %s9, 6
      %s17 = sphi 0, %s17
      %s19 = sphi 0, %s17
      %s20 = sphi 0, %s19
      %s34 = sphi 0, %s20
      %s40 = sphi 0, %s42
      %s43 = sphi 0, %s40
      %s44 = sphi 0, %s43
      %s60 = sphi 0, %s44
      %s66 = sphi 0, %s68
      %s69 = sphi 0, %s66
      %s70 = sphi 0, %s69
      %s86 = sphi 0, %s70
      %s92 = sphi 0, %s94
      %s95 = sphi 0, %s92
      %s96 = sphi 0, %s95
      %s112 = sphi 0, %s96
    $region4: #{vae_forward.3} parent=1 // loop_header_branch
      %12 = sbr.rel (%p10) target = $region8
    $region5: #{vae_forward.3} parent=1 // loop_body
      %s14 = ssub.s32 %s9, 1
      %s15 = ssub.s32 %s9, 2
      %s16 = sadd.s32 %s9, 1
      %s18 = sadd.s32 %s17, 1
      %p21 = scmp.eq.s32.totalorder %s9, 3
      %p22 = scmp.ne.s32.totalorder %s17, %s19
      %p23 = scmp.eq.s32.totalorder %s9, 0
      %p24 = por %p22, %p23
      %p25 = scmp.ne.s32.totalorder %s17, %s19
      %p26 = scmp.eq.s32.totalorder %s14, 3
      %p27 = por %p25, %p26
      %p28 = scmp.ne.s32.totalorder %s19, %s20
      %p29 = scmp.eq.s32.totalorder %s14, 0
      %p30 = por %p28, %p29
      %p31 = scmp.ne.s32.totalorder %s19, %s20
      %p32 = scmp.eq.s32.totalorder %s15, 3
      %p33 = por %p31, %p32
      %p35 = scmp.ne.s32.totalorder %s20, %s34
      %p36 = scmp.eq.s32.totalorder %s15, 0
      %p37 = por %p35, %p36
      %s38 = ssub.s32 %s9, %s16
      %p39 = scmp.eq.s32.totalorder %s38, 0
      %s41 = sadd.s32 %s40, 1
      %s42 = scalar_select %p39, %s40, %s41
      %p45 = pneg %p39
      %p46 = scmp.eq.s32.totalorder %s9, 3
      %p47 = por %p45, %p46
      %p48 = scmp.ne.s32.totalorder %s40, %s43
      %p49 = scmp.eq.s32.totalorder %s9, 0
      %p50 = por %p48, %p49
      %p51 = scmp.ne.s32.totalorder %s40, %s43
      %p52 = scmp.eq.s32.totalorder %s14, 3
      %p53 = por %p51, %p52
      %p54 = scmp.ne.s32.totalorder %s43, %s44
      %p55 = scmp.eq.s32.totalorder %s14, 0
      %p56 = por %p54, %p55
      %p57 = scmp.ne.s32.totalorder %s43, %s44
      %p58 = scmp.eq.s32.totalorder %s15, 3
      %p59 = por %p57, %p58
      %p61 = scmp.ne.s32.totalorder %s44, %s60
      %p62 = scmp.eq.s32.totalorder %s15, 0
      %p63 = por %p61, %p62
      %s64 = ssub.s32 %s9, %s16
      %p65 = scmp.eq.s32.totalorder %s64, 0
      %s67 = sadd.s32 %s66, 1
      %s68 = scalar_select %p65, %s66, %s67
      %p71 = pneg %p65
      %p72 = scmp.eq.s32.totalorder %s9, 3
      %p73 = por %p71, %p72
      %p74 = scmp.ne.s32.totalorder %s66, %s69
      %p75 = scmp.eq.s32.totalorder %s9, 0
      %p76 = por %p74, %p75
      %p77 = scmp.ne.s32.totalorder %s66, %s69
      %p78 = scmp.eq.s32.totalorder %s14, 3
      %p79 = por %p77, %p78
      %p80 = scmp.ne.s32.totalorder %s69, %s70
      %p81 = scmp.eq.s32.totalorder %s14, 0
      %p82 = por %p80, %p81
      %p83 = scmp.ne.s32.totalorder %s69, %s70
      %p84 = scmp.eq.s32.totalorder %s15, 3
      %p85 = por %p83, %p84
      %p87 = scmp.ne.s32.totalorder %s70, %s86
      %p88 = scmp.eq.s32.totalorder %s15, 0
      %p89 = por %p87, %p88
      %s90 = ssub.s32 %s9, %s16
      %p91 = scmp.eq.s32.totalorder %s90, 0
      %s93 = sadd.s32 %s92, 1
      %s94 = scalar_select %p91, %s92, %s93
      %p97 = pneg %p91
      %p98 = scmp.eq.s32.totalorder %s9, 3
      %p99 = por %p97, %p98
      %p100 = scmp.ne.s32.totalorder %s92, %s95
      %p101 = scmp.eq.s32.totalorder %s9, 0
      %p102 = por %p100, %p101
      %p103 = scmp.ne.s32.totalorder %s92, %s95
      %p104 = scmp.eq.s32.totalorder %s14, 3
      %p105 = por %p103, %p104
      %p106 = scmp.ne.s32.totalorder %s95, %s96
      %p107 = scmp.eq.s32.totalorder %s14, 0
      %p108 = por %p106, %p107
      %p109 = scmp.ne.s32.totalorder %s95, %s96
      %p110 = scmp.eq.s32.totalorder %s15, 3
      %p111 = por %p109, %p110
      %p113 = scmp.ne.s32.totalorder %s96, %s112
      %p114 = scmp.eq.s32.totalorder %s15, 0
      %p115 = por %p113, %p114
      %p116 = scmp.le.s32.totalorder 1, %s9
      %p117 = scmp.lt.s32.totalorder %s9, 5
      %p118 = pnand %p116, %p117
      %p119 = pneg %p118
      // Predicated region
      $region9: #{vae_forward.3} parent=5 // pred_check
        _
      $region10: #{vae_forward.3} parent=5 // pred_check_branch
        %121 = sbr.rel (%p118) target = $region12
      $region11: #{vae_forward.3} parent=5 // pred_region
        %s122 = ssub.s32 %s9, 1
        // Predicated region
        $region13: #{vae_forward.3} parent=11 // pred_check
          %p123 = pneg %p30
        $region14: #{vae_forward.3} parent=11 // pred_check_branch
          %125 = sbr.rel (%p123) target = $region16
        $region15: #{vae_forward.3} parent=11 // pred_region
          _
        $region16: #{vae_forward.3} parent=11 // pred_fallthru
          _
      $region12: #{vae_forward.3} parent=5 // pred_fallthru
        _
      %p126 = scmp.lt.s32.totalorder %s9, 4
      // Predicated region
      $region17: #{vae_forward.3} parent=5 // pred_check
        %p127 = pneg %p126
      $region18: #{vae_forward.3} parent=5 // pred_check_branch
        %129 = sbr.rel (%p127) target = $region20
      $region19: #{vae_forward.3} parent=5 // pred_region
        // Predicated region
        $region21: #{vae_forward.3} parent=19 // pred_check
          %p130 = pneg %p50
        $region22: #{vae_forward.3} parent=19 // pred_check_branch
          %132 = sbr.rel (%p130) target = $region24
        $region23: #{vae_forward.3} parent=19 // pred_region
          %s133 = sand.u32 %s40, 1
          %s134 = sand.u32 %s40, 1
          %s135 = smul.addr %s134, 2048
          %s136 = scalar_lea.vmem [#allocation2], %s135
          %s137 = smul.u32 8, %s9
          %s138 = smul.addr %s137, 4
          %s139 = scalar_lea.vmem %s1, %s138
          // Predicated region
          $region25: #{vae_forward.3} parent=23 // pred_check
            _
          $region26: #{vae_forward.3} parent=23 // pred_check_branch
            %141 = sbr.rel (0) target = $region28
          $region27: #{vae_forward.3} parent=23 // pred_region
            // Predicated region
            $region29: #{vae_forward.3} parent=27 // pred_check
              _
            $region30: #{vae_forward.3} parent=27 // pred_check_branch
              %143 = sbr.rel (0) target = $region32
            $region31: #{vae_forward.3} parent=27 // pred_region
              loop: start=0, step=1, limit=1
              $region33: #{vae_forward.3} parent=31 // loop_pre_header
                _
              $region34: #{vae_forward.3} parent=31 // loop_header
                %s145 = sphi 0, %s149
                %p146 = scmp.ge.s32.totalorder %s145, 1
                %s150 = sphi %s139, %s139
                %s151 = sphi %s136, %s136
              $region35: #{vae_forward.3} parent=31 // loop_header_branch
                %148 = sbr.rel (%p146) target = $region39
              $region36: #{vae_forward.3} parent=31 // loop_body
                %v152 = vld [vmem:[%s150] sm:$0xff]
                %153 = vst [vmem:[%s151] sm:$0xff] %v152
                %v154 = vld [vmem:[%s150 + $0x8] sm:$0xff]
                %155 = vst [vmem:[%s151 + $0x8] sm:$0xff] %v154
                %v156 = vld [vmem:[%s150 + $0x10] sm:$0xff]
                %157 = vst [vmem:[%s151 + $0x10] sm:$0xff] %v156
                %v158 = vld [vmem:[%s150 + $0x18] sm:$0xff]
                %159 = vst [vmem:[%s151 + $0x18] sm:$0xff] %v158
                %v160 = vld [vmem:[%s150 + $0x80] sm:$0xff]
                %161 = vst [vmem:[%s151 + $0x20] sm:$0xff] %v160
                %v162 = vld [vmem:[%s150 + $0x88] sm:$0xff]
                %163 = vst [vmem:[%s151 + $0x28] sm:$0xff] %v162
                %v164 = vld [vmem:[%s150 + $0x90] sm:$0xff]
                %165 = vst [vmem:[%s151 + $0x30] sm:$0xff] %v164
                %v166 = vld [vmem:[%s150 + $0x98] sm:$0xff]
                %167 = vst [vmem:[%s151 + $0x38] sm:$0xff] %v166
                %v168 = vld [vmem:[%s150 + $0x100] sm:$0xff]
                %169 = vst [vmem:[%s151 + $0x40] sm:$0xff] %v168
                %v170 = vld [vmem:[%s150 + $0x108] sm:$0xff]
                %171 = vst [vmem:[%s151 + $0x48] sm:$0xff] %v170
                %v172 = vld [vmem:[%s150 + $0x110] sm:$0xff]
                %173 = vst [vmem:[%s151 + $0x50] sm:$0xff] %v172
                %v174 = vld [vmem:[%s150 + $0x118] sm:$0xff]
                %175 = vst [vmem:[%s151 + $0x58] sm:$0xff] %v174
                %v176 = vld [vmem:[%s150 + $0x180] sm:$0xff]
                %177 = vst [vmem:[%s151 + $0x60] sm:$0xff] %v176
                %v178 = vld [vmem:[%s150 + $0x188] sm:$0xff]
                %179 = vst [vmem:[%s151 + $0x68] sm:$0xff] %v178
                %v180 = vld [vmem:[%s150 + $0x190] sm:$0xff]
                %181 = vst [vmem:[%s151 + $0x70] sm:$0xff] %v180
                %v182 = vld [vmem:[%s150 + $0x198] sm:$0xff]
                %183 = vst [vmem:[%s151 + $0x78] sm:$0xff] %v182
                %v184 = vld [vmem:[%s150 + $0x200] sm:$0xff]
                %185 = vst [vmem:[%s151 + $0x80] sm:$0xff] %v184
                %v186 = vld [vmem:[%s150 + $0x208] sm:$0xff]
                %187 = vst [vmem:[%s151 + $0x88] sm:$0xff] %v186
                %v188 = vld [vmem:[%s150 + $0x210] sm:$0xff]
                %189 = vst [vmem:[%s151 + $0x90] sm:$0xff] %v188
                %v190 = vld [vmem:[%s150 + $0x218] sm:$0xff]
                %191 = vst [vmem:[%s151 + $0x98] sm:$0xff] %v190
                %v192 = vld [vmem:[%s150 + $0x280] sm:$0xff]
                %193 = vst [vmem:[%s151 + $0xa0] sm:$0xff] %v192
                %v194 = vld [vmem:[%s150 + $0x288] sm:$0xff]
                %195 = vst [vmem:[%s151 + $0xa8] sm:$0xff] %v194
                %v196 = vld [vmem:[%s150 + $0x290] sm:$0xff]
                %197 = vst [vmem:[%s151 + $0xb0] sm:$0xff] %v196
                %v198 = vld [vmem:[%s150 + $0x298] sm:$0xff]
                %199 = vst [vmem:[%s151 + $0xb8] sm:$0xff] %v198
                %v200 = vld [vmem:[%s150 + $0x300] sm:$0xff]
                %201 = vst [vmem:[%s151 + $0xc0] sm:$0xff] %v200
                %v202 = vld [vmem:[%s150 + $0x308] sm:$0xff]
                %203 = vst [vmem:[%s151 + $0xc8] sm:$0xff] %v202
                %v204 = vld [vmem:[%s150 + $0x310] sm:$0xff]
                %205 = vst [vmem:[%s151 + $0xd0] sm:$0xff] %v204
                %v206 = vld [vmem:[%s150 + $0x318] sm:$0xff]
                %207 = vst [vmem:[%s151 + $0xd8] sm:$0xff] %v206
                %v208 = vld [vmem:[%s150 + $0x380] sm:$0xff]
                %209 = vst [vmem:[%s151 + $0xe0] sm:$0xff] %v208
                %v210 = vld [vmem:[%s150 + $0x388] sm:$0xff]
                %211 = vst [vmem:[%s151 + $0xe8] sm:$0xff] %v210
                %v212 = vld [vmem:[%s150 + $0x390] sm:$0xff]
                %213 = vst [vmem:[%s151 + $0xf0] sm:$0xff] %v212
                %v214 = vld [vmem:[%s150 + $0x398] sm:$0xff]
                %215 = vst [vmem:[%s151 + $0xf8] sm:$0xff] %v214
                %v216 = vld [vmem:[%s150 + $0x400] sm:$0xff]
                %217 = vst [vmem:[%s151 + $0x100] sm:$0xff] %v216
                %v218 = vld [vmem:[%s150 + $0x408] sm:$0xff]
                %219 = vst [vmem:[%s151 + $0x108] sm:$0xff] %v218
                %v220 = vld [vmem:[%s150 + $0x410] sm:$0xff]
                %221 = vst [vmem:[%s151 + $0x110] sm:$0xff] %v220
                %v222 = vld [vmem:[%s150 + $0x418] sm:$0xff]
                %223 = vst [vmem:[%s151 + $0x118] sm:$0xff] %v222
                %v224 = vld [vmem:[%s150 + $0x480] sm:$0xff]
                %225 = vst [vmem:[%s151 + $0x120] sm:$0xff] %v224
                %v226 = vld [vmem:[%s150 + $0x488] sm:$0xff]
                %227 = vst [vmem:[%s151 + $0x128] sm:$0xff] %v226
                %v228 = vld [vmem:[%s150 + $0x490] sm:$0xff]
                %229 = vst [vmem:[%s151 + $0x130] sm:$0xff] %v228
                %v230 = vld [vmem:[%s150 + $0x498] sm:$0xff]
                %231 = vst [vmem:[%s151 + $0x138] sm:$0xff] %v230
                %v232 = vld [vmem:[%s150 + $0x500] sm:$0xff]
                %233 = vst [vmem:[%s151 + $0x140] sm:$0xff] %v232
                %v234 = vld [vmem:[%s150 + $0x508] sm:$0xff]
                %235 = vst [vmem:[%s151 + $0x148] sm:$0xff] %v234
                %v236 = vld [vmem:[%s150 + $0x510] sm:$0xff]
                %237 = vst [vmem:[%s151 + $0x150] sm:$0xff] %v236
                %v238 = vld [vmem:[%s150 + $0x518] sm:$0xff]
                %239 = vst [vmem:[%s151 + $0x158] sm:$0xff] %v238
                %v240 = vld [vmem:[%s150 + $0x580] sm:$0xff]
                %241 = vst [vmem:[%s151 + $0x160] sm:$0xff] %v240
                %v242 = vld [vmem:[%s150 + $0x588] sm:$0xff]
                %243 = vst [vmem:[%s151 + $0x168] sm:$0xff] %v242
                %v244 = vld [vmem:[%s150 + $0x590] sm:$0xff]
                %245 = vst [vmem:[%s151 + $0x170] sm:$0xff] %v244
                %v246 = vld [vmem:[%s150 + $0x598] sm:$0xff]
                %247 = vst [vmem:[%s151 + $0x178] sm:$0xff] %v246
                %v248 = vld [vmem:[%s150 + $0x600] sm:$0xff]
                %249 = vst [vmem:[%s151 + $0x180] sm:$0xff] %v248
                %v250 = vld [vmem:[%s150 + $0x608] sm:$0xff]
                %251 = vst [vmem:[%s151 + $0x188] sm:$0xff] %v250
                %v252 = vld [vmem:[%s150 + $0x610] sm:$0xff]
                %253 = vst [vmem:[%s151 + $0x190] sm:$0xff] %v252
                %v254 = vld [vmem:[%s150 + $0x618] sm:$0xff]
                %255 = vst [vmem:[%s151 + $0x198] sm:$0xff] %v254
                %v256 = vld [vmem:[%s150 + $0x680] sm:$0xff]
                %257 = vst [vmem:[%s151 + $0x1a0] sm:$0xff] %v256
                %v258 = vld [vmem:[%s150 + $0x688] sm:$0xff]
                %259 = vst [vmem:[%s151 + $0x1a8] sm:$0xff] %v258
                %v260 = vld [vmem:[%s150 + $0x690] sm:$0xff]
                %261 = vst [vmem:[%s151 + $0x1b0] sm:$0xff] %v260
                %v262 = vld [vmem:[%s150 + $0x698] sm:$0xff]
                %263 = vst [vmem:[%s151 + $0x1b8] sm:$0xff] %v262
                %v264 = vld [vmem:[%s150 + $0x700] sm:$0xff]
                %265 = vst [vmem:[%s151 + $0x1c0] sm:$0xff] %v264
                %v266 = vld [vmem:[%s150 + $0x708] sm:$0xff]
                %267 = vst [vmem:[%s151 + $0x1c8] sm:$0xff] %v266
                %v268 = vld [vmem:[%s150 + $0x710] sm:$0xff]
                %269 = vst [vmem:[%s151 + $0x1d0] sm:$0xff] %v268
                %v270 = vld [vmem:[%s150 + $0x718] sm:$0xff]
                %271 = vst [vmem:[%s151 + $0x1d8] sm:$0xff] %v270
                %v272 = vld [vmem:[%s150 + $0x780] sm:$0xff]
                %273 = vst [vmem:[%s151 + $0x1e0] sm:$0xff] %v272
                %v274 = vld [vmem:[%s150 + $0x788] sm:$0xff]
                %275 = vst [vmem:[%s151 + $0x1e8] sm:$0xff] %v274
                %v276 = vld [vmem:[%s150 + $0x790] sm:$0xff]
                %277 = vst [vmem:[%s151 + $0x1f0] sm:$0xff] %v276
                %v278 = vld [vmem:[%s150 + $0x798] sm:$0xff]
                %279 = vst [vmem:[%s151 + $0x1f8] sm:$0xff] %v278
                %v280 = vld [vmem:[%s150 + $0x800] sm:$0xff]
                %281 = vst [vmem:[%s151 + $0x200] sm:$0xff] %v280
                %v282 = vld [vmem:[%s150 + $0x808] sm:$0xff]
                %283 = vst [vmem:[%s151 + $0x208] sm:$0xff] %v282
                %v284 = vld [vmem:[%s150 + $0x810] sm:$0xff]
                %285 = vst [vmem:[%s151 + $0x210] sm:$0xff] %v284
                %v286 = vld [vmem:[%s150 + $0x818] sm:$0xff]
                %287 = vst [vmem:[%s151 + $0x218] sm:$0xff] %v286
                %v288 = vld [vmem:[%s150 + $0x880] sm:$0xff]
                %289 = vst [vmem:[%s151 + $0x220] sm:$0xff] %v288
                %v290 = vld [vmem:[%s150 + $0x888] sm:$0xff]
                %291 = vst [vmem:[%s151 + $0x228] sm:$0xff] %v290
                %v292 = vld [vmem:[%s150 + $0x890] sm:$0xff]
                %293 = vst [vmem:[%s151 + $0x230] sm:$0xff] %v292
                %v294 = vld [vmem:[%s150 + $0x898] sm:$0xff]
                %295 = vst [vmem:[%s151 + $0x238] sm:$0xff] %v294
                %v296 = vld [vmem:[%s150 + $0x900] sm:$0xff]
                %297 = vst [vmem:[%s151 + $0x240] sm:$0xff] %v296
                %v298 = vld [vmem:[%s150 + $0x908] sm:$0xff]
                %299 = vst [vmem:[%s151 + $0x248] sm:$0xff] %v298
                %v300 = vld [vmem:[%s150 + $0x910] sm:$0xff]
                %301 = vst [vmem:[%s151 + $0x250] sm:$0xff] %v300
                %v302 = vld [vmem:[%s150 + $0x918] sm:$0xff]
                %303 = vst [vmem:[%s151 + $0x258] sm:$0xff] %v302
                %v304 = vld [vmem:[%s150 + $0x980] sm:$0xff]
                %305 = vst [vmem:[%s151 + $0x260] sm:$0xff] %v304
                %v306 = vld [vmem:[%s150 + $0x988] sm:$0xff]
                %307 = vst [vmem:[%s151 + $0x268] sm:$0xff] %v306
                %v308 = vld [vmem:[%s150 + $0x990] sm:$0xff]
                %309 = vst [vmem:[%s151 + $0x270] sm:$0xff] %v308
                %v310 = vld [vmem:[%s150 + $0x998] sm:$0xff]
                %311 = vst [vmem:[%s151 + $0x278] sm:$0xff] %v310
                %v312 = vld [vmem:[%s150 + $0xa00] sm:$0xff]
                %313 = vst [vmem:[%s151 + $0x280] sm:$0xff] %v312
                %v314 = vld [vmem:[%s150 + $0xa08] sm:$0xff]
                %315 = vst [vmem:[%s151 + $0x288] sm:$0xff] %v314
                %v316 = vld [vmem:[%s150 + $0xa10] sm:$0xff]
                %317 = vst [vmem:[%s151 + $0x290] sm:$0xff] %v316
                %v318 = vld [vmem:[%s150 + $0xa18] sm:$0xff]
                %319 = vst [vmem:[%s151 + $0x298] sm:$0xff] %v318
                %v320 = vld [vmem:[%s150 + $0xa80] sm:$0xff]
                %321 = vst [vmem:[%s151 + $0x2a0] sm:$0xff] %v320
                %v322 = vld [vmem:[%s150 + $0xa88] sm:$0xff]
                %323 = vst [vmem:[%s151 + $0x2a8] sm:$0xff] %v322
                %v324 = vld [vmem:[%s150 + $0xa90] sm:$0xff]
                %325 = vst [vmem:[%s151 + $0x2b0] sm:$0xff] %v324
                %v326 = vld [vmem:[%s150 + $0xa98] sm:$0xff]
                %327 = vst [vmem:[%s151 + $0x2b8] sm:$0xff] %v326
                %v328 = vld [vmem:[%s150 + $0xb00] sm:$0xff]
                %329 = vst [vmem:[%s151 + $0x2c0] sm:$0xff] %v328
                %v330 = vld [vmem:[%s150 + $0xb08] sm:$0xff]
                %331 = vst [vmem:[%s151 + $0x2c8] sm:$0xff] %v330
                %v332 = vld [vmem:[%s150 + $0xb10] sm:$0xff]
                %333 = vst [vmem:[%s151 + $0x2d0] sm:$0xff] %v332
                %v334 = vld [vmem:[%s150 + $0xb18] sm:$0xff]
                %335 = vst [vmem:[%s151 + $0x2d8] sm:$0xff] %v334
                %v336 = vld [vmem:[%s150 + $0xb80] sm:$0xff]
                %337 = vst [vmem:[%s151 + $0x2e0] sm:$0xff] %v336
                %v338 = vld [vmem:[%s150 + $0xb88] sm:$0xff]
                %339 = vst [vmem:[%s151 + $0x2e8] sm:$0xff] %v338
                %v340 = vld [vmem:[%s150 + $0xb90] sm:$0xff]
                %341 = vst [vmem:[%s151 + $0x2f0] sm:$0xff] %v340
                %v342 = vld [vmem:[%s150 + $0xb98] sm:$0xff]
                %343 = vst [vmem:[%s151 + $0x2f8] sm:$0xff] %v342
                %v344 = vld [vmem:[%s150 + $0xc00] sm:$0xff]
                %345 = vst [vmem:[%s151 + $0x300] sm:$0xff] %v344
                %v346 = vld [vmem:[%s150 + $0xc08] sm:$0xff]
                %347 = vst [vmem:[%s151 + $0x308] sm:$0xff] %v346
                %v348 = vld [vmem:[%s150 + $0xc10] sm:$0xff]
                %349 = vst [vmem:[%s151 + $0x310] sm:$0xff] %v348
                %v350 = vld [vmem:[%s150 + $0xc18] sm:$0xff]
                %351 = vst [vmem:[%s151 + $0x318] sm:$0xff] %v350
                %v352 = vld [vmem:[%s150 + $0xc80] sm:$0xff]
                %353 = vst [vmem:[%s151 + $0x320] sm:$0xff] %v352
                %v354 = vld [vmem:[%s150 + $0xc88] sm:$0xff]
                %355 = vst [vmem:[%s151 + $0x328] sm:$0xff] %v354
                %v356 = vld [vmem:[%s150 + $0xc90] sm:$0xff]
                %357 = vst [vmem:[%s151 + $0x330] sm:$0xff] %v356
                %v358 = vld [vmem:[%s150 + $0xc98] sm:$0xff]
                %359 = vst [vmem:[%s151 + $0x338] sm:$0xff] %v358
                %v360 = vld [vmem:[%s150 + $0xd00] sm:$0xff]
                %361 = vst [vmem:[%s151 + $0x340] sm:$0xff] %v360
                %v362 = vld [vmem:[%s150 + $0xd08] sm:$0xff]
                %363 = vst [vmem:[%s151 + $0x348] sm:$0xff] %v362
                %v364 = vld [vmem:[%s150 + $0xd10] sm:$0xff]
                %365 = vst [vmem:[%s151 + $0x350] sm:$0xff] %v364
                %v366 = vld [vmem:[%s150 + $0xd18] sm:$0xff]
                %367 = vst [vmem:[%s151 + $0x358] sm:$0xff] %v366
                %v368 = vld [vmem:[%s150 + $0xd80] sm:$0xff]
                %369 = vst [vmem:[%s151 + $0x360] sm:$0xff] %v368
                %v370 = vld [vmem:[%s150 + $0xd88] sm:$0xff]
                %371 = vst [vmem:[%s151 + $0x368] sm:$0xff] %v370
                %v372 = vld [vmem:[%s150 + $0xd90] sm:$0xff]
                %373 = vst [vmem:[%s151 + $0x370] sm:$0xff] %v372
                %v374 = vld [vmem:[%s150 + $0xd98] sm:$0xff]
                %375 = vst [vmem:[%s151 + $0x378] sm:$0xff] %v374
                %v376 = vld [vmem:[%s150 + $0xe00] sm:$0xff]
                %377 = vst [vmem:[%s151 + $0x380] sm:$0xff] %v376
                %v378 = vld [vmem:[%s150 + $0xe08] sm:$0xff]
                %379 = vst [vmem:[%s151 + $0x388] sm:$0xff] %v378
                %v380 = vld [vmem:[%s150 + $0xe10] sm:$0xff]
                %381 = vst [vmem:[%s151 + $0x390] sm:$0xff] %v380
                %v382 = vld [vmem:[%s150 + $0xe18] sm:$0xff]
                %383 = vst [vmem:[%s151 + $0x398] sm:$0xff] %v382
                %v384 = vld [vmem:[%s150 + $0xe80] sm:$0xff]
                %385 = vst [vmem:[%s151 + $0x3a0] sm:$0xff] %v384
                %v386 = vld [vmem:[%s150 + $0xe88] sm:$0xff]
                %387 = vst [vmem:[%s151 + $0x3a8] sm:$0xff] %v386
                %v388 = vld [vmem:[%s150 + $0xe90] sm:$0xff]
                %389 = vst [vmem:[%s151 + $0x3b0] sm:$0xff] %v388
                %v390 = vld [vmem:[%s150 + $0xe98] sm:$0xff]
                %391 = vst [vmem:[%s151 + $0x3b8] sm:$0xff] %v390
                %v392 = vld [vmem:[%s150 + $0xf00] sm:$0xff]
                %393 = vst [vmem:[%s151 + $0x3c0] sm:$0xff] %v392
                %v394 = vld [vmem:[%s150 + $0xf08] sm:$0xff]
                %395 = vst [vmem:[%s151 + $0x3c8] sm:$0xff] %v394
                %v396 = vld [vmem:[%s150 + $0xf10] sm:$0xff]
                %397 = vst [vmem:[%s151 + $0x3d0] sm:$0xff] %v396
                %v398 = vld [vmem:[%s150 + $0xf18] sm:$0xff]
                %399 = vst [vmem:[%s151 + $0x3d8] sm:$0xff] %v398
                %v400 = vld [vmem:[%s150 + $0xf80] sm:$0xff]
                %401 = vst [vmem:[%s151 + $0x3e0] sm:$0xff] %v400
                %v402 = vld [vmem:[%s150 + $0xf88] sm:$0xff]
                %403 = vst [vmem:[%s151 + $0x3e8] sm:$0xff] %v402
                %v404 = vld [vmem:[%s150 + $0xf90] sm:$0xff]
                %405 = vst [vmem:[%s151 + $0x3f0] sm:$0xff] %v404
                %v406 = vld [vmem:[%s150 + $0xf98] sm:$0xff]
                %407 = vst [vmem:[%s151 + $0x3f8] sm:$0xff] %v406
                %v408 = vld [vmem:[%s150 + $0x1000] sm:$0xff]
                %409 = vst [vmem:[%s151 + $0x400] sm:$0xff] %v408
                %v410 = vld [vmem:[%s150 + $0x1008] sm:$0xff]
                %411 = vst [vmem:[%s151 + $0x408] sm:$0xff] %v410
                %v412 = vld [vmem:[%s150 + $0x1010] sm:$0xff]
                %413 = vst [vmem:[%s151 + $0x410] sm:$0xff] %v412
                %v414 = vld [vmem:[%s150 + $0x1018] sm:$0xff]
                %415 = vst [vmem:[%s151 + $0x418] sm:$0xff] %v414
                %v416 = vld [vmem:[%s150 + $0x1080] sm:$0xff]
                %417 = vst [vmem:[%s151 + $0x420] sm:$0xff] %v416
                %v418 = vld [vmem:[%s150 + $0x1088] sm:$0xff]
                %419 = vst [vmem:[%s151 + $0x428] sm:$0xff] %v418
                %v420 = vld [vmem:[%s150 + $0x1090] sm:$0xff]
                %421 = vst [vmem:[%s151 + $0x430] sm:$0xff] %v420
                %v422 = vld [vmem:[%s150 + $0x1098] sm:$0xff]
                %423 = vst [vmem:[%s151 + $0x438] sm:$0xff] %v422
                %v424 = vld [vmem:[%s150 + $0x1100] sm:$0xff]
                %425 = vst [vmem:[%s151 + $0x440] sm:$0xff] %v424
                %v426 = vld [vmem:[%s150 + $0x1108] sm:$0xff]
                %427 = vst [vmem:[%s151 + $0x448] sm:$0xff] %v426
                %v428 = vld [vmem:[%s150 + $0x1110] sm:$0xff]
                %429 = vst [vmem:[%s151 + $0x450] sm:$0xff] %v428
                %v430 = vld [vmem:[%s150 + $0x1118] sm:$0xff]
                %431 = vst [vmem:[%s151 + $0x458] sm:$0xff] %v430
                %v432 = vld [vmem:[%s150 + $0x1180] sm:$0xff]
                %433 = vst [vmem:[%s151 + $0x460] sm:$0xff] %v432
                %v434 = vld [vmem:[%s150 + $0x1188] sm:$0xff]
                %435 = vst [vmem:[%s151 + $0x468] sm:$0xff] %v434
                %v436 = vld [vmem:[%s150 + $0x1190] sm:$0xff]
                %437 = vst [vmem:[%s151 + $0x470] sm:$0xff] %v436
                %v438 = vld [vmem:[%s150 + $0x1198] sm:$0xff]
                %439 = vst [vmem:[%s151 + $0x478] sm:$0xff] %v438
                %v440 = vld [vmem:[%s150 + $0x1200] sm:$0xff]
                %441 = vst [vmem:[%s151 + $0x480] sm:$0xff] %v440
                %v442 = vld [vmem:[%s150 + $0x1208] sm:$0xff]
                %443 = vst [vmem:[%s151 + $0x488] sm:$0xff] %v442
                %v444 = vld [vmem:[%s150 + $0x1210] sm:$0xff]
                %445 = vst [vmem:[%s151 + $0x490] sm:$0xff] %v444
                %v446 = vld [vmem:[%s150 + $0x1218] sm:$0xff]
                %447 = vst [vmem:[%s151 + $0x498] sm:$0xff] %v446
                %v448 = vld [vmem:[%s150 + $0x1280] sm:$0xff]
                %449 = vst [vmem:[%s151 + $0x4a0] sm:$0xff] %v448
                %v450 = vld [vmem:[%s150 + $0x1288] sm:$0xff]
                %451 = vst [vmem:[%s151 + $0x4a8] sm:$0xff] %v450
                %v452 = vld [vmem:[%s150 + $0x1290] sm:$0xff]
                %453 = vst [vmem:[%s151 + $0x4b0] sm:$0xff] %v452
                %v454 = vld [vmem:[%s150 + $0x1298] sm:$0xff]
                %455 = vst [vmem:[%s151 + $0x4b8] sm:$0xff] %v454
                %v456 = vld [vmem:[%s150 + $0x1300] sm:$0xff]
                %457 = vst [vmem:[%s151 + $0x4c0] sm:$0xff] %v456
                %v458 = vld [vmem:[%s150 + $0x1308] sm:$0xff]
                %459 = vst [vmem:[%s151 + $0x4c8] sm:$0xff] %v458
                %v460 = vld [vmem:[%s150 + $0x1310] sm:$0xff]
                %461 = vst [vmem:[%s151 + $0x4d0] sm:$0xff] %v460
                %v462 = vld [vmem:[%s150 + $0x1318] sm:$0xff]
                %463 = vst [vmem:[%s151 + $0x4d8] sm:$0xff] %v462
                %v464 = vld [vmem:[%s150 + $0x1380] sm:$0xff]
                %465 = vst [vmem:[%s151 + $0x4e0] sm:$0xff] %v464
                %v466 = vld [vmem:[%s150 + $0x1388] sm:$0xff]
                %467 = vst [vmem:[%s151 + $0x4e8] sm:$0xff] %v466
                %v468 = vld [vmem:[%s150 + $0x1390] sm:$0xff]
                %469 = vst [vmem:[%s151 + $0x4f0] sm:$0xff] %v468
                %v470 = vld [vmem:[%s150 + $0x1398] sm:$0xff]
                %471 = vst [vmem:[%s151 + $0x4f8] sm:$0xff] %v470
                %v472 = vld [vmem:[%s150 + $0x1400] sm:$0xff]
                %473 = vst [vmem:[%s151 + $0x500] sm:$0xff] %v472
                %v474 = vld [vmem:[%s150 + $0x1408] sm:$0xff]
                %475 = vst [vmem:[%s151 + $0x508] sm:$0xff] %v474
                %v476 = vld [vmem:[%s150 + $0x1410] sm:$0xff]
                %477 = vst [vmem:[%s151 + $0x510] sm:$0xff] %v476
                %v478 = vld [vmem:[%s150 + $0x1418] sm:$0xff]
                %479 = vst [vmem:[%s151 + $0x518] sm:$0xff] %v478
                %v480 = vld [vmem:[%s150 + $0x1480] sm:$0xff]
                %481 = vst [vmem:[%s151 + $0x520] sm:$0xff] %v480
                %v482 = vld [vmem:[%s150 + $0x1488] sm:$0xff]
                %483 = vst [vmem:[%s151 + $0x528] sm:$0xff] %v482
                %v484 = vld [vmem:[%s150 + $0x1490] sm:$0xff]
                %485 = vst [vmem:[%s151 + $0x530] sm:$0xff] %v484
                %v486 = vld [vmem:[%s150 + $0x1498] sm:$0xff]
                %487 = vst [vmem:[%s151 + $0x538] sm:$0xff] %v486
                %v488 = vld [vmem:[%s150 + $0x1500] sm:$0xff]
                %489 = vst [vmem:[%s151 + $0x540] sm:$0xff] %v488
                %v490 = vld [vmem:[%s150 + $0x1508] sm:$0xff]
                %491 = vst [vmem:[%s151 + $0x548] sm:$0xff] %v490
                %v492 = vld [vmem:[%s150 + $0x1510] sm:$0xff]
                %493 = vst [vmem:[%s151 + $0x550] sm:$0xff] %v492
                %v494 = vld [vmem:[%s150 + $0x1518] sm:$0xff]
                %495 = vst [vmem:[%s151 + $0x558] sm:$0xff] %v494
                %v496 = vld [vmem:[%s150 + $0x1580] sm:$0xff]
                %497 = vst [vmem:[%s151 + $0x560] sm:$0xff] %v496
                %v498 = vld [vmem:[%s150 + $0x1588] sm:$0xff]
                %499 = vst [vmem:[%s151 + $0x568] sm:$0xff] %v498
                %v500 = vld [vmem:[%s150 + $0x1590] sm:$0xff]
                %501 = vst [vmem:[%s151 + $0x570] sm:$0xff] %v500
                %v502 = vld [vmem:[%s150 + $0x1598] sm:$0xff]
                %503 = vst [vmem:[%s151 + $0x578] sm:$0xff] %v502
                %v504 = vld [vmem:[%s150 + $0x1600] sm:$0xff]
                %505 = vst [vmem:[%s151 + $0x580] sm:$0xff] %v504
                %v506 = vld [vmem:[%s150 + $0x1608] sm:$0xff]
                %507 = vst [vmem:[%s151 + $0x588] sm:$0xff] %v506
                %v508 = vld [vmem:[%s150 + $0x1610] sm:$0xff]
                %509 = vst [vmem:[%s151 + $0x590] sm:$0xff] %v508
                %v510 = vld [vmem:[%s150 + $0x1618] sm:$0xff]
                %511 = vst [vmem:[%s151 + $0x598] sm:$0xff] %v510
                %v512 = vld [vmem:[%s150 + $0x1680] sm:$0xff]
                %513 = vst [vmem:[%s151 + $0x5a0] sm:$0xff] %v512
                %v514 = vld [vmem:[%s150 + $0x1688] sm:$0xff]
                %515 = vst [vmem:[%s151 + $0x5a8] sm:$0xff] %v514
                %v516 = vld [vmem:[%s150 + $0x1690] sm:$0xff]
                %517 = vst [vmem:[%s151 + $0x5b0] sm:$0xff] %v516
                %v518 = vld [vmem:[%s150 + $0x1698] sm:$0xff]
                %519 = vst [vmem:[%s151 + $0x5b8] sm:$0xff] %v518
                %v520 = vld [vmem:[%s150 + $0x1700] sm:$0xff]
                %521 = vst [vmem:[%s151 + $0x5c0] sm:$0xff] %v520
                %v522 = vld [vmem:[%s150 + $0x1708] sm:$0xff]
                %523 = vst [vmem:[%s151 + $0x5c8] sm:$0xff] %v522
                %v524 = vld [vmem:[%s150 + $0x1710] sm:$0xff]
                %525 = vst [vmem:[%s151 + $0x5d0] sm:$0xff] %v524
                %v526 = vld [vmem:[%s150 + $0x1718] sm:$0xff]
                %527 = vst [vmem:[%s151 + $0x5d8] sm:$0xff] %v526
                %v528 = vld [vmem:[%s150 + $0x1780] sm:$0xff]
                %529 = vst [vmem:[%s151 + $0x5e0] sm:$0xff] %v528
                %v530 = vld [vmem:[%s150 + $0x1788] sm:$0xff]
                %531 = vst [vmem:[%s151 + $0x5e8] sm:$0xff] %v530
                %v532 = vld [vmem:[%s150 + $0x1790] sm:$0xff]
                %533 = vst [vmem:[%s151 + $0x5f0] sm:$0xff] %v532
                %v534 = vld [vmem:[%s150 + $0x1798] sm:$0xff]
                %535 = vst [vmem:[%s151 + $0x5f8] sm:$0xff] %v534
                %v536 = vld [vmem:[%s150 + $0x1800] sm:$0xff]
                %537 = vst [vmem:[%s151 + $0x600] sm:$0xff] %v536
                %v538 = vld [vmem:[%s150 + $0x1808] sm:$0xff]
                %539 = vst [vmem:[%s151 + $0x608] sm:$0xff] %v538
                %v540 = vld [vmem:[%s150 + $0x1810] sm:$0xff]
                %541 = vst [vmem:[%s151 + $0x610] sm:$0xff] %v540
                %v542 = vld [vmem:[%s150 + $0x1818] sm:$0xff]
                %543 = vst [vmem:[%s151 + $0x618] sm:$0xff] %v542
                %v544 = vld [vmem:[%s150 + $0x1880] sm:$0xff]
                %545 = vst [vmem:[%s151 + $0x620] sm:$0xff] %v544
                %v546 = vld [vmem:[%s150 + $0x1888] sm:$0xff]
                %547 = vst [vmem:[%s151 + $0x628] sm:$0xff] %v546
                %v548 = vld [vmem:[%s150 + $0x1890] sm:$0xff]
                %549 = vst [vmem:[%s151 + $0x630] sm:$0xff] %v548
                %v550 = vld [vmem:[%s150 + $0x1898] sm:$0xff]
                %551 = vst [vmem:[%s151 + $0x638] sm:$0xff] %v550
                %v552 = vld [vmem:[%s150 + $0x1900] sm:$0xff]
                %553 = vst [vmem:[%s151 + $0x640] sm:$0xff] %v552
                %v554 = vld [vmem:[%s150 + $0x1908] sm:$0xff]
                %555 = vst [vmem:[%s151 + $0x648] sm:$0xff] %v554
                %v556 = vld [vmem:[%s150 + $0x1910] sm:$0xff]
                %557 = vst [vmem:[%s151 + $0x650] sm:$0xff] %v556
                %v558 = vld [vmem:[%s150 + $0x1918] sm:$0xff]
                %559 = vst [vmem:[%s151 + $0x658] sm:$0xff] %v558
                %v560 = vld [vmem:[%s150 + $0x1980] sm:$0xff]
                %561 = vst [vmem:[%s151 + $0x660] sm:$0xff] %v560
                %v562 = vld [vmem:[%s150 + $0x1988] sm:$0xff]
                %563 = vst [vmem:[%s151 + $0x668] sm:$0xff] %v562
                %v564 = vld [vmem:[%s150 + $0x1990] sm:$0xff]
                %565 = vst [vmem:[%s151 + $0x670] sm:$0xff] %v564
                %v566 = vld [vmem:[%s150 + $0x1998] sm:$0xff]
                %567 = vst [vmem:[%s151 + $0x678] sm:$0xff] %v566
                %v568 = vld [vmem:[%s150 + $0x1a00] sm:$0xff]
                %569 = vst [vmem:[%s151 + $0x680] sm:$0xff] %v568
                %v570 = vld [vmem:[%s150 + $0x1a08] sm:$0xff]
                %571 = vst [vmem:[%s151 + $0x688] sm:$0xff] %v570
                %v572 = vld [vmem:[%s150 + $0x1a10] sm:$0xff]
                %573 = vst [vmem:[%s151 + $0x690] sm:$0xff] %v572
                %v574 = vld [vmem:[%s150 + $0x1a18] sm:$0xff]
                %575 = vst [vmem:[%s151 + $0x698] sm:$0xff] %v574
                %v576 = vld [vmem:[%s150 + $0x1a80] sm:$0xff]
                %577 = vst [vmem:[%s151 + $0x6a0] sm:$0xff] %v576
                %v578 = vld [vmem:[%s150 + $0x1a88] sm:$0xff]
                %579 = vst [vmem:[%s151 + $0x6a8] sm:$0xff] %v578
                %v580 = vld [vmem:[%s150 + $0x1a90] sm:$0xff]
                %581 = vst [vmem:[%s151 + $0x6b0] sm:$0xff] %v580
                %v582 = vld [vmem:[%s150 + $0x1a98] sm:$0xff]
                %583 = vst [vmem:[%s151 + $0x6b8] sm:$0xff] %v582
                %v584 = vld [vmem:[%s150 + $0x1b00] sm:$0xff]
                %585 = vst [vmem:[%s151 + $0x6c0] sm:$0xff] %v584
                %v586 = vld [vmem:[%s150 + $0x1b08] sm:$0xff]
                %587 = vst [vmem:[%s151 + $0x6c8] sm:$0xff] %v586
                %v588 = vld [vmem:[%s150 + $0x1b10] sm:$0xff]
                %589 = vst [vmem:[%s151 + $0x6d0] sm:$0xff] %v588
                %v590 = vld [vmem:[%s150 + $0x1b18] sm:$0xff]
                %591 = vst [vmem:[%s151 + $0x6d8] sm:$0xff] %v590
                %v592 = vld [vmem:[%s150 + $0x1b80] sm:$0xff]
                %593 = vst [vmem:[%s151 + $0x6e0] sm:$0xff] %v592
                %v594 = vld [vmem:[%s150 + $0x1b88] sm:$0xff]
                %595 = vst [vmem:[%s151 + $0x6e8] sm:$0xff] %v594
                %v596 = vld [vmem:[%s150 + $0x1b90] sm:$0xff]
                %597 = vst [vmem:[%s151 + $0x6f0] sm:$0xff] %v596
                %v598 = vld [vmem:[%s150 + $0x1b98] sm:$0xff]
                %599 = vst [vmem:[%s151 + $0x6f8] sm:$0xff] %v598
                %v600 = vld [vmem:[%s150 + $0x1c00] sm:$0xff]
                %601 = vst [vmem:[%s151 + $0x700] sm:$0xff] %v600
                %v602 = vld [vmem:[%s150 + $0x1c08] sm:$0xff]
                %603 = vst [vmem:[%s151 + $0x708] sm:$0xff] %v602
                %v604 = vld [vmem:[%s150 + $0x1c10] sm:$0xff]
                %605 = vst [vmem:[%s151 + $0x710] sm:$0xff] %v604
                %v606 = vld [vmem:[%s150 + $0x1c18] sm:$0xff]
                %607 = vst [vmem:[%s151 + $0x718] sm:$0xff] %v606
                %v608 = vld [vmem:[%s150 + $0x1c80] sm:$0xff]
                %609 = vst [vmem:[%s151 + $0x720] sm:$0xff] %v608
                %v610 = vld [vmem:[%s150 + $0x1c88] sm:$0xff]
                %611 = vst [vmem:[%s151 + $0x728] sm:$0xff] %v610
                %v612 = vld [vmem:[%s150 + $0x1c90] sm:$0xff]
                %613 = vst [vmem:[%s151 + $0x730] sm:$0xff] %v612
                %v614 = vld [vmem:[%s150 + $0x1c98] sm:$0xff]
                %615 = vst [vmem:[%s151 + $0x738] sm:$0xff] %v614
                %v616 = vld [vmem:[%s150 + $0x1d00] sm:$0xff]
                %617 = vst [vmem:[%s151 + $0x740] sm:$0xff] %v616
                %v618 = vld [vmem:[%s150 + $0x1d08] sm:$0xff]
                %619 = vst [vmem:[%s151 + $0x748] sm:$0xff] %v618
                %v620 = vld [vmem:[%s150 + $0x1d10] sm:$0xff]
                %621 = vst [vmem:[%s151 + $0x750] sm:$0xff] %v620
                %v622 = vld [vmem:[%s150 + $0x1d18] sm:$0xff]
                %623 = vst [vmem:[%s151 + $0x758] sm:$0xff] %v622
                %v624 = vld [vmem:[%s150 + $0x1d80] sm:$0xff]
                %625 = vst [vmem:[%s151 + $0x760] sm:$0xff] %v624
                %v626 = vld [vmem:[%s150 + $0x1d88] sm:$0xff]
                %627 = vst [vmem:[%s151 + $0x768] sm:$0xff] %v626
                %v628 = vld [vmem:[%s150 + $0x1d90] sm:$0xff]
                %629 = vst [vmem:[%s151 + $0x770] sm:$0xff] %v628
                %v630 = vld [vmem:[%s150 + $0x1d98] sm:$0xff]
                %631 = vst [vmem:[%s151 + $0x778] sm:$0xff] %v630
                %v632 = vld [vmem:[%s150 + $0x1e00] sm:$0xff]
                %633 = vst [vmem:[%s151 + $0x780] sm:$0xff] %v632
                %v634 = vld [vmem:[%s150 + $0x1e08] sm:$0xff]
                %635 = vst [vmem:[%s151 + $0x788] sm:$0xff] %v634
                %v636 = vld [vmem:[%s150 + $0x1e10] sm:$0xff]
                %637 = vst [vmem:[%s151 + $0x790] sm:$0xff] %v636
                %v638 = vld [vmem:[%s150 + $0x1e18] sm:$0xff]
                %639 = vst [vmem:[%s151 + $0x798] sm:$0xff] %v638
                %v640 = vld [vmem:[%s150 + $0x1e80] sm:$0xff]
                %641 = vst [vmem:[%s151 + $0x7a0] sm:$0xff] %v640
                %v642 = vld [vmem:[%s150 + $0x1e88] sm:$0xff]
                %643 = vst [vmem:[%s151 + $0x7a8] sm:$0xff] %v642
                %v644 = vld [vmem:[%s150 + $0x1e90] sm:$0xff]
                %645 = vst [vmem:[%s151 + $0x7b0] sm:$0xff] %v644
                %v646 = vld [vmem:[%s150 + $0x1e98] sm:$0xff]
                %647 = vst [vmem:[%s151 + $0x7b8] sm:$0xff] %v646
                %v648 = vld [vmem:[%s150 + $0x1f00] sm:$0xff]
                %649 = vst [vmem:[%s151 + $0x7c0] sm:$0xff] %v648
                %v650 = vld [vmem:[%s150 + $0x1f08] sm:$0xff]
                %651 = vst [vmem:[%s151 + $0x7c8] sm:$0xff] %v650
                %v652 = vld [vmem:[%s150 + $0x1f10] sm:$0xff]
                %653 = vst [vmem:[%s151 + $0x7d0] sm:$0xff] %v652
                %v654 = vld [vmem:[%s150 + $0x1f18] sm:$0xff]
                %655 = vst [vmem:[%s151 + $0x7d8] sm:$0xff] %v654
                %v656 = vld [vmem:[%s150 + $0x1f80] sm:$0xff]
                %657 = vst [vmem:[%s151 + $0x7e0] sm:$0xff] %v656
                %v658 = vld [vmem:[%s150 + $0x1f88] sm:$0xff]
                %659 = vst [vmem:[%s151 + $0x7e8] sm:$0xff] %v658
                %v660 = vld [vmem:[%s150 + $0x1f90] sm:$0xff]
                %661 = vst [vmem:[%s151 + $0x7f0] sm:$0xff] %v660
                %v662 = vld [vmem:[%s150 + $0x1f98] sm:$0xff]
                %663 = vst [vmem:[%s151 + $0x7f8] sm:$0xff] %v662
              $region37: #{vae_forward.3} parent=31 // loop_footer
                %s149 = sadd.s32 1, %s145
              $region38: #{vae_forward.3} parent=31 // loop_footer_branch
                %144 = sbr.rel target = $region34
              $region39: #{vae_forward.3} parent=31 // loop_exit
                _
            $region32: #{vae_forward.3} parent=27 // pred_fallthru
              _
            // Predicated region
            $region40: #{vae_forward.3} parent=27 // pred_check
              _
            $region41: #{vae_forward.3} parent=27 // pred_check_branch
              %665 = sbr.rel target = $region43
            $region42: #{vae_forward.3} parent=27 // pred_region
              _
            $region43: #{vae_forward.3} parent=27 // pred_fallthru
              _
          $region28: #{vae_forward.3} parent=23 // pred_fallthru
            _
          %666 = vnop
        $region24: #{vae_forward.3} parent=19 // pred_fallthru
          _
        // Predicated region
        $region44: #{vae_forward.3} parent=19 // pred_check
          %p667 = pneg %p76
        $region45: #{vae_forward.3} parent=19 // pred_check_branch
          %669 = sbr.rel (%p667) target = $region47
        $region46: #{vae_forward.3} parent=19 // pred_region
          %s670 = smul.u32 8, %s9
          %p671 = scmp.lt.s32.totalorder %s670, 31
          %s672 = scalar_select %p671, %s670, 31
          %s673 = scalar_lea.vmem %s2, %s672
          %s674 = smul.u32 8, %s9
        $region47: #{vae_forward.3} parent=19 // pred_fallthru
          _
      $region20: #{vae_forward.3} parent=5 // pred_fallthru
        _
      %p675 = scmp.le.s32.totalorder 1, %s9
      %p676 = scmp.lt.s32.totalorder %s9, 5
      %p677 = pnand %p675, %p676
      %p678 = pneg %p677
      // Predicated region
      $region48: #{vae_forward.3} parent=5 // pred_check
        _
      $region49: #{vae_forward.3} parent=5 // pred_check_branch
        %680 = sbr.rel (%p677) target = $region51
      $region50: #{vae_forward.3} parent=5 // pred_region
        %s681 = ssub.s32 %s9, 1
        %s682 = sand.u32 %s43, 1
        %s683 = sand.u32 %s43, 1
        %s684 = smul.addr %s683, 2048
        %s685 = scalar_lea.vmem [#allocation2], %s684
        // Predicated region
        $region52: #{vae_forward.3} parent=50 // pred_check
          %p686 = pneg %p56
        $region53: #{vae_forward.3} parent=50 // pred_check_branch
          %688 = sbr.rel (%p686) target = $region55
        $region54: #{vae_forward.3} parent=50 // pred_region
          _
        $region55: #{vae_forward.3} parent=50 // pred_fallthru
          _
        %p689 = pneg %p30
        %p690 = pneg %p27
        %s691 = sand.u32 %s43, 1
        %s692 = sand.u32 %s43, 1
        %s693 = smul.addr %s692, 2048
        %s694 = scalar_lea.vmem [#allocation2], %s693
        %p695 = pneg %p56
        %p696 = pneg %p53
        %s697 = smul.u32 8, %s14
        %p698 = scmp.lt.s32.totalorder %s697, 31
        %s699 = scalar_select %p698, %s697, 31
        %s700 = scalar_lea.vmem %s2, %s699
        %p701 = pneg %p82
        %p702 = pneg %p79
        %p703 = pneg %p108
        %p704 = pneg %p105
        %s705 = sand.u32 %s95, 1
        %s706 = sand.u32 %s95, 1
        %s707 = smul.addr %s706, 64
        %s708 = scalar_lea.vmem [#allocation3], %s707
        %s709 = smul.u32 8, %s14
        %s710 = smul.u32 8, %s14
        %p711 = scmp.lt.s32.totalorder %s710, 31
        %s712 = scalar_select %p711, %s710, 31
        %s713 = scalar_lea.vmem %s2, %s712
        %s714 = smul.u32 8, %s14
        %s715 = smul.u32 8, %s14
        %s716 = ssub.s32 29, %s715
        %p717 = scmp.lt.s32.totalorder %s716, 8
        %s718 = scalar_select %p717, %s716, 8
        %s719 = smul.u32 8, %s718
        %v720 = vld [vmem:[%s0] sm:$0xff]
        %v721 = vld [vmem:[%s0 + $0x8] sm:$0xff]
        %v722 = vld [vmem:[%s0 + $0x10] sm:$0xff]
        %v723 = vld [vmem:[%s0 + $0x18] sm:$0xff]
        %v724 = vpack.c.bf16 %v720, %v720
        %v725 = vpack.c.bf16 %v721, %v721
        %v726 = vpack.c.bf16 %v722, %v722
        %v727 = vpack.c.bf16 %v723, %v723
        %v728 = vld [vmem:[%s685] sm:$0xff]
        %v729 = vld [vmem:[%s685 + $0x8] sm:$0xff]
        %v730 = vld [vmem:[%s685 + $0x10] sm:$0xff]
        %v731 = vld [vmem:[%s685 + $0x18] sm:$0xff]
        %v732 = vld [vmem:[%s685 + $0x20] sm:$0xff]
        %v733 = vld [vmem:[%s685 + $0x28] sm:$0xff]
        %v734 = vld [vmem:[%s685 + $0x30] sm:$0xff]
        %v735 = vld [vmem:[%s685 + $0x38] sm:$0xff]
        %v736 = vld [vmem:[%s685 + $0x40] sm:$0xff]
        %v737 = vld [vmem:[%s685 + $0x48] sm:$0xff]
        %v738 = vld [vmem:[%s685 + $0x50] sm:$0xff]
        %v739 = vld [vmem:[%s685 + $0x58] sm:$0xff]
        %v740 = vld [vmem:[%s685 + $0x60] sm:$0xff]
        %v741 = vld [vmem:[%s685 + $0x68] sm:$0xff]
        %v742 = vld [vmem:[%s685 + $0x70] sm:$0xff]
        %v743 = vld [vmem:[%s685 + $0x78] sm:$0xff]
        %v744 = vld [vmem:[%s685 + $0x80] sm:$0xff]
        %v745 = vld [vmem:[%s685 + $0x88] sm:$0xff]
        %v746 = vld [vmem:[%s685 + $0x90] sm:$0xff]
        %v747 = vld [vmem:[%s685 + $0x98] sm:$0xff]
        %v748 = vld [vmem:[%s685 + $0xa0] sm:$0xff]
        %v749 = vld [vmem:[%s685 + $0xa8] sm:$0xff]
        %v750 = vld [vmem:[%s685 + $0xb0] sm:$0xff]
        %v751 = vld [vmem:[%s685 + $0xb8] sm:$0xff]
        %v752 = vld [vmem:[%s685 + $0xc0] sm:$0xff]
        %v753 = vld [vmem:[%s685 + $0xc8] sm:$0xff]
        %v754 = vld [vmem:[%s685 + $0xd0] sm:$0xff]
        %v755 = vld [vmem:[%s685 + $0xd8] sm:$0xff]
        %v756 = vld [vmem:[%s685 + $0xe0] sm:$0xff]
        %v757 = vld [vmem:[%s685 + $0xe8] sm:$0xff]
        %v758 = vld [vmem:[%s685 + $0xf0] sm:$0xff]
        %v759 = vld [vmem:[%s685 + $0xf8] sm:$0xff]
        %v760 = vld [vmem:[%s685 + $0x100] sm:$0xff]
        %v761 = vld [vmem:[%s685 + $0x108] sm:$0xff]
        %v762 = vld [vmem:[%s685 + $0x110] sm:$0xff]
        %v763 = vld [vmem:[%s685 + $0x118] sm:$0xff]
        %v764 = vld [vmem:[%s685 + $0x120] sm:$0xff]
        %v765 = vld [vmem:[%s685 + $0x128] sm:$0xff]
        %v766 = vld [vmem:[%s685 + $0x130] sm:$0xff]
        %v767 = vld [vmem:[%s685 + $0x138] sm:$0xff]
        %v768 = vld [vmem:[%s685 + $0x140] sm:$0xff]
        %v769 = vld [vmem:[%s685 + $0x148] sm:$0xff]
        %v770 = vld [vmem:[%s685 + $0x150] sm:$0xff]
        %v771 = vld [vmem:[%s685 + $0x158] sm:$0xff]
        %v772 = vld [vmem:[%s685 + $0x160] sm:$0xff]
        %v773 = vld [vmem:[%s685 + $0x168] sm:$0xff]
        %v774 = vld [vmem:[%s685 + $0x170] sm:$0xff]
        %v775 = vld [vmem:[%s685 + $0x178] sm:$0xff]
        %v776 = vld [vmem:[%s685 + $0x180] sm:$0xff]
        %v777 = vld [vmem:[%s685 + $0x188] sm:$0xff]
        %v778 = vld [vmem:[%s685 + $0x190] sm:$0xff]
        %v779 = vld [vmem:[%s685 + $0x198] sm:$0xff]
        %v780 = vld [vmem:[%s685 + $0x1a0] sm:$0xff]
        %v781 = vld [vmem:[%s685 + $0x1a8] sm:$0xff]
        %v782 = vld [vmem:[%s685 + $0x1b0] sm:$0xff]
        %v783 = vld [vmem:[%s685 + $0x1b8] sm:$0xff]
        %v784 = vld [vmem:[%s685 + $0x1c0] sm:$0xff]
        %v785 = vld [vmem:[%s685 + $0x1c8] sm:$0xff]
        %v786 = vld [vmem:[%s685 + $0x1d0] sm:$0xff]
        %v787 = vld [vmem:[%s685 + $0x1d8] sm:$0xff]
        %v788 = vld [vmem:[%s685 + $0x1e0] sm:$0xff]
        %v789 = vld [vmem:[%s685 + $0x1e8] sm:$0xff]
        %v790 = vld [vmem:[%s685 + $0x1f0] sm:$0xff]
        %v791 = vld [vmem:[%s685 + $0x1f8] sm:$0xff]
        %v792 = vld [vmem:[%s685 + $0x200] sm:$0xff]
        %v793 = vld [vmem:[%s685 + $0x208] sm:$0xff]
        %v794 = vld [vmem:[%s685 + $0x210] sm:$0xff]
        %v795 = vld [vmem:[%s685 + $0x218] sm:$0xff]
        %v796 = vld [vmem:[%s685 + $0x220] sm:$0xff]
        %v797 = vld [vmem:[%s685 + $0x228] sm:$0xff]
        %v798 = vld [vmem:[%s685 + $0x230] sm:$0xff]
        %v799 = vld [vmem:[%s685 + $0x238] sm:$0xff]
        %v800 = vld [vmem:[%s685 + $0x240] sm:$0xff]
        %v801 = vld [vmem:[%s685 + $0x248] sm:$0xff]
        %v802 = vld [vmem:[%s685 + $0x250] sm:$0xff]
        %v803 = vld [vmem:[%s685 + $0x258] sm:$0xff]
        %v804 = vld [vmem:[%s685 + $0x260] sm:$0xff]
        %v805 = vld [vmem:[%s685 + $0x268] sm:$0xff]
        %v806 = vld [vmem:[%s685 + $0x270] sm:$0xff]
        %v807 = vld [vmem:[%s685 + $0x278] sm:$0xff]
        %v808 = vld [vmem:[%s685 + $0x280] sm:$0xff]
        %v809 = vld [vmem:[%s685 + $0x288] sm:$0xff]
        %v810 = vld [vmem:[%s685 + $0x290] sm:$0xff]
        %v811 = vld [vmem:[%s685 + $0x298] sm:$0xff]
        %v812 = vld [vmem:[%s685 + $0x2a0] sm:$0xff]
        %v813 = vld [vmem:[%s685 + $0x2a8] sm:$0xff]
        %v814 = vld [vmem:[%s685 + $0x2b0] sm:$0xff]
        %v815 = vld [vmem:[%s685 + $0x2b8] sm:$0xff]
        %v816 = vld [vmem:[%s685 + $0x2c0] sm:$0xff]
        %v817 = vld [vmem:[%s685 + $0x2c8] sm:$0xff]
        %v818 = vld [vmem:[%s685 + $0x2d0] sm:$0xff]
        %v819 = vld [vmem:[%s685 + $0x2d8] sm:$0xff]
        %v820 = vld [vmem:[%s685 + $0x2e0] sm:$0xff]
        %v821 = vld [vmem:[%s685 + $0x2e8] sm:$0xff]
        %v822 = vld [vmem:[%s685 + $0x2f0] sm:$0xff]
        %v823 = vld [vmem:[%s685 + $0x2f8] sm:$0xff]
        %v824 = vld [vmem:[%s685 + $0x300] sm:$0xff]
        %v825 = vld [vmem:[%s685 + $0x308] sm:$0xff]
        %v826 = vld [vmem:[%s685 + $0x310] sm:$0xff]
        %v827 = vld [vmem:[%s685 + $0x318] sm:$0xff]
        %v828 = vld [vmem:[%s685 + $0x320] sm:$0xff]
        %v829 = vld [vmem:[%s685 + $0x328] sm:$0xff]
        %v830 = vld [vmem:[%s685 + $0x330] sm:$0xff]
        %v831 = vld [vmem:[%s685 + $0x338] sm:$0xff]
        %v832 = vld [vmem:[%s685 + $0x340] sm:$0xff]
        %v833 = vld [vmem:[%s685 + $0x348] sm:$0xff]
        %v834 = vld [vmem:[%s685 + $0x350] sm:$0xff]
        %v835 = vld [vmem:[%s685 + $0x358] sm:$0xff]
        %v836 = vld [vmem:[%s685 + $0x360] sm:$0xff]
        %v837 = vld [vmem:[%s685 + $0x368] sm:$0xff]
        %v838 = vld [vmem:[%s685 + $0x370] sm:$0xff]
        %v839 = vld [vmem:[%s685 + $0x378] sm:$0xff]
        %v840 = vld [vmem:[%s685 + $0x380] sm:$0xff]
        %v841 = vld [vmem:[%s685 + $0x388] sm:$0xff]
        %v842 = vld [vmem:[%s685 + $0x390] sm:$0xff]
        %v843 = vld [vmem:[%s685 + $0x398] sm:$0xff]
        %v844 = vld [vmem:[%s685 + $0x3a0] sm:$0xff]
        %v845 = vld [vmem:[%s685 + $0x3a8] sm:$0xff]
        %v846 = vld [vmem:[%s685 + $0x3b0] sm:$0xff]
        %v847 = vld [vmem:[%s685 + $0x3b8] sm:$0xff]
        %v848 = vld [vmem:[%s685 + $0x3c0] sm:$0xff]
        %v849 = vld [vmem:[%s685 + $0x3c8] sm:$0xff]
        %v850 = vld [vmem:[%s685 + $0x3d0] sm:$0xff]
        %v851 = vld [vmem:[%s685 + $0x3d8] sm:$0xff]
        %v852 = vld [vmem:[%s685 + $0x3e0] sm:$0xff]
        %v853 = vld [vmem:[%s685 + $0x3e8] sm:$0xff]
        %v854 = vld [vmem:[%s685 + $0x3f0] sm:$0xff]
        %v855 = vld [vmem:[%s685 + $0x3f8] sm:$0xff]
        %v856 = vld [vmem:[%s685 + $0x400] sm:$0xff]
        %v857 = vld [vmem:[%s685 + $0x408] sm:$0xff]
        %v858 = vld [vmem:[%s685 + $0x410] sm:$0xff]
        %v859 = vld [vmem:[%s685 + $0x418] sm:$0xff]
        %v860 = vld [vmem:[%s685 + $0x420] sm:$0xff]
        %v861 = vld [vmem:[%s685 + $0x428] sm:$0xff]
        %v862 = vld [vmem:[%s685 + $0x430] sm:$0xff]
        %v863 = vld [vmem:[%s685 + $0x438] sm:$0xff]
        %v864 = vld [vmem:[%s685 + $0x440] sm:$0xff]
        %v865 = vld [vmem:[%s685 + $0x448] sm:$0xff]
        %v866 = vld [vmem:[%s685 + $0x450] sm:$0xff]
        %v867 = vld [vmem:[%s685 + $0x458] sm:$0xff]
        %v868 = vld [vmem:[%s685 + $0x460] sm:$0xff]
        %v869 = vld [vmem:[%s685 + $0x468] sm:$0xff]
        %v870 = vld [vmem:[%s685 + $0x470] sm:$0xff]
        %v871 = vld [vmem:[%s685 + $0x478] sm:$0xff]
        %v872 = vld [vmem:[%s685 + $0x480] sm:$0xff]
        %v873 = vld [vmem:[%s685 + $0x488] sm:$0xff]
        %v874 = vld [vmem:[%s685 + $0x490] sm:$0xff]
        %v875 = vld [vmem:[%s685 + $0x498] sm:$0xff]
        %v876 = vld [vmem:[%s685 + $0x4a0] sm:$0xff]
        %v877 = vld [vmem:[%s685 + $0x4a8] sm:$0xff]
        %v878 = vld [vmem:[%s685 + $0x4b0] sm:$0xff]
        %v879 = vld [vmem:[%s685 + $0x4b8] sm:$0xff]
        %v880 = vld [vmem:[%s685 + $0x4c0] sm:$0xff]
        %v881 = vld [vmem:[%s685 + $0x4c8] sm:$0xff]
        %v882 = vld [vmem:[%s685 + $0x4d0] sm:$0xff]
        %v883 = vld [vmem:[%s685 + $0x4d8] sm:$0xff]
        %v884 = vld [vmem:[%s685 + $0x4e0] sm:$0xff]
        %v885 = vld [vmem:[%s685 + $0x4e8] sm:$0xff]
        %v886 = vld [vmem:[%s685 + $0x4f0] sm:$0xff]
        %v887 = vld [vmem:[%s685 + $0x4f8] sm:$0xff]
        %v888 = vld [vmem:[%s685 + $0x500] sm:$0xff]
        %v889 = vld [vmem:[%s685 + $0x508] sm:$0xff]
        %v890 = vld [vmem:[%s685 + $0x510] sm:$0xff]
        %v891 = vld [vmem:[%s685 + $0x518] sm:$0xff]
        %v892 = vld [vmem:[%s685 + $0x520] sm:$0xff]
        %v893 = vld [vmem:[%s685 + $0x528] sm:$0xff]
        %v894 = vld [vmem:[%s685 + $0x530] sm:$0xff]
        %v895 = vld [vmem:[%s685 + $0x538] sm:$0xff]
        %v896 = vld [vmem:[%s685 + $0x540] sm:$0xff]
        %v897 = vld [vmem:[%s685 + $0x548] sm:$0xff]
        %v898 = vld [vmem:[%s685 + $0x550] sm:$0xff]
        %v899 = vld [vmem:[%s685 + $0x558] sm:$0xff]
        %v900 = vld [vmem:[%s685 + $0x560] sm:$0xff]
        %v901 = vld [vmem:[%s685 + $0x568] sm:$0xff]
        %v902 = vld [vmem:[%s685 + $0x570] sm:$0xff]
        %v903 = vld [vmem:[%s685 + $0x578] sm:$0xff]
        %v904 = vld [vmem:[%s685 + $0x580] sm:$0xff]
        %v905 = vld [vmem:[%s685 + $0x588] sm:$0xff]
        %v906 = vld [vmem:[%s685 + $0x590] sm:$0xff]
        %v907 = vld [vmem:[%s685 + $0x598] sm:$0xff]
        %v908 = vld [vmem:[%s685 + $0x5a0] sm:$0xff]
        %v909 = vld [vmem:[%s685 + $0x5a8] sm:$0xff]
        %v910 = vld [vmem:[%s685 + $0x5b0] sm:$0xff]
        %v911 = vld [vmem:[%s685 + $0x5b8] sm:$0xff]
        %v912 = vld [vmem:[%s685 + $0x5c0] sm:$0xff]
        %v913 = vld [vmem:[%s685 + $0x5c8] sm:$0xff]
        %v914 = vld [vmem:[%s685 + $0x5d0] sm:$0xff]
        %v915 = vld [vmem:[%s685 + $0x5d8] sm:$0xff]
        %v916 = vld [vmem:[%s685 + $0x5e0] sm:$0xff]
        %v917 = vld [vmem:[%s685 + $0x5e8] sm:$0xff]
        %v918 = vld [vmem:[%s685 + $0x5f0] sm:$0xff]
        %v919 = vld [vmem:[%s685 + $0x5f8] sm:$0xff]
        %v920 = vld [vmem:[%s685 + $0x600] sm:$0xff]
        %v921 = vld [vmem:[%s685 + $0x608] sm:$0xff]
        %v922 = vld [vmem:[%s685 + $0x610] sm:$0xff]
        %v923 = vld [vmem:[%s685 + $0x618] sm:$0xff]
        %v924 = vld [vmem:[%s685 + $0x620] sm:$0xff]
        %v925 = vld [vmem:[%s685 + $0x628] sm:$0xff]
        %v926 = vld [vmem:[%s685 + $0x630] sm:$0xff]
        %v927 = vld [vmem:[%s685 + $0x638] sm:$0xff]
        %v928 = vld [vmem:[%s685 + $0x640] sm:$0xff]
        %v929 = vld [vmem:[%s685 + $0x648] sm:$0xff]
        %v930 = vld [vmem:[%s685 + $0x650] sm:$0xff]
        %v931 = vld [vmem:[%s685 + $0x658] sm:$0xff]
        %v932 = vld [vmem:[%s685 + $0x660] sm:$0xff]
        %v933 = vld [vmem:[%s685 + $0x668] sm:$0xff]
        %v934 = vld [vmem:[%s685 + $0x670] sm:$0xff]
        %v935 = vld [vmem:[%s685 + $0x678] sm:$0xff]
        %v936 = vld [vmem:[%s685 + $0x680] sm:$0xff]
        %v937 = vld [vmem:[%s685 + $0x688] sm:$0xff]
        %v938 = vld [vmem:[%s685 + $0x690] sm:$0xff]
        %v939 = vld [vmem:[%s685 + $0x698] sm:$0xff]
        %v940 = vld [vmem:[%s685 + $0x6a0] sm:$0xff]
        %v941 = vld [vmem:[%s685 + $0x6a8] sm:$0xff]
        %v942 = vld [vmem:[%s685 + $0x6b0] sm:$0xff]
        %v943 = vld [vmem:[%s685 + $0x6b8] sm:$0xff]
        %v944 = vld [vmem:[%s685 + $0x6c0] sm:$0xff]
        %v945 = vld [vmem:[%s685 + $0x6c8] sm:$0xff]
        %v946 = vld [vmem:[%s685 + $0x6d0] sm:$0xff]
        %v947 = vld [vmem:[%s685 + $0x6d8] sm:$0xff]
        %v948 = vld [vmem:[%s685 + $0x6e0] sm:$0xff]
        %v949 = vld [vmem:[%s685 + $0x6e8] sm:$0xff]
        %v950 = vld [vmem:[%s685 + $0x6f0] sm:$0xff]
        %v951 = vld [vmem:[%s685 + $0x6f8] sm:$0xff]
        %v952 = vld [vmem:[%s685 + $0x700] sm:$0xff]
        %v953 = vld [vmem:[%s685 + $0x708] sm:$0xff]
        %v954 = vld [vmem:[%s685 + $0x710] sm:$0xff]
        %v955 = vld [vmem:[%s685 + $0x718] sm:$0xff]
        %v956 = vld [vmem:[%s685 + $0x720] sm:$0xff]
        %v957 = vld [vmem:[%s685 + $0x728] sm:$0xff]
        %v958 = vld [vmem:[%s685 + $0x730] sm:$0xff]
        %v959 = vld [vmem:[%s685 + $0x738] sm:$0xff]
        %v960 = vld [vmem:[%s685 + $0x740] sm:$0xff]
        %v961 = vld [vmem:[%s685 + $0x748] sm:$0xff]
        %v962 = vld [vmem:[%s685 + $0x750] sm:$0xff]
        %v963 = vld [vmem:[%s685 + $0x758] sm:$0xff]
        %v964 = vld [vmem:[%s685 + $0x760] sm:$0xff]
        %v965 = vld [vmem:[%s685 + $0x768] sm:$0xff]
        %v966 = vld [vmem:[%s685 + $0x770] sm:$0xff]
        %v967 = vld [vmem:[%s685 + $0x778] sm:$0xff]
        %v968 = vld [vmem:[%s685 + $0x780] sm:$0xff]
        %v969 = vld [vmem:[%s685 + $0x788] sm:$0xff]
        %v970 = vld [vmem:[%s685 + $0x790] sm:$0xff]
        %v971 = vld [vmem:[%s685 + $0x798] sm:$0xff]
        %v972 = vld [vmem:[%s685 + $0x7a0] sm:$0xff]
        %v973 = vld [vmem:[%s685 + $0x7a8] sm:$0xff]
        %v974 = vld [vmem:[%s685 + $0x7b0] sm:$0xff]
        %v975 = vld [vmem:[%s685 + $0x7b8] sm:$0xff]
        %v976 = vld [vmem:[%s685 + $0x7c0] sm:$0xff]
        %v977 = vld [vmem:[%s685 + $0x7c8] sm:$0xff]
        %v978 = vld [vmem:[%s685 + $0x7d0] sm:$0xff]
        %v979 = vld [vmem:[%s685 + $0x7d8] sm:$0xff]
        %v980 = vld [vmem:[%s685 + $0x7e0] sm:$0xff]
        %v981 = vld [vmem:[%s685 + $0x7e8] sm:$0xff]
        %v982 = vld [vmem:[%s685 + $0x7f0] sm:$0xff]
        %v983 = vld [vmem:[%s685 + $0x7f8] sm:$0xff]
        %v984 = vld [vmem:[%s713] sm:$0xff]
        %v986 = vperm.slane %v984, 0
        %v987 = vperm.slane %v984, 1
        %v988 = vperm.slane %v984, 2
        %v989 = vperm.slane %v984, 3
        %v990 = vperm.slane %v984, 4
        %v991 = vperm.slane %v984, 5
        %v992 = vperm.slane %v984, 6
        %v993 = vperm.slane %v984, 7
        %v1258 = vunpack.c.l.b16 %v728
        %v1259 = vunpack.c.h.b16 %v728
        %v1260 = vunpack.c.l.b16 %v729
        %v1261 = vunpack.c.h.b16 %v729
        %v1262 = vunpack.c.l.b16 %v730
        %v1263 = vunpack.c.h.b16 %v730
        %v1264 = vunpack.c.l.b16 %v731
        %v1265 = vunpack.c.h.b16 %v731
        %v1266 = vunpack.c.l.b16 %v732
        %v1267 = vunpack.c.h.b16 %v732
        %v1268 = vunpack.c.l.b16 %v733
        %v1269 = vunpack.c.h.b16 %v733
        %v1270 = vunpack.c.l.b16 %v734
        %v1271 = vunpack.c.h.b16 %v734
        %v1272 = vunpack.c.l.b16 %v735
        %v1273 = vunpack.c.h.b16 %v735
        %v1274 = vunpack.c.l.b16 %v736
        %v1275 = vunpack.c.h.b16 %v736
        %v1276 = vunpack.c.l.b16 %v737
        %v1277 = vunpack.c.h.b16 %v737
        %v1278 = vunpack.c.l.b16 %v738
        %v1279 = vunpack.c.h.b16 %v738
        %v1280 = vunpack.c.l.b16 %v739
        %v1281 = vunpack.c.h.b16 %v739
        %v1282 = vunpack.c.l.b16 %v740
        %v1283 = vunpack.c.h.b16 %v740
        %v1284 = vunpack.c.l.b16 %v741
        %v1285 = vunpack.c.h.b16 %v741
        %v1286 = vunpack.c.l.b16 %v742
        %v1287 = vunpack.c.h.b16 %v742
        %v1288 = vunpack.c.l.b16 %v743
        %v1289 = vunpack.c.h.b16 %v743
        %v1290 = vunpack.c.l.b16 %v744
        %v1291 = vunpack.c.h.b16 %v744
        %v1292 = vunpack.c.l.b16 %v745
        %v1293 = vunpack.c.h.b16 %v745
        %v1294 = vunpack.c.l.b16 %v746
        %v1295 = vunpack.c.h.b16 %v746
        %v1296 = vunpack.c.l.b16 %v747
        %v1297 = vunpack.c.h.b16 %v747
        %v1298 = vunpack.c.l.b16 %v748
        %v1299 = vunpack.c.h.b16 %v748
        %v1300 = vunpack.c.l.b16 %v749
        %v1301 = vunpack.c.h.b16 %v749
        %v1302 = vunpack.c.l.b16 %v750
        %v1303 = vunpack.c.h.b16 %v750
        %v1304 = vunpack.c.l.b16 %v751
        %v1305 = vunpack.c.h.b16 %v751
        %v1306 = vunpack.c.l.b16 %v752
        %v1307 = vunpack.c.h.b16 %v752
        %v1308 = vunpack.c.l.b16 %v753
        %v1309 = vunpack.c.h.b16 %v753
        %v1310 = vunpack.c.l.b16 %v754
        %v1311 = vunpack.c.h.b16 %v754
        %v1312 = vunpack.c.l.b16 %v755
        %v1313 = vunpack.c.h.b16 %v755
        %v1314 = vunpack.c.l.b16 %v756
        %v1315 = vunpack.c.h.b16 %v756
        %v1316 = vunpack.c.l.b16 %v757
        %v1317 = vunpack.c.h.b16 %v757
        %v1318 = vunpack.c.l.b16 %v758
        %v1319 = vunpack.c.h.b16 %v758
        %v1320 = vunpack.c.l.b16 %v759
        %v1321 = vunpack.c.h.b16 %v759
        %v1322 = vunpack.c.l.b16 %v760
        %v1323 = vunpack.c.h.b16 %v760
        %v1324 = vunpack.c.l.b16 %v761
        %v1325 = vunpack.c.h.b16 %v761
        %v1326 = vunpack.c.l.b16 %v762
        %v1327 = vunpack.c.h.b16 %v762
        %v1328 = vunpack.c.l.b16 %v763
        %v1329 = vunpack.c.h.b16 %v763
        %v1330 = vunpack.c.l.b16 %v764
        %v1331 = vunpack.c.h.b16 %v764
        %v1332 = vunpack.c.l.b16 %v765
        %v1333 = vunpack.c.h.b16 %v765
        %v1334 = vunpack.c.l.b16 %v766
        %v1335 = vunpack.c.h.b16 %v766
        %v1336 = vunpack.c.l.b16 %v767
        %v1337 = vunpack.c.h.b16 %v767
        %v1338 = vunpack.c.l.b16 %v768
        %v1339 = vunpack.c.h.b16 %v768
        %v1340 = vunpack.c.l.b16 %v769
        %v1341 = vunpack.c.h.b16 %v769
        %v1342 = vunpack.c.l.b16 %v770
        %v1343 = vunpack.c.h.b16 %v770
        %v1344 = vunpack.c.l.b16 %v771
        %v1345 = vunpack.c.h.b16 %v771
        %v1346 = vunpack.c.l.b16 %v772
        %v1347 = vunpack.c.h.b16 %v772
        %v1348 = vunpack.c.l.b16 %v773
        %v1349 = vunpack.c.h.b16 %v773
        %v1350 = vunpack.c.l.b16 %v774
        %v1351 = vunpack.c.h.b16 %v774
        %v1352 = vunpack.c.l.b16 %v775
        %v1353 = vunpack.c.h.b16 %v775
        %v1354 = vunpack.c.l.b16 %v776
        %v1355 = vunpack.c.h.b16 %v776
        %v1356 = vunpack.c.l.b16 %v777
        %v1357 = vunpack.c.h.b16 %v777
        %v1358 = vunpack.c.l.b16 %v778
        %v1359 = vunpack.c.h.b16 %v778
        %v1360 = vunpack.c.l.b16 %v779
        %v1361 = vunpack.c.h.b16 %v779
        %v1362 = vunpack.c.l.b16 %v780
        %v1363 = vunpack.c.h.b16 %v780
        %v1364 = vunpack.c.l.b16 %v781
        %v1365 = vunpack.c.h.b16 %v781
        %v1366 = vunpack.c.l.b16 %v782
        %v1367 = vunpack.c.h.b16 %v782
        %v1368 = vunpack.c.l.b16 %v783
        %v1369 = vunpack.c.h.b16 %v783
        %v1370 = vunpack.c.l.b16 %v784
        %v1371 = vunpack.c.h.b16 %v784
        %v1372 = vunpack.c.l.b16 %v785
        %v1373 = vunpack.c.h.b16 %v785
        %v1374 = vunpack.c.l.b16 %v786
        %v1375 = vunpack.c.h.b16 %v786
        %v1376 = vunpack.c.l.b16 %v787
        %v1377 = vunpack.c.h.b16 %v787
        %v1378 = vunpack.c.l.b16 %v788
        %v1379 = vunpack.c.h.b16 %v788
        %v1380 = vunpack.c.l.b16 %v789
        %v1381 = vunpack.c.h.b16 %v789
        %v1382 = vunpack.c.l.b16 %v790
        %v1383 = vunpack.c.h.b16 %v790
        %v1384 = vunpack.c.l.b16 %v791
        %v1385 = vunpack.c.h.b16 %v791
        %v1386 = vunpack.c.l.b16 %v792
        %v1387 = vunpack.c.h.b16 %v792
        %v1388 = vunpack.c.l.b16 %v793
        %v1389 = vunpack.c.h.b16 %v793
        %v1390 = vunpack.c.l.b16 %v794
        %v1391 = vunpack.c.h.b16 %v794
        %v1392 = vunpack.c.l.b16 %v795
        %v1393 = vunpack.c.h.b16 %v795
        %v1394 = vunpack.c.l.b16 %v796
        %v1395 = vunpack.c.h.b16 %v796
        %v1396 = vunpack.c.l.b16 %v797
        %v1397 = vunpack.c.h.b16 %v797
        %v1398 = vunpack.c.l.b16 %v798
        %v1399 = vunpack.c.h.b16 %v798
        %v1400 = vunpack.c.l.b16 %v799
        %v1401 = vunpack.c.h.b16 %v799
        %v1402 = vunpack.c.l.b16 %v800
        %v1403 = vunpack.c.h.b16 %v800
        %v1404 = vunpack.c.l.b16 %v801
        %v1405 = vunpack.c.h.b16 %v801
        %v1406 = vunpack.c.l.b16 %v802
        %v1407 = vunpack.c.h.b16 %v802
        %v1408 = vunpack.c.l.b16 %v803
        %v1409 = vunpack.c.h.b16 %v803
        %v1410 = vunpack.c.l.b16 %v804
        %v1411 = vunpack.c.h.b16 %v804
        %v1412 = vunpack.c.l.b16 %v805
        %v1413 = vunpack.c.h.b16 %v805
        %v1414 = vunpack.c.l.b16 %v806
        %v1415 = vunpack.c.h.b16 %v806
        %v1416 = vunpack.c.l.b16 %v807
        %v1417 = vunpack.c.h.b16 %v807
        %v1418 = vunpack.c.l.b16 %v808
        %v1419 = vunpack.c.h.b16 %v808
        %v1420 = vunpack.c.l.b16 %v809
        %v1421 = vunpack.c.h.b16 %v809
        %v1422 = vunpack.c.l.b16 %v810
        %v1423 = vunpack.c.h.b16 %v810
        %v1424 = vunpack.c.l.b16 %v811
        %v1425 = vunpack.c.h.b16 %v811
        %v1426 = vunpack.c.l.b16 %v812
        %v1427 = vunpack.c.h.b16 %v812
        %v1428 = vunpack.c.l.b16 %v813
        %v1429 = vunpack.c.h.b16 %v813
        %v1430 = vunpack.c.l.b16 %v814
        %v1431 = vunpack.c.h.b16 %v814
        %v1432 = vunpack.c.l.b16 %v815
        %v1433 = vunpack.c.h.b16 %v815
        %v1434 = vunpack.c.l.b16 %v816
        %v1435 = vunpack.c.h.b16 %v816
        %v1436 = vunpack.c.l.b16 %v817
        %v1437 = vunpack.c.h.b16 %v817
        %v1438 = vunpack.c.l.b16 %v818
        %v1439 = vunpack.c.h.b16 %v818
        %v1440 = vunpack.c.l.b16 %v819
        %v1441 = vunpack.c.h.b16 %v819
        %v1442 = vunpack.c.l.b16 %v820
        %v1443 = vunpack.c.h.b16 %v820
        %v1444 = vunpack.c.l.b16 %v821
        %v1445 = vunpack.c.h.b16 %v821
        %v1446 = vunpack.c.l.b16 %v822
        %v1447 = vunpack.c.h.b16 %v822
        %v1448 = vunpack.c.l.b16 %v823
        %v1449 = vunpack.c.h.b16 %v823
        %v1450 = vunpack.c.l.b16 %v824
        %v1451 = vunpack.c.h.b16 %v824
        %v1452 = vunpack.c.l.b16 %v825
        %v1453 = vunpack.c.h.b16 %v825
        %v1454 = vunpack.c.l.b16 %v826
        %v1455 = vunpack.c.h.b16 %v826
        %v1456 = vunpack.c.l.b16 %v827
        %v1457 = vunpack.c.h.b16 %v827
        %v1458 = vunpack.c.l.b16 %v828
        %v1459 = vunpack.c.h.b16 %v828
        %v1460 = vunpack.c.l.b16 %v829
        %v1461 = vunpack.c.h.b16 %v829
        %v1462 = vunpack.c.l.b16 %v830
        %v1463 = vunpack.c.h.b16 %v830
        %v1464 = vunpack.c.l.b16 %v831
        %v1465 = vunpack.c.h.b16 %v831
        %v1466 = vunpack.c.l.b16 %v832
        %v1467 = vunpack.c.h.b16 %v832
        %v1468 = vunpack.c.l.b16 %v833
        %v1469 = vunpack.c.h.b16 %v833
        %v1470 = vunpack.c.l.b16 %v834
        %v1471 = vunpack.c.h.b16 %v834
        %v1472 = vunpack.c.l.b16 %v835
        %v1473 = vunpack.c.h.b16 %v835
        %v1474 = vunpack.c.l.b16 %v836
        %v1475 = vunpack.c.h.b16 %v836
        %v1476 = vunpack.c.l.b16 %v837
        %v1477 = vunpack.c.h.b16 %v837
        %v1478 = vunpack.c.l.b16 %v838
        %v1479 = vunpack.c.h.b16 %v838
        %v1480 = vunpack.c.l.b16 %v839
        %v1481 = vunpack.c.h.b16 %v839
        %v1482 = vunpack.c.l.b16 %v840
        %v1483 = vunpack.c.h.b16 %v840
        %v1484 = vunpack.c.l.b16 %v841
        %v1485 = vunpack.c.h.b16 %v841
        %v1486 = vunpack.c.l.b16 %v842
        %v1487 = vunpack.c.h.b16 %v842
        %v1488 = vunpack.c.l.b16 %v843
        %v1489 = vunpack.c.h.b16 %v843
        %v1490 = vunpack.c.l.b16 %v844
        %v1491 = vunpack.c.h.b16 %v844
        %v1492 = vunpack.c.l.b16 %v845
        %v1493 = vunpack.c.h.b16 %v845
        %v1494 = vunpack.c.l.b16 %v846
        %v1495 = vunpack.c.h.b16 %v846
        %v1496 = vunpack.c.l.b16 %v847
        %v1497 = vunpack.c.h.b16 %v847
        %v1498 = vunpack.c.l.b16 %v848
        %v1499 = vunpack.c.h.b16 %v848
        %v1500 = vunpack.c.l.b16 %v849
        %v1501 = vunpack.c.h.b16 %v849
        %v1502 = vunpack.c.l.b16 %v850
        %v1503 = vunpack.c.h.b16 %v850
        %v1504 = vunpack.c.l.b16 %v851
        %v1505 = vunpack.c.h.b16 %v851
        %v1506 = vunpack.c.l.b16 %v852
        %v1507 = vunpack.c.h.b16 %v852
        %v1508 = vunpack.c.l.b16 %v853
        %v1509 = vunpack.c.h.b16 %v853
        %v1510 = vunpack.c.l.b16 %v854
        %v1511 = vunpack.c.h.b16 %v854
        %v1512 = vunpack.c.l.b16 %v855
        %v1513 = vunpack.c.h.b16 %v855
        %v1514 = vunpack.c.l.b16 %v856
        %v1515 = vunpack.c.h.b16 %v856
        %v1516 = vunpack.c.l.b16 %v857
        %v1517 = vunpack.c.h.b16 %v857
        %v1518 = vunpack.c.l.b16 %v858
        %v1519 = vunpack.c.h.b16 %v858
        %v1520 = vunpack.c.l.b16 %v859
        %v1521 = vunpack.c.h.b16 %v859
        %v1522 = vunpack.c.l.b16 %v860
        %v1523 = vunpack.c.h.b16 %v860
        %v1524 = vunpack.c.l.b16 %v861
        %v1525 = vunpack.c.h.b16 %v861
        %v1526 = vunpack.c.l.b16 %v862
        %v1527 = vunpack.c.h.b16 %v862
        %v1528 = vunpack.c.l.b16 %v863
        %v1529 = vunpack.c.h.b16 %v863
        %v1530 = vunpack.c.l.b16 %v864
        %v1531 = vunpack.c.h.b16 %v864
        %v1532 = vunpack.c.l.b16 %v865
        %v1533 = vunpack.c.h.b16 %v865
        %v1534 = vunpack.c.l.b16 %v866
        %v1535 = vunpack.c.h.b16 %v866
        %v1536 = vunpack.c.l.b16 %v867
        %v1537 = vunpack.c.h.b16 %v867
        %v1538 = vunpack.c.l.b16 %v868
        %v1539 = vunpack.c.h.b16 %v868
        %v1540 = vunpack.c.l.b16 %v869
        %v1541 = vunpack.c.h.b16 %v869
        %v1542 = vunpack.c.l.b16 %v870
        %v1543 = vunpack.c.h.b16 %v870
        %v1544 = vunpack.c.l.b16 %v871
        %v1545 = vunpack.c.h.b16 %v871
        %v1546 = vunpack.c.l.b16 %v872
        %v1547 = vunpack.c.h.b16 %v872
        %v1548 = vunpack.c.l.b16 %v873
        %v1549 = vunpack.c.h.b16 %v873
        %v1550 = vunpack.c.l.b16 %v874
        %v1551 = vunpack.c.h.b16 %v874
        %v1552 = vunpack.c.l.b16 %v875
        %v1553 = vunpack.c.h.b16 %v875
        %v1554 = vunpack.c.l.b16 %v876
        %v1555 = vunpack.c.h.b16 %v876
        %v1556 = vunpack.c.l.b16 %v877
        %v1557 = vunpack.c.h.b16 %v877
        %v1558 = vunpack.c.l.b16 %v878
        %v1559 = vunpack.c.h.b16 %v878
        %v1560 = vunpack.c.l.b16 %v879
        %v1561 = vunpack.c.h.b16 %v879
        %v1562 = vunpack.c.l.b16 %v880
        %v1563 = vunpack.c.h.b16 %v880
        %v1564 = vunpack.c.l.b16 %v881
        %v1565 = vunpack.c.h.b16 %v881
        %v1566 = vunpack.c.l.b16 %v882
        %v1567 = vunpack.c.h.b16 %v882
        %v1568 = vunpack.c.l.b16 %v883
        %v1569 = vunpack.c.h.b16 %v883
        %v1570 = vunpack.c.l.b16 %v884
        %v1571 = vunpack.c.h.b16 %v884
        %v1572 = vunpack.c.l.b16 %v885
        %v1573 = vunpack.c.h.b16 %v885
        %v1574 = vunpack.c.l.b16 %v886
        %v1575 = vunpack.c.h.b16 %v886
        %v1576 = vunpack.c.l.b16 %v887
        %v1577 = vunpack.c.h.b16 %v887
        %v1578 = vunpack.c.l.b16 %v888
        %v1579 = vunpack.c.h.b16 %v888
        %v1580 = vunpack.c.l.b16 %v889
        %v1581 = vunpack.c.h.b16 %v889
        %v1582 = vunpack.c.l.b16 %v890
        %v1583 = vunpack.c.h.b16 %v890
        %v1584 = vunpack.c.l.b16 %v891
        %v1585 = vunpack.c.h.b16 %v891
        %v1586 = vunpack.c.l.b16 %v892
        %v1587 = vunpack.c.h.b16 %v892
        %v1588 = vunpack.c.l.b16 %v893
        %v1589 = vunpack.c.h.b16 %v893
        %v1590 = vunpack.c.l.b16 %v894
        %v1591 = vunpack.c.h.b16 %v894
        %v1592 = vunpack.c.l.b16 %v895
        %v1593 = vunpack.c.h.b16 %v895
        %v1594 = vunpack.c.l.b16 %v896
        %v1595 = vunpack.c.h.b16 %v896
        %v1596 = vunpack.c.l.b16 %v897
        %v1597 = vunpack.c.h.b16 %v897
        %v1598 = vunpack.c.l.b16 %v898
        %v1599 = vunpack.c.h.b16 %v898
        %v1600 = vunpack.c.l.b16 %v899
        %v1601 = vunpack.c.h.b16 %v899
        %v1602 = vunpack.c.l.b16 %v900
        %v1603 = vunpack.c.h.b16 %v900
        %v1604 = vunpack.c.l.b16 %v901
        %v1605 = vunpack.c.h.b16 %v901
        %v1606 = vunpack.c.l.b16 %v902
        %v1607 = vunpack.c.h.b16 %v902
        %v1608 = vunpack.c.l.b16 %v903
        %v1609 = vunpack.c.h.b16 %v903
        %v1610 = vunpack.c.l.b16 %v904
        %v1611 = vunpack.c.h.b16 %v904
        %v1612 = vunpack.c.l.b16 %v905
        %v1613 = vunpack.c.h.b16 %v905
        %v1614 = vunpack.c.l.b16 %v906
        %v1615 = vunpack.c.h.b16 %v906
        %v1616 = vunpack.c.l.b16 %v907
        %v1617 = vunpack.c.h.b16 %v907
        %v1618 = vunpack.c.l.b16 %v908
        %v1619 = vunpack.c.h.b16 %v908
        %v1620 = vunpack.c.l.b16 %v909
        %v1621 = vunpack.c.h.b16 %v909
        %v1622 = vunpack.c.l.b16 %v910
        %v1623 = vunpack.c.h.b16 %v910
        %v1624 = vunpack.c.l.b16 %v911
        %v1625 = vunpack.c.h.b16 %v911
        %v1626 = vunpack.c.l.b16 %v912
        %v1627 = vunpack.c.h.b16 %v912
        %v1628 = vunpack.c.l.b16 %v913
        %v1629 = vunpack.c.h.b16 %v913
        %v1630 = vunpack.c.l.b16 %v914
        %v1631 = vunpack.c.h.b16 %v914
        %v1632 = vunpack.c.l.b16 %v915
        %v1633 = vunpack.c.h.b16 %v915
        %v1634 = vunpack.c.l.b16 %v916
        %v1635 = vunpack.c.h.b16 %v916
        %v1636 = vunpack.c.l.b16 %v917
        %v1637 = vunpack.c.h.b16 %v917
        %v1638 = vunpack.c.l.b16 %v918
        %v1639 = vunpack.c.h.b16 %v918
        %v1640 = vunpack.c.l.b16 %v919
        %v1641 = vunpack.c.h.b16 %v919
        %v1642 = vunpack.c.l.b16 %v920
        %v1643 = vunpack.c.h.b16 %v920
        %v1644 = vunpack.c.l.b16 %v921
        %v1645 = vunpack.c.h.b16 %v921
        %v1646 = vunpack.c.l.b16 %v922
        %v1647 = vunpack.c.h.b16 %v922
        %v1648 = vunpack.c.l.b16 %v923
        %v1649 = vunpack.c.h.b16 %v923
        %v1650 = vunpack.c.l.b16 %v924
        %v1651 = vunpack.c.h.b16 %v924
        %v1652 = vunpack.c.l.b16 %v925
        %v1653 = vunpack.c.h.b16 %v925
        %v1654 = vunpack.c.l.b16 %v926
        %v1655 = vunpack.c.h.b16 %v926
        %v1656 = vunpack.c.l.b16 %v927
        %v1657 = vunpack.c.h.b16 %v927
        %v1658 = vunpack.c.l.b16 %v928
        %v1659 = vunpack.c.h.b16 %v928
        %v1660 = vunpack.c.l.b16 %v929
        %v1661 = vunpack.c.h.b16 %v929
        %v1662 = vunpack.c.l.b16 %v930
        %v1663 = vunpack.c.h.b16 %v930
        %v1664 = vunpack.c.l.b16 %v931
        %v1665 = vunpack.c.h.b16 %v931
        %v1666 = vunpack.c.l.b16 %v932
        %v1667 = vunpack.c.h.b16 %v932
        %v1668 = vunpack.c.l.b16 %v933
        %v1669 = vunpack.c.h.b16 %v933
        %v1670 = vunpack.c.l.b16 %v934
        %v1671 = vunpack.c.h.b16 %v934
        %v1672 = vunpack.c.l.b16 %v935
        %v1673 = vunpack.c.h.b16 %v935
        %v1674 = vunpack.c.l.b16 %v936
        %v1675 = vunpack.c.h.b16 %v936
        %v1676 = vunpack.c.l.b16 %v937
        %v1677 = vunpack.c.h.b16 %v937
        %v1678 = vunpack.c.l.b16 %v938
        %v1679 = vunpack.c.h.b16 %v938
        %v1680 = vunpack.c.l.b16 %v939
        %v1681 = vunpack.c.h.b16 %v939
        %v1682 = vunpack.c.l.b16 %v940
        %v1683 = vunpack.c.h.b16 %v940
        %v1684 = vunpack.c.l.b16 %v941
        %v1685 = vunpack.c.h.b16 %v941
        %v1686 = vunpack.c.l.b16 %v942
        %v1687 = vunpack.c.h.b16 %v942
        %v1688 = vunpack.c.l.b16 %v943
        %v1689 = vunpack.c.h.b16 %v943
        %v1690 = vunpack.c.l.b16 %v944
        %v1691 = vunpack.c.h.b16 %v944
        %v1692 = vunpack.c.l.b16 %v945
        %v1693 = vunpack.c.h.b16 %v945
        %v1694 = vunpack.c.l.b16 %v946
        %v1695 = vunpack.c.h.b16 %v946
        %v1696 = vunpack.c.l.b16 %v947
        %v1697 = vunpack.c.h.b16 %v947
        %v1698 = vunpack.c.l.b16 %v948
        %v1699 = vunpack.c.h.b16 %v948
        %v1700 = vunpack.c.l.b16 %v949
        %v1701 = vunpack.c.h.b16 %v949
        %v1702 = vunpack.c.l.b16 %v950
        %v1703 = vunpack.c.h.b16 %v950
        %v1704 = vunpack.c.l.b16 %v951
        %v1705 = vunpack.c.h.b16 %v951
        %v1706 = vunpack.c.l.b16 %v952
        %v1707 = vunpack.c.h.b16 %v952
        %v1708 = vunpack.c.l.b16 %v953
        %v1709 = vunpack.c.h.b16 %v953
        %v1710 = vunpack.c.l.b16 %v954
        %v1711 = vunpack.c.h.b16 %v954
        %v1712 = vunpack.c.l.b16 %v955
        %v1713 = vunpack.c.h.b16 %v955
        %v1714 = vunpack.c.l.b16 %v956
        %v1715 = vunpack.c.h.b16 %v956
        %v1716 = vunpack.c.l.b16 %v957
        %v1717 = vunpack.c.h.b16 %v957
        %v1718 = vunpack.c.l.b16 %v958
        %v1719 = vunpack.c.h.b16 %v958
        %v1720 = vunpack.c.l.b16 %v959
        %v1721 = vunpack.c.h.b16 %v959
        %v1722 = vunpack.c.l.b16 %v960
        %v1723 = vunpack.c.h.b16 %v960
        %v1724 = vunpack.c.l.b16 %v961
        %v1725 = vunpack.c.h.b16 %v961
        %v1726 = vunpack.c.l.b16 %v962
        %v1727 = vunpack.c.h.b16 %v962
        %v1728 = vunpack.c.l.b16 %v963
        %v1729 = vunpack.c.h.b16 %v963
        %v1730 = vunpack.c.l.b16 %v964
        %v1731 = vunpack.c.h.b16 %v964
        %v1732 = vunpack.c.l.b16 %v965
        %v1733 = vunpack.c.h.b16 %v965
        %v1734 = vunpack.c.l.b16 %v966
        %v1735 = vunpack.c.h.b16 %v966
        %v1736 = vunpack.c.l.b16 %v967
        %v1737 = vunpack.c.h.b16 %v967
        %v1738 = vunpack.c.l.b16 %v968
        %v1739 = vunpack.c.h.b16 %v968
        %v1740 = vunpack.c.l.b16 %v969
        %v1741 = vunpack.c.h.b16 %v969
        %v1742 = vunpack.c.l.b16 %v970
        %v1743 = vunpack.c.h.b16 %v970
        %v1744 = vunpack.c.l.b16 %v971
        %v1745 = vunpack.c.h.b16 %v971
        %v1746 = vunpack.c.l.b16 %v972
        %v1747 = vunpack.c.h.b16 %v972
        %v1748 = vunpack.c.l.b16 %v973
        %v1749 = vunpack.c.h.b16 %v973
        %v1750 = vunpack.c.l.b16 %v974
        %v1751 = vunpack.c.h.b16 %v974
        %v1752 = vunpack.c.l.b16 %v975
        %v1753 = vunpack.c.h.b16 %v975
        %v1754 = vunpack.c.l.b16 %v976
        %v1755 = vunpack.c.h.b16 %v976
        %v1756 = vunpack.c.l.b16 %v977
        %v1757 = vunpack.c.h.b16 %v977
        %v1758 = vunpack.c.l.b16 %v978
        %v1759 = vunpack.c.h.b16 %v978
        %v1760 = vunpack.c.l.b16 %v979
        %v1761 = vunpack.c.h.b16 %v979
        %v1762 = vunpack.c.l.b16 %v980
        %v1763 = vunpack.c.h.b16 %v980
        %v1764 = vunpack.c.l.b16 %v981
        %v1765 = vunpack.c.h.b16 %v981
        %v1766 = vunpack.c.l.b16 %v982
        %v1767 = vunpack.c.h.b16 %v982
        %v1768 = vunpack.c.l.b16 %v983
        %v1769 = vunpack.c.h.b16 %v983
        %v1770 = vpack.c.b16 %v1266, %v1258
        %v1771 = vpack.c.b16 %v1267, %v1259
        %v1772 = vpack.c.b16 %v1268, %v1260
        %v1773 = vpack.c.b16 %v1269, %v1261
        %v1774 = vpack.c.b16 %v1270, %v1262
        %v1775 = vpack.c.b16 %v1271, %v1263
        %v1776 = vpack.c.b16 %v1272, %v1264
        %v1777 = vpack.c.b16 %v1273, %v1265
        %v1778 = vpack.c.b16 %v1282, %v1274
        %v1779 = vpack.c.b16 %v1283, %v1275
        %v1780 = vpack.c.b16 %v1284, %v1276
        %v1781 = vpack.c.b16 %v1285, %v1277
        %v1782 = vpack.c.b16 %v1286, %v1278
        %v1783 = vpack.c.b16 %v1287, %v1279
        %v1784 = vpack.c.b16 %v1288, %v1280
        %v1785 = vpack.c.b16 %v1289, %v1281
        %v1786 = vpack.c.b16 %v1298, %v1290
        %v1787 = vpack.c.b16 %v1299, %v1291
        %v1788 = vpack.c.b16 %v1300, %v1292
        %v1789 = vpack.c.b16 %v1301, %v1293
        %v1790 = vpack.c.b16 %v1302, %v1294
        %v1791 = vpack.c.b16 %v1303, %v1295
        %v1792 = vpack.c.b16 %v1304, %v1296
        %v1793 = vpack.c.b16 %v1305, %v1297
        %v1794 = vpack.c.b16 %v1314, %v1306
        %v1795 = vpack.c.b16 %v1315, %v1307
        %v1796 = vpack.c.b16 %v1316, %v1308
        %v1797 = vpack.c.b16 %v1317, %v1309
        %v1798 = vpack.c.b16 %v1318, %v1310
        %v1799 = vpack.c.b16 %v1319, %v1311
        %v1800 = vpack.c.b16 %v1320, %v1312
        %v1801 = vpack.c.b16 %v1321, %v1313
        %v1802 = vpack.c.b16 %v1330, %v1322
        %v1803 = vpack.c.b16 %v1331, %v1323
        %v1804 = vpack.c.b16 %v1332, %v1324
        %v1805 = vpack.c.b16 %v1333, %v1325
        %v1806 = vpack.c.b16 %v1334, %v1326
        %v1807 = vpack.c.b16 %v1335, %v1327
        %v1808 = vpack.c.b16 %v1336, %v1328
        %v1809 = vpack.c.b16 %v1337, %v1329
        %v1810 = vpack.c.b16 %v1346, %v1338
        %v1811 = vpack.c.b16 %v1347, %v1339
        %v1812 = vpack.c.b16 %v1348, %v1340
        %v1813 = vpack.c.b16 %v1349, %v1341
        %v1814 = vpack.c.b16 %v1350, %v1342
        %v1815 = vpack.c.b16 %v1351, %v1343
        %v1816 = vpack.c.b16 %v1352, %v1344
        %v1817 = vpack.c.b16 %v1353, %v1345
        %v1818 = vpack.c.b16 %v1362, %v1354
        %v1819 = vpack.c.b16 %v1363, %v1355
        %v1820 = vpack.c.b16 %v1364, %v1356
        %v1821 = vpack.c.b16 %v1365, %v1357
        %v1822 = vpack.c.b16 %v1366, %v1358
        %v1823 = vpack.c.b16 %v1367, %v1359
        %v1824 = vpack.c.b16 %v1368, %v1360
        %v1825 = vpack.c.b16 %v1369, %v1361
        %v1826 = vpack.c.b16 %v1378, %v1370
        %v1827 = vpack.c.b16 %v1379, %v1371
        %v1828 = vpack.c.b16 %v1380, %v1372
        %v1829 = vpack.c.b16 %v1381, %v1373
        %v1830 = vpack.c.b16 %v1382, %v1374
        %v1831 = vpack.c.b16 %v1383, %v1375
        %v1832 = vpack.c.b16 %v1384, %v1376
        %v1833 = vpack.c.b16 %v1385, %v1377
        %v1834 = vpack.c.b16 %v1394, %v1386
        %v1835 = vpack.c.b16 %v1395, %v1387
        %v1836 = vpack.c.b16 %v1396, %v1388
        %v1837 = vpack.c.b16 %v1397, %v1389
        %v1838 = vpack.c.b16 %v1398, %v1390
        %v1839 = vpack.c.b16 %v1399, %v1391
        %v1840 = vpack.c.b16 %v1400, %v1392
        %v1841 = vpack.c.b16 %v1401, %v1393
        %v1842 = vpack.c.b16 %v1410, %v1402
        %v1843 = vpack.c.b16 %v1411, %v1403
        %v1844 = vpack.c.b16 %v1412, %v1404
        %v1845 = vpack.c.b16 %v1413, %v1405
        %v1846 = vpack.c.b16 %v1414, %v1406
        %v1847 = vpack.c.b16 %v1415, %v1407
        %v1848 = vpack.c.b16 %v1416, %v1408
        %v1849 = vpack.c.b16 %v1417, %v1409
        %v1850 = vpack.c.b16 %v1426, %v1418
        %v1851 = vpack.c.b16 %v1427, %v1419
        %v1852 = vpack.c.b16 %v1428, %v1420
        %v1853 = vpack.c.b16 %v1429, %v1421
        %v1854 = vpack.c.b16 %v1430, %v1422
        %v1855 = vpack.c.b16 %v1431, %v1423
        %v1856 = vpack.c.b16 %v1432, %v1424
        %v1857 = vpack.c.b16 %v1433, %v1425
        %v1858 = vpack.c.b16 %v1442, %v1434
        %v1859 = vpack.c.b16 %v1443, %v1435
        %v1860 = vpack.c.b16 %v1444, %v1436
        %v1861 = vpack.c.b16 %v1445, %v1437
        %v1862 = vpack.c.b16 %v1446, %v1438
        %v1863 = vpack.c.b16 %v1447, %v1439
        %v1864 = vpack.c.b16 %v1448, %v1440
        %v1865 = vpack.c.b16 %v1449, %v1441
        %v1866 = vpack.c.b16 %v1458, %v1450
        %v1867 = vpack.c.b16 %v1459, %v1451
        %v1868 = vpack.c.b16 %v1460, %v1452
        %v1869 = vpack.c.b16 %v1461, %v1453
        %v1870 = vpack.c.b16 %v1462, %v1454
        %v1871 = vpack.c.b16 %v1463, %v1455
        %v1872 = vpack.c.b16 %v1464, %v1456
        %v1873 = vpack.c.b16 %v1465, %v1457
        %v1874 = vpack.c.b16 %v1474, %v1466
        %v1875 = vpack.c.b16 %v1475, %v1467
        %v1876 = vpack.c.b16 %v1476, %v1468
        %v1877 = vpack.c.b16 %v1477, %v1469
        %v1878 = vpack.c.b16 %v1478, %v1470
        %v1879 = vpack.c.b16 %v1479, %v1471
        %v1880 = vpack.c.b16 %v1480, %v1472
        %v1881 = vpack.c.b16 %v1481, %v1473
        %v1882 = vpack.c.b16 %v1490, %v1482
        %v1883 = vpack.c.b16 %v1491, %v1483
        %v1884 = vpack.c.b16 %v1492, %v1484
        %v1885 = vpack.c.b16 %v1493, %v1485
        %v1886 = vpack.c.b16 %v1494, %v1486
        %v1887 = vpack.c.b16 %v1495, %v1487
        %v1888 = vpack.c.b16 %v1496, %v1488
        %v1889 = vpack.c.b16 %v1497, %v1489
        %v1890 = vpack.c.b16 %v1506, %v1498
        %v1891 = vpack.c.b16 %v1507, %v1499
        %v1892 = vpack.c.b16 %v1508, %v1500
        %v1893 = vpack.c.b16 %v1509, %v1501
        %v1894 = vpack.c.b16 %v1510, %v1502
        %v1895 = vpack.c.b16 %v1511, %v1503
        %v1896 = vpack.c.b16 %v1512, %v1504
        %v1897 = vpack.c.b16 %v1513, %v1505
        %v1898 = vpack.c.b16 %v1522, %v1514
        %v1899 = vpack.c.b16 %v1523, %v1515
        %v1900 = vpack.c.b16 %v1524, %v1516
        %v1901 = vpack.c.b16 %v1525, %v1517
        %v1902 = vpack.c.b16 %v1526, %v1518
        %v1903 = vpack.c.b16 %v1527, %v1519
        %v1904 = vpack.c.b16 %v1528, %v1520
        %v1905 = vpack.c.b16 %v1529, %v1521
        %v1906 = vpack.c.b16 %v1538, %v1530
        %v1907 = vpack.c.b16 %v1539, %v1531
        %v1908 = vpack.c.b16 %v1540, %v1532
        %v1909 = vpack.c.b16 %v1541, %v1533
        %v1910 = vpack.c.b16 %v1542, %v1534
        %v1911 = vpack.c.b16 %v1543, %v1535
        %v1912 = vpack.c.b16 %v1544, %v1536
        %v1913 = vpack.c.b16 %v1545, %v1537
        %v1914 = vpack.c.b16 %v1554, %v1546
        %v1915 = vpack.c.b16 %v1555, %v1547
        %v1916 = vpack.c.b16 %v1556, %v1548
        %v1917 = vpack.c.b16 %v1557, %v1549
        %v1918 = vpack.c.b16 %v1558, %v1550
        %v1919 = vpack.c.b16 %v1559, %v1551
        %v1920 = vpack.c.b16 %v1560, %v1552
        %v1921 = vpack.c.b16 %v1561, %v1553
        %v1922 = vpack.c.b16 %v1570, %v1562
        %v1923 = vpack.c.b16 %v1571, %v1563
        %v1924 = vpack.c.b16 %v1572, %v1564
        %v1925 = vpack.c.b16 %v1573, %v1565
        %v1926 = vpack.c.b16 %v1574, %v1566
        %v1927 = vpack.c.b16 %v1575, %v1567
        %v1928 = vpack.c.b16 %v1576, %v1568
        %v1929 = vpack.c.b16 %v1577, %v1569
        %v1930 = vpack.c.b16 %v1586, %v1578
        %v1931 = vpack.c.b16 %v1587, %v1579
        %v1932 = vpack.c.b16 %v1588, %v1580
        %v1933 = vpack.c.b16 %v1589, %v1581
        %v1934 = vpack.c.b16 %v1590, %v1582
        %v1935 = vpack.c.b16 %v1591, %v1583
        %v1936 = vpack.c.b16 %v1592, %v1584
        %v1937 = vpack.c.b16 %v1593, %v1585
        %v1938 = vpack.c.b16 %v1602, %v1594
        %v1939 = vpack.c.b16 %v1603, %v1595
        %v1940 = vpack.c.b16 %v1604, %v1596
        %v1941 = vpack.c.b16 %v1605, %v1597
        %v1942 = vpack.c.b16 %v1606, %v1598
        %v1943 = vpack.c.b16 %v1607, %v1599
        %v1944 = vpack.c.b16 %v1608, %v1600
        %v1945 = vpack.c.b16 %v1609, %v1601
        %v1946 = vpack.c.b16 %v1618, %v1610
        %v1947 = vpack.c.b16 %v1619, %v1611
        %v1948 = vpack.c.b16 %v1620, %v1612
        %v1949 = vpack.c.b16 %v1621, %v1613
        %v1950 = vpack.c.b16 %v1622, %v1614
        %v1951 = vpack.c.b16 %v1623, %v1615
        %v1952 = vpack.c.b16 %v1624, %v1616
        %v1953 = vpack.c.b16 %v1625, %v1617
        %v1954 = vpack.c.b16 %v1634, %v1626
        %v1955 = vpack.c.b16 %v1635, %v1627
        %v1956 = vpack.c.b16 %v1636, %v1628
        %v1957 = vpack.c.b16 %v1637, %v1629
        %v1958 = vpack.c.b16 %v1638, %v1630
        %v1959 = vpack.c.b16 %v1639, %v1631
        %v1960 = vpack.c.b16 %v1640, %v1632
        %v1961 = vpack.c.b16 %v1641, %v1633
        %v1962 = vpack.c.b16 %v1650, %v1642
        %v1963 = vpack.c.b16 %v1651, %v1643
        %v1964 = vpack.c.b16 %v1652, %v1644
        %v1965 = vpack.c.b16 %v1653, %v1645
        %v1966 = vpack.c.b16 %v1654, %v1646
        %v1967 = vpack.c.b16 %v1655, %v1647
        %v1968 = vpack.c.b16 %v1656, %v1648
        %v1969 = vpack.c.b16 %v1657, %v1649
        %v1970 = vpack.c.b16 %v1666, %v1658
        %v1971 = vpack.c.b16 %v1667, %v1659
        %v1972 = vpack.c.b16 %v1668, %v1660
        %v1973 = vpack.c.b16 %v1669, %v1661
        %v1974 = vpack.c.b16 %v1670, %v1662
        %v1975 = vpack.c.b16 %v1671, %v1663
        %v1976 = vpack.c.b16 %v1672, %v1664
        %v1977 = vpack.c.b16 %v1673, %v1665
        %v1978 = vpack.c.b16 %v1682, %v1674
        %v1979 = vpack.c.b16 %v1683, %v1675
        %v1980 = vpack.c.b16 %v1684, %v1676
        %v1981 = vpack.c.b16 %v1685, %v1677
        %v1982 = vpack.c.b16 %v1686, %v1678
        %v1983 = vpack.c.b16 %v1687, %v1679
        %v1984 = vpack.c.b16 %v1688, %v1680
        %v1985 = vpack.c.b16 %v1689, %v1681
        %v1986 = vpack.c.b16 %v1698, %v1690
        %v1987 = vpack.c.b16 %v1699, %v1691
        %v1988 = vpack.c.b16 %v1700, %v1692
        %v1989 = vpack.c.b16 %v1701, %v1693
        %v1990 = vpack.c.b16 %v1702, %v1694
        %v1991 = vpack.c.b16 %v1703, %v1695
        %v1992 = vpack.c.b16 %v1704, %v1696
        %v1993 = vpack.c.b16 %v1705, %v1697
        %v1994 = vpack.c.b16 %v1714, %v1706
        %v1995 = vpack.c.b16 %v1715, %v1707
        %v1996 = vpack.c.b16 %v1716, %v1708
        %v1997 = vpack.c.b16 %v1717, %v1709
        %v1998 = vpack.c.b16 %v1718, %v1710
        %v1999 = vpack.c.b16 %v1719, %v1711
        %v2000 = vpack.c.b16 %v1720, %v1712
        %v2001 = vpack.c.b16 %v1721, %v1713
        %v2002 = vpack.c.b16 %v1730, %v1722
        %v2003 = vpack.c.b16 %v1731, %v1723
        %v2004 = vpack.c.b16 %v1732, %v1724
        %v2005 = vpack.c.b16 %v1733, %v1725
        %v2006 = vpack.c.b16 %v1734, %v1726
        %v2007 = vpack.c.b16 %v1735, %v1727
        %v2008 = vpack.c.b16 %v1736, %v1728
        %v2009 = vpack.c.b16 %v1737, %v1729
        %v2010 = vpack.c.b16 %v1746, %v1738
        %v2011 = vpack.c.b16 %v1747, %v1739
        %v2012 = vpack.c.b16 %v1748, %v1740
        %v2013 = vpack.c.b16 %v1749, %v1741
        %v2014 = vpack.c.b16 %v1750, %v1742
        %v2015 = vpack.c.b16 %v1751, %v1743
        %v2016 = vpack.c.b16 %v1752, %v1744
        %v2017 = vpack.c.b16 %v1753, %v1745
        %v2018 = vpack.c.b16 %v1762, %v1754
        %v2019 = vpack.c.b16 %v1763, %v1755
        %v2020 = vpack.c.b16 %v1764, %v1756
        %v2021 = vpack.c.b16 %v1765, %v1757
        %v2022 = vpack.c.b16 %v1766, %v1758
        %v2023 = vpack.c.b16 %v1767, %v1759
        %v2024 = vpack.c.b16 %v1768, %v1760
        %v2025 = vpack.c.b16 %v1769, %v1761
        %2282 = vmatpush.bf16.msra.mxu0 %v1826
        %2283 = vmatpush.bf16.msra.mxu0 %v1818
        %2284 = vmatpush.bf16.msra.mxu0 %v1810
        %2285 = vmatpush.bf16.msra.mxu0 %v1802
        %2286 = vmatpush.bf16.msra.mxu0 %v1794
        %2287 = vmatpush.bf16.msra.mxu0 %v1786
        %2288 = vmatpush.bf16.msra.mxu0 %v1778
        %2289 = vmatpush.bf16.msra.mxu0 %v1770
        %2290 = vmatmul.bf16.gmra.mxu0 %v724
        %v2291 = vpop.f32.mrf.mxu0
        %v2292 = vadd.f32 %v986, %v2291
        %v2293 = vpop.f32.mrf.mxu0
        %2294 = vdwg.mxu0
        %2295 = vmatpush.bf16.msra.mxu0 %v1890
        %2296 = vmatpush.bf16.msra.mxu0 %v1882
        %2297 = vmatpush.bf16.msra.mxu0 %v1874
        %2298 = vmatpush.bf16.msra.mxu0 %v1866
        %2299 = vmatpush.bf16.msra.mxu0 %v1858
        %2300 = vmatpush.bf16.msra.mxu0 %v1850
        %2301 = vmatpush.bf16.msra.mxu0 %v1842
        %2302 = vmatpush.bf16.msra.mxu0 %v1834
        %2303 = vmatmul.bf16.gmra.mxu0 %v725
        %v2304 = vpop.f32.mrf.mxu0
        %v2305 = vadd.f32 %v2292, %v2304
        %v2306 = vpop.f32.mrf.mxu0
        %2307 = vdwg.mxu0
        %2308 = vmatpush.bf16.msra.mxu0 %v1954
        %2309 = vmatpush.bf16.msra.mxu0 %v1946
        %2310 = vmatpush.bf16.msra.mxu0 %v1938
        %2311 = vmatpush.bf16.msra.mxu0 %v1930
        %2312 = vmatpush.bf16.msra.mxu0 %v1922
        %2313 = vmatpush.bf16.msra.mxu0 %v1914
        %2314 = vmatpush.bf16.msra.mxu0 %v1906
        %2315 = vmatpush.bf16.msra.mxu0 %v1898
        %2316 = vmatmul.bf16.gmra.mxu0 %v726
        %v2317 = vpop.f32.mrf.mxu0
        %v2318 = vadd.f32 %v2305, %v2317
        %v2319 = vpop.f32.mrf.mxu0
        %2320 = vdwg.mxu0
        %2321 = vmatpush.bf16.msra.mxu0 %v2018
        %2322 = vmatpush.bf16.msra.mxu0 %v2010
        %2323 = vmatpush.bf16.msra.mxu0 %v2002
        %2324 = vmatpush.bf16.msra.mxu0 %v1994
        %2325 = vmatpush.bf16.msra.mxu0 %v1986
        %2326 = vmatpush.bf16.msra.mxu0 %v1978
        %2327 = vmatpush.bf16.msra.mxu0 %v1970
        %2328 = vmatpush.bf16.msra.mxu0 %v1962
        %2329 = vmatmul.bf16.gmra.mxu0 %v727
        %v2330 = vpop.f32.mrf.mxu0
        %v2331 = vadd.f32 %v2318, %v2330
        %v2332 = vpop.f32.mrf.mxu0
        %2333 = vdwg.mxu0
        %2334 = vmatpush.bf16.msra.mxu0 %v1827
        %2335 = vmatpush.bf16.msra.mxu0 %v1819
        %2336 = vmatpush.bf16.msra.mxu0 %v1811
        %2337 = vmatpush.bf16.msra.mxu0 %v1803
        %2338 = vmatpush.bf16.msra.mxu0 %v1795
        %2339 = vmatpush.bf16.msra.mxu0 %v1787
        %2340 = vmatpush.bf16.msra.mxu0 %v1779
        %2341 = vmatpush.bf16.msra.mxu0 %v1771
        %2342 = vmatmul.bf16.gmra.mxu0 %v724
        %v2343 = vpop.f32.mrf.mxu0
        %v2344 = vadd.f32 %v987, %v2343
        %v2345 = vpop.f32.mrf.mxu0
        %2346 = vdwg.mxu0
        %2347 = vmatpush.bf16.msra.mxu0 %v1891
        %2348 = vmatpush.bf16.msra.mxu0 %v1883
        %2349 = vmatpush.bf16.msra.mxu0 %v1875
        %2350 = vmatpush.bf16.msra.mxu0 %v1867
        %2351 = vmatpush.bf16.msra.mxu0 %v1859
        %2352 = vmatpush.bf16.msra.mxu0 %v1851
        %2353 = vmatpush.bf16.msra.mxu0 %v1843
        %2354 = vmatpush.bf16.msra.mxu0 %v1835
        %2355 = vmatmul.bf16.gmra.mxu0 %v725
        %v2356 = vpop.f32.mrf.mxu0
        %v2357 = vadd.f32 %v2344, %v2356
        %v2358 = vpop.f32.mrf.mxu0
        %2359 = vdwg.mxu0
        %2360 = vmatpush.bf16.msra.mxu0 %v1955
        %2361 = vmatpush.bf16.msra.mxu0 %v1947
        %2362 = vmatpush.bf16.msra.mxu0 %v1939
        %2363 = vmatpush.bf16.msra.mxu0 %v1931
        %2364 = vmatpush.bf16.msra.mxu0 %v1923
        %2365 = vmatpush.bf16.msra.mxu0 %v1915
        %2366 = vmatpush.bf16.msra.mxu0 %v1907
        %2367 = vmatpush.bf16.msra.mxu0 %v1899
        %2368 = vmatmul.bf16.gmra.mxu0 %v726
        %v2369 = vpop.f32.mrf.mxu0
        %v2370 = vadd.f32 %v2357, %v2369
        %v2371 = vpop.f32.mrf.mxu0
        %2372 = vdwg.mxu0
        %2373 = vmatpush.bf16.msra.mxu0 %v2019
        %2374 = vmatpush.bf16.msra.mxu0 %v2011
        %2375 = vmatpush.bf16.msra.mxu0 %v2003
        %2376 = vmatpush.bf16.msra.mxu0 %v1995
        %2377 = vmatpush.bf16.msra.mxu0 %v1987
        %2378 = vmatpush.bf16.msra.mxu0 %v1979
        %2379 = vmatpush.bf16.msra.mxu0 %v1971
        %2380 = vmatpush.bf16.msra.mxu0 %v1963
        %2381 = vmatmul.bf16.gmra.mxu0 %v727
        %v2382 = vpop.f32.mrf.mxu0
        %v2383 = vadd.f32 %v2370, %v2382
        %v2384 = vpop.f32.mrf.mxu0
        %2385 = vdwg.mxu0
        %2386 = vmatpush.bf16.msra.mxu0 %v1828
        %2387 = vmatpush.bf16.msra.mxu0 %v1820
        %2388 = vmatpush.bf16.msra.mxu0 %v1812
        %2389 = vmatpush.bf16.msra.mxu0 %v1804
        %2390 = vmatpush.bf16.msra.mxu0 %v1796
        %2391 = vmatpush.bf16.msra.mxu0 %v1788
        %2392 = vmatpush.bf16.msra.mxu0 %v1780
        %2393 = vmatpush.bf16.msra.mxu0 %v1772
        %2394 = vmatmul.bf16.gmra.mxu0 %v724
        %v2395 = vpop.f32.mrf.mxu0
        %v2396 = vadd.f32 %v988, %v2395
        %v2397 = vpop.f32.mrf.mxu0
        %2398 = vdwg.mxu0
        %2399 = vmatpush.bf16.msra.mxu0 %v1892
        %2400 = vmatpush.bf16.msra.mxu0 %v1884
        %2401 = vmatpush.bf16.msra.mxu0 %v1876
        %2402 = vmatpush.bf16.msra.mxu0 %v1868
        %2403 = vmatpush.bf16.msra.mxu0 %v1860
        %2404 = vmatpush.bf16.msra.mxu0 %v1852
        %2405 = vmatpush.bf16.msra.mxu0 %v1844
        %2406 = vmatpush.bf16.msra.mxu0 %v1836
        %2407 = vmatmul.bf16.gmra.mxu0 %v725
        %v2408 = vpop.f32.mrf.mxu0
        %v2409 = vadd.f32 %v2396, %v2408
        %v2410 = vpop.f32.mrf.mxu0
        %2411 = vdwg.mxu0
        %2412 = vmatpush.bf16.msra.mxu0 %v1956
        %2413 = vmatpush.bf16.msra.mxu0 %v1948
        %2414 = vmatpush.bf16.msra.mxu0 %v1940
        %2415 = vmatpush.bf16.msra.mxu0 %v1932
        %2416 = vmatpush.bf16.msra.mxu0 %v1924
        %2417 = vmatpush.bf16.msra.mxu0 %v1916
        %2418 = vmatpush.bf16.msra.mxu0 %v1908
        %2419 = vmatpush.bf16.msra.mxu0 %v1900
        %2420 = vmatmul.bf16.gmra.mxu0 %v726
        %v2421 = vpop.f32.mrf.mxu0
        %v2422 = vadd.f32 %v2409, %v2421
        %v2423 = vpop.f32.mrf.mxu0
        %2424 = vdwg.mxu0
        %2425 = vmatpush.bf16.msra.mxu0 %v2020
        %2426 = vmatpush.bf16.msra.mxu0 %v2012
        %2427 = vmatpush.bf16.msra.mxu0 %v2004
        %2428 = vmatpush.bf16.msra.mxu0 %v1996
        %2429 = vmatpush.bf16.msra.mxu0 %v1988
        %2430 = vmatpush.bf16.msra.mxu0 %v1980
        %2431 = vmatpush.bf16.msra.mxu0 %v1972
        %2432 = vmatpush.bf16.msra.mxu0 %v1964
        %2433 = vmatmul.bf16.gmra.mxu0 %v727
        %v2434 = vpop.f32.mrf.mxu0
        %v2435 = vadd.f32 %v2422, %v2434
        %v2436 = vpop.f32.mrf.mxu0
        %2437 = vdwg.mxu0
        %2438 = vmatpush.bf16.msra.mxu0 %v1829
        %2439 = vmatpush.bf16.msra.mxu0 %v1821
        %2440 = vmatpush.bf16.msra.mxu0 %v1813
        %2441 = vmatpush.bf16.msra.mxu0 %v1805
        %2442 = vmatpush.bf16.msra.mxu0 %v1797
        %2443 = vmatpush.bf16.msra.mxu0 %v1789
        %2444 = vmatpush.bf16.msra.mxu0 %v1781
        %2445 = vmatpush.bf16.msra.mxu0 %v1773
        %2446 = vmatmul.bf16.gmra.mxu0 %v724
        %v2447 = vpop.f32.mrf.mxu0
        %v2448 = vadd.f32 %v989, %v2447
        %v2449 = vpop.f32.mrf.mxu0
        %2450 = vdwg.mxu0
        %2451 = vmatpush.bf16.msra.mxu0 %v1893
        %2452 = vmatpush.bf16.msra.mxu0 %v1885
        %2453 = vmatpush.bf16.msra.mxu0 %v1877
        %2454 = vmatpush.bf16.msra.mxu0 %v1869
        %2455 = vmatpush.bf16.msra.mxu0 %v1861
        %2456 = vmatpush.bf16.msra.mxu0 %v1853
        %2457 = vmatpush.bf16.msra.mxu0 %v1845
        %2458 = vmatpush.bf16.msra.mxu0 %v1837
        %2459 = vmatmul.bf16.gmra.mxu0 %v725
        %v2460 = vpop.f32.mrf.mxu0
        %v2461 = vadd.f32 %v2448, %v2460
        %v2462 = vpop.f32.mrf.mxu0
        %2463 = vdwg.mxu0
        %2464 = vmatpush.bf16.msra.mxu0 %v1957
        %2465 = vmatpush.bf16.msra.mxu0 %v1949
        %2466 = vmatpush.bf16.msra.mxu0 %v1941
        %2467 = vmatpush.bf16.msra.mxu0 %v1933
        %2468 = vmatpush.bf16.msra.mxu0 %v1925
        %2469 = vmatpush.bf16.msra.mxu0 %v1917
        %2470 = vmatpush.bf16.msra.mxu0 %v1909
        %2471 = vmatpush.bf16.msra.mxu0 %v1901
        %2472 = vmatmul.bf16.gmra.mxu0 %v726
        %v2473 = vpop.f32.mrf.mxu0
        %v2474 = vadd.f32 %v2461, %v2473
        %v2475 = vpop.f32.mrf.mxu0
        %2476 = vdwg.mxu0
        %2477 = vmatpush.bf16.msra.mxu0 %v2021
        %2478 = vmatpush.bf16.msra.mxu0 %v2013
        %2479 = vmatpush.bf16.msra.mxu0 %v2005
        %2480 = vmatpush.bf16.msra.mxu0 %v1997
        %2481 = vmatpush.bf16.msra.mxu0 %v1989
        %2482 = vmatpush.bf16.msra.mxu0 %v1981
        %2483 = vmatpush.bf16.msra.mxu0 %v1973
        %2484 = vmatpush.bf16.msra.mxu0 %v1965
        %2485 = vmatmul.bf16.gmra.mxu0 %v727
        %v2486 = vpop.f32.mrf.mxu0
        %v2487 = vadd.f32 %v2474, %v2486
        %v2488 = vpop.f32.mrf.mxu0
        %2489 = vdwg.mxu0
        %2490 = vmatpush.bf16.msra.mxu0 %v1830
        %2491 = vmatpush.bf16.msra.mxu0 %v1822
        %2492 = vmatpush.bf16.msra.mxu0 %v1814
        %2493 = vmatpush.bf16.msra.mxu0 %v1806
        %2494 = vmatpush.bf16.msra.mxu0 %v1798
        %2495 = vmatpush.bf16.msra.mxu0 %v1790
        %2496 = vmatpush.bf16.msra.mxu0 %v1782
        %2497 = vmatpush.bf16.msra.mxu0 %v1774
        %2498 = vmatmul.bf16.gmra.mxu0 %v724
        %v2499 = vpop.f32.mrf.mxu0
        %v2500 = vadd.f32 %v990, %v2499
        %v2501 = vpop.f32.mrf.mxu0
        %2502 = vdwg.mxu0
        %2503 = vmatpush.bf16.msra.mxu0 %v1894
        %2504 = vmatpush.bf16.msra.mxu0 %v1886
        %2505 = vmatpush.bf16.msra.mxu0 %v1878
        %2506 = vmatpush.bf16.msra.mxu0 %v1870
        %2507 = vmatpush.bf16.msra.mxu0 %v1862
        %2508 = vmatpush.bf16.msra.mxu0 %v1854
        %2509 = vmatpush.bf16.msra.mxu0 %v1846
        %2510 = vmatpush.bf16.msra.mxu0 %v1838
        %2511 = vmatmul.bf16.gmra.mxu0 %v725
        %v2512 = vpop.f32.mrf.mxu0
        %v2513 = vadd.f32 %v2500, %v2512
        %v2514 = vpop.f32.mrf.mxu0
        %2515 = vdwg.mxu0
        %2516 = vmatpush.bf16.msra.mxu0 %v1958
        %2517 = vmatpush.bf16.msra.mxu0 %v1950
        %2518 = vmatpush.bf16.msra.mxu0 %v1942
        %2519 = vmatpush.bf16.msra.mxu0 %v1934
        %2520 = vmatpush.bf16.msra.mxu0 %v1926
        %2521 = vmatpush.bf16.msra.mxu0 %v1918
        %2522 = vmatpush.bf16.msra.mxu0 %v1910
        %2523 = vmatpush.bf16.msra.mxu0 %v1902
        %2524 = vmatmul.bf16.gmra.mxu0 %v726
        %v2525 = vpop.f32.mrf.mxu0
        %v2526 = vadd.f32 %v2513, %v2525
        %v2527 = vpop.f32.mrf.mxu0
        %2528 = vdwg.mxu0
        %2529 = vmatpush.bf16.msra.mxu0 %v2022
        %2530 = vmatpush.bf16.msra.mxu0 %v2014
        %2531 = vmatpush.bf16.msra.mxu0 %v2006
        %2532 = vmatpush.bf16.msra.mxu0 %v1998
        %2533 = vmatpush.bf16.msra.mxu0 %v1990
        %2534 = vmatpush.bf16.msra.mxu0 %v1982
        %2535 = vmatpush.bf16.msra.mxu0 %v1974
        %2536 = vmatpush.bf16.msra.mxu0 %v1966
        %2537 = vmatmul.bf16.gmra.mxu0 %v727
        %v2538 = vpop.f32.mrf.mxu0
        %v2539 = vadd.f32 %v2526, %v2538
        %v2540 = vpop.f32.mrf.mxu0
        %2541 = vdwg.mxu0
        %2542 = vmatpush.bf16.msra.mxu0 %v1831
        %2543 = vmatpush.bf16.msra.mxu0 %v1823
        %2544 = vmatpush.bf16.msra.mxu0 %v1815
        %2545 = vmatpush.bf16.msra.mxu0 %v1807
        %2546 = vmatpush.bf16.msra.mxu0 %v1799
        %2547 = vmatpush.bf16.msra.mxu0 %v1791
        %2548 = vmatpush.bf16.msra.mxu0 %v1783
        %2549 = vmatpush.bf16.msra.mxu0 %v1775
        %2550 = vmatmul.bf16.gmra.mxu0 %v724
        %v2551 = vpop.f32.mrf.mxu0
        %v2552 = vadd.f32 %v991, %v2551
        %v2553 = vpop.f32.mrf.mxu0
        %2554 = vdwg.mxu0
        %2555 = vmatpush.bf16.msra.mxu0 %v1895
        %2556 = vmatpush.bf16.msra.mxu0 %v1887
        %2557 = vmatpush.bf16.msra.mxu0 %v1879
        %2558 = vmatpush.bf16.msra.mxu0 %v1871
        %2559 = vmatpush.bf16.msra.mxu0 %v1863
        %2560 = vmatpush.bf16.msra.mxu0 %v1855
        %2561 = vmatpush.bf16.msra.mxu0 %v1847
        %2562 = vmatpush.bf16.msra.mxu0 %v1839
        %2563 = vmatmul.bf16.gmra.mxu0 %v725
        %v2564 = vpop.f32.mrf.mxu0
        %v2565 = vadd.f32 %v2552, %v2564
        %v2566 = vpop.f32.mrf.mxu0
        %2567 = vdwg.mxu0
        %2568 = vmatpush.bf16.msra.mxu0 %v1959
        %2569 = vmatpush.bf16.msra.mxu0 %v1951
        %2570 = vmatpush.bf16.msra.mxu0 %v1943
        %2571 = vmatpush.bf16.msra.mxu0 %v1935
        %2572 = vmatpush.bf16.msra.mxu0 %v1927
        %2573 = vmatpush.bf16.msra.mxu0 %v1919
        %2574 = vmatpush.bf16.msra.mxu0 %v1911
        %2575 = vmatpush.bf16.msra.mxu0 %v1903
        %2576 = vmatmul.bf16.gmra.mxu0 %v726
        %v2577 = vpop.f32.mrf.mxu0
        %v2578 = vadd.f32 %v2565, %v2577
        %v2579 = vpop.f32.mrf.mxu0
        %2580 = vdwg.mxu0
        %2581 = vmatpush.bf16.msra.mxu0 %v2023
        %2582 = vmatpush.bf16.msra.mxu0 %v2015
        %2583 = vmatpush.bf16.msra.mxu0 %v2007
        %2584 = vmatpush.bf16.msra.mxu0 %v1999
        %2585 = vmatpush.bf16.msra.mxu0 %v1991
        %2586 = vmatpush.bf16.msra.mxu0 %v1983
        %2587 = vmatpush.bf16.msra.mxu0 %v1975
        %2588 = vmatpush.bf16.msra.mxu0 %v1967
        %2589 = vmatmul.bf16.gmra.mxu0 %v727
        %v2590 = vpop.f32.mrf.mxu0
        %v2591 = vadd.f32 %v2578, %v2590
        %v2592 = vpop.f32.mrf.mxu0
        %2593 = vdwg.mxu0
        %2594 = vmatpush.bf16.msra.mxu0 %v1832
        %2595 = vmatpush.bf16.msra.mxu0 %v1824
        %2596 = vmatpush.bf16.msra.mxu0 %v1816
        %2597 = vmatpush.bf16.msra.mxu0 %v1808
        %2598 = vmatpush.bf16.msra.mxu0 %v1800
        %2599 = vmatpush.bf16.msra.mxu0 %v1792
        %2600 = vmatpush.bf16.msra.mxu0 %v1784
        %2601 = vmatpush.bf16.msra.mxu0 %v1776
        %2602 = vmatmul.bf16.gmra.mxu0 %v724
        %v2603 = vpop.f32.mrf.mxu0
        %v2604 = vadd.f32 %v992, %v2603
        %v2605 = vpop.f32.mrf.mxu0
        %2606 = vdwg.mxu0
        %2607 = vmatpush.bf16.msra.mxu0 %v1896
        %2608 = vmatpush.bf16.msra.mxu0 %v1888
        %2609 = vmatpush.bf16.msra.mxu0 %v1880
        %2610 = vmatpush.bf16.msra.mxu0 %v1872
        %2611 = vmatpush.bf16.msra.mxu0 %v1864
        %2612 = vmatpush.bf16.msra.mxu0 %v1856
        %2613 = vmatpush.bf16.msra.mxu0 %v1848
        %2614 = vmatpush.bf16.msra.mxu0 %v1840
        %2615 = vmatmul.bf16.gmra.mxu0 %v725
        %v2616 = vpop.f32.mrf.mxu0
        %v2617 = vadd.f32 %v2604, %v2616
        %v2618 = vpop.f32.mrf.mxu0
        %2619 = vdwg.mxu0
        %2620 = vmatpush.bf16.msra.mxu0 %v1960
        %2621 = vmatpush.bf16.msra.mxu0 %v1952
        %2622 = vmatpush.bf16.msra.mxu0 %v1944
        %2623 = vmatpush.bf16.msra.mxu0 %v1936
        %2624 = vmatpush.bf16.msra.mxu0 %v1928
        %2625 = vmatpush.bf16.msra.mxu0 %v1920
        %2626 = vmatpush.bf16.msra.mxu0 %v1912
        %2627 = vmatpush.bf16.msra.mxu0 %v1904
        %2628 = vmatmul.bf16.gmra.mxu0 %v726
        %v2629 = vpop.f32.mrf.mxu0
        %v2630 = vadd.f32 %v2617, %v2629
        %v2631 = vpop.f32.mrf.mxu0
        %2632 = vdwg.mxu0
        %2633 = vmatpush.bf16.msra.mxu0 %v2024
        %2634 = vmatpush.bf16.msra.mxu0 %v2016
        %2635 = vmatpush.bf16.msra.mxu0 %v2008
        %2636 = vmatpush.bf16.msra.mxu0 %v2000
        %2637 = vmatpush.bf16.msra.mxu0 %v1992
        %2638 = vmatpush.bf16.msra.mxu0 %v1984
        %2639 = vmatpush.bf16.msra.mxu0 %v1976
        %2640 = vmatpush.bf16.msra.mxu0 %v1968
        %2641 = vmatmul.bf16.gmra.mxu0 %v727
        %v2642 = vpop.f32.mrf.mxu0
        %v2643 = vadd.f32 %v2630, %v2642
        %v2644 = vpop.f32.mrf.mxu0
        %2645 = vdwg.mxu0
        %2646 = vmatpush.bf16.msra.mxu0 %v1833
        %2647 = vmatpush.bf16.msra.mxu0 %v1825
        %2648 = vmatpush.bf16.msra.mxu0 %v1817
        %2649 = vmatpush.bf16.msra.mxu0 %v1809
        %2650 = vmatpush.bf16.msra.mxu0 %v1801
        %2651 = vmatpush.bf16.msra.mxu0 %v1793
        %2652 = vmatpush.bf16.msra.mxu0 %v1785
        %2653 = vmatpush.bf16.msra.mxu0 %v1777
        %2654 = vmatmul.bf16.gmra.mxu0 %v724
        %v2655 = vpop.f32.mrf.mxu0
        %v2656 = vadd.f32 %v993, %v2655
        %v2657 = vpop.f32.mrf.mxu0
        %2658 = vdwg.mxu0
        %2659 = vmatpush.bf16.msra.mxu0 %v1897
        %2660 = vmatpush.bf16.msra.mxu0 %v1889
        %2661 = vmatpush.bf16.msra.mxu0 %v1881
        %2662 = vmatpush.bf16.msra.mxu0 %v1873
        %2663 = vmatpush.bf16.msra.mxu0 %v1865
        %2664 = vmatpush.bf16.msra.mxu0 %v1857
        %2665 = vmatpush.bf16.msra.mxu0 %v1849
        %2666 = vmatpush.bf16.msra.mxu0 %v1841
        %2667 = vmatmul.bf16.gmra.mxu0 %v725
        %v2668 = vpop.f32.mrf.mxu0
        %v2669 = vadd.f32 %v2656, %v2668
        %v2670 = vpop.f32.mrf.mxu0
        %2671 = vdwg.mxu0
        %2672 = vmatpush.bf16.msra.mxu0 %v1961
        %2673 = vmatpush.bf16.msra.mxu0 %v1953
        %2674 = vmatpush.bf16.msra.mxu0 %v1945
        %2675 = vmatpush.bf16.msra.mxu0 %v1937
        %2676 = vmatpush.bf16.msra.mxu0 %v1929
        %2677 = vmatpush.bf16.msra.mxu0 %v1921
        %2678 = vmatpush.bf16.msra.mxu0 %v1913
        %2679 = vmatpush.bf16.msra.mxu0 %v1905
        %2680 = vmatmul.bf16.gmra.mxu0 %v726
        %v2681 = vpop.f32.mrf.mxu0
        %v2682 = vadd.f32 %v2669, %v2681
        %v2683 = vpop.f32.mrf.mxu0
        %2684 = vdwg.mxu0
        %2685 = vmatpush.bf16.msra.mxu0 %v2025
        %2686 = vmatpush.bf16.msra.mxu0 %v2017
        %2687 = vmatpush.bf16.msra.mxu0 %v2009
        %2688 = vmatpush.bf16.msra.mxu0 %v2001
        %2689 = vmatpush.bf16.msra.mxu0 %v1993
        %2690 = vmatpush.bf16.msra.mxu0 %v1985
        %2691 = vmatpush.bf16.msra.mxu0 %v1977
        %2692 = vmatpush.bf16.msra.mxu0 %v1969
        %2693 = vmatmul.bf16.gmra.mxu0 %v727
        %v2694 = vpop.f32.mrf.mxu0
        %v2695 = vadd.f32 %v2682, %v2694
        %v2696 = vpop.f32.mrf.mxu0
        %2697 = vdwg.mxu0
        %2698 = vst [vmem:[%s708] sm:$0xff] %v2331
        %2699 = vst [vmem:[%s708 + $0x8] sm:$0xff] %v2383
        %2700 = vst [vmem:[%s708 + $0x10] sm:$0xff] %v2435
        %2701 = vst [vmem:[%s708 + $0x18] sm:$0xff] %v2487
        %2702 = vst [vmem:[%s708 + $0x20] sm:$0xff] %v2539
        %2703 = vst [vmem:[%s708 + $0x28] sm:$0xff] %v2591
        %2704 = vst [vmem:[%s708 + $0x30] sm:$0xff] %v2643
        %2705 = vst [vmem:[%s708 + $0x38] sm:$0xff] %v2695
        %s2706 = sand.u32 %s95, 1
        %s2707 = sand.u32 %s95, 1
        %s2708 = smul.addr %s2707, 64
        %s2709 = scalar_lea.vmem [#allocation3], %s2708
        // Predicated region
        $region56: #{vae_forward.3} parent=50 // pred_check
          %p2710 = pneg %p105
        $region57: #{vae_forward.3} parent=50 // pred_check_branch
          %2712 = sbr.rel (%p2710) target = $region59
        $region58: #{vae_forward.3} parent=50 // pred_region
          %s2713 = smul.u32 8, %s14
          %s2714 = ssub.s32 29, %s2713
          %p2715 = scmp.lt.s32.totalorder %s2714, 8
          %s2716 = scalar_select %p2715, %s2714, 8
          %s2717 = smul.u32 8, %s2716
          %p2718 = scmp.ne.s32.totalorder 0, %s2717
          %s2719 = smul.addr %s2713, 8
          %s2720 = scalar_lea.vmem %s3, %s2719
          %s2721 = smul.u32 %s2716, 8
          // Predicated region
          $region60: #{vae_forward.3} parent=58 // pred_check
            %p2722 = pneg %p2718
          $region61: #{vae_forward.3} parent=58 // pred_check_branch
            %2724 = sbr.rel (%p2722) target = $region63
          $region62: #{vae_forward.3} parent=58 // pred_region
            %p2725 = scmp.lt.u32.totalorder %s2721, 8
            %p2726 = pneg %p2725
            // Predicated region
            $region64: #{vae_forward.3} parent=62 // pred_check
              _
            $region65: #{vae_forward.3} parent=62 // pred_check_branch
              %2728 = sbr.rel (%p2725) target = $region67
            $region66: #{vae_forward.3} parent=62 // pred_region
              %s2744 = sand.u32 %s2721, 7
              %p2745 = scmp.eq.s32.totalorder %s2744, 0
              // Predicated region
              $region79: #{vae_forward.3} parent=66 // pred_check
                %p2746 = pneg %p2745
              $region80: #{vae_forward.3} parent=66 // pred_check_branch
                %2748 = sbr.rel (%p2746) target = $region82
              $region81: #{vae_forward.3} parent=66 // pred_region
                %s2749 = sshrl.u32 %s2721, 3
                %s2750 = sshrl.u32 %s2749, 5
                // While loop
                $region83: #{vae_forward.3} parent=81 // loop_pre_header
                  _
                $region84: #{vae_forward.3} parent=81 // loop_header
                  %s2752 = sphi 0, %s2754
                  %p2753 = scmp.ge.s32.totalorder %s2752, %s2750
                  %s2757 = sphi 0, %s2826
                  %s2758 = sphi %s2709, %s2829
                  %s2759 = sphi %s2720, %s2830
                $region85: #{vae_forward.3} parent=81 // loop_header_branch
                  %2756 = sbr.rel (%p2753) target = $region89
                $region86: #{vae_forward.3} parent=81 // loop_body
                  %v2760 = vld [vmem:[%s2758] sm:$0xff]
                  %2761 = vst [vmem:[%s2759] sm:$0xff] %v2760
                  %v2762 = vld [vmem:[%s2758 + $0x8] sm:$0xff]
                  %2763 = vst [vmem:[%s2759 + $0x8] sm:$0xff] %v2762
                  %v2764 = vld [vmem:[%s2758 + $0x10] sm:$0xff]
                  %2765 = vst [vmem:[%s2759 + $0x10] sm:$0xff] %v2764
                  %v2766 = vld [vmem:[%s2758 + $0x18] sm:$0xff]
                  %2767 = vst [vmem:[%s2759 + $0x18] sm:$0xff] %v2766
                  %v2768 = vld [vmem:[%s2758 + $0x20] sm:$0xff]
                  %2769 = vst [vmem:[%s2759 + $0x20] sm:$0xff] %v2768
                  %v2770 = vld [vmem:[%s2758 + $0x28] sm:$0xff]
                  %2771 = vst [vmem:[%s2759 + $0x28] sm:$0xff] %v2770
                  %v2772 = vld [vmem:[%s2758 + $0x30] sm:$0xff]
                  %2773 = vst [vmem:[%s2759 + $0x30] sm:$0xff] %v2772
                  %v2774 = vld [vmem:[%s2758 + $0x38] sm:$0xff]
                  %2775 = vst [vmem:[%s2759 + $0x38] sm:$0xff] %v2774
                  %v2776 = vld [vmem:[%s2758 + $0x40] sm:$0xff]
                  %2777 = vst [vmem:[%s2759 + $0x40] sm:$0xff] %v2776
                  %v2778 = vld [vmem:[%s2758 + $0x48] sm:$0xff]
                  %2779 = vst [vmem:[%s2759 + $0x48] sm:$0xff] %v2778
                  %v2780 = vld [vmem:[%s2758 + $0x50] sm:$0xff]
                  %2781 = vst [vmem:[%s2759 + $0x50] sm:$0xff] %v2780
                  %v2782 = vld [vmem:[%s2758 + $0x58] sm:$0xff]
                  %2783 = vst [vmem:[%s2759 + $0x58] sm:$0xff] %v2782
                  %v2784 = vld [vmem:[%s2758 + $0x60] sm:$0xff]
                  %2785 = vst [vmem:[%s2759 + $0x60] sm:$0xff] %v2784
                  %v2786 = vld [vmem:[%s2758 + $0x68] sm:$0xff]
                  %2787 = vst [vmem:[%s2759 + $0x68] sm:$0xff] %v2786
                  %v2788 = vld [vmem:[%s2758 + $0x70] sm:$0xff]
                  %2789 = vst [vmem:[%s2759 + $0x70] sm:$0xff] %v2788
                  %v2790 = vld [vmem:[%s2758 + $0x78] sm:$0xff]
                  %2791 = vst [vmem:[%s2759 + $0x78] sm:$0xff] %v2790
                  %v2792 = vld [vmem:[%s2758 + $0x80] sm:$0xff]
                  %2793 = vst [vmem:[%s2759 + $0x80] sm:$0xff] %v2792
                  %v2794 = vld [vmem:[%s2758 + $0x88] sm:$0xff]
                  %2795 = vst [vmem:[%s2759 + $0x88] sm:$0xff] %v2794
                  %v2796 = vld [vmem:[%s2758 + $0x90] sm:$0xff]
                  %2797 = vst [vmem:[%s2759 + $0x90] sm:$0xff] %v2796
                  %v2798 = vld [vmem:[%s2758 + $0x98] sm:$0xff]
                  %2799 = vst [vmem:[%s2759 + $0x98] sm:$0xff] %v2798
                  %v2800 = vld [vmem:[%s2758 + $0xa0] sm:$0xff]
                  %2801 = vst [vmem:[%s2759 + $0xa0] sm:$0xff] %v2800
                  %v2802 = vld [vmem:[%s2758 + $0xa8] sm:$0xff]
                  %2803 = vst [vmem:[%s2759 + $0xa8] sm:$0xff] %v2802
                  %v2804 = vld [vmem:[%s2758 + $0xb0] sm:$0xff]
                  %2805 = vst [vmem:[%s2759 + $0xb0] sm:$0xff] %v2804
                  %v2806 = vld [vmem:[%s2758 + $0xb8] sm:$0xff]
                  %2807 = vst [vmem:[%s2759 + $0xb8] sm:$0xff] %v2806
                  %v2808 = vld [vmem:[%s2758 + $0xc0] sm:$0xff]
                  %2809 = vst [vmem:[%s2759 + $0xc0] sm:$0xff] %v2808
                  %v2810 = vld [vmem:[%s2758 + $0xc8] sm:$0xff]
                  %2811 = vst [vmem:[%s2759 + $0xc8] sm:$0xff] %v2810
                  %v2812 = vld [vmem:[%s2758 + $0xd0] sm:$0xff]
                  %2813 = vst [vmem:[%s2759 + $0xd0] sm:$0xff] %v2812
                  %v2814 = vld [vmem:[%s2758 + $0xd8] sm:$0xff]
                  %2815 = vst [vmem:[%s2759 + $0xd8] sm:$0xff] %v2814
                  %v2816 = vld [vmem:[%s2758 + $0xe0] sm:$0xff]
                  %2817 = vst [vmem:[%s2759 + $0xe0] sm:$0xff] %v2816
                  %v2818 = vld [vmem:[%s2758 + $0xe8] sm:$0xff]
                  %2819 = vst [vmem:[%s2759 + $0xe8] sm:$0xff] %v2818
                  %v2820 = vld [vmem:[%s2758 + $0xf0] sm:$0xff]
                  %2821 = vst [vmem:[%s2759 + $0xf0] sm:$0xff] %v2820
                  %v2822 = vld [vmem:[%s2758 + $0xf8] sm:$0xff]
                  %2823 = vst [vmem:[%s2759 + $0xf8] sm:$0xff] %v2822
                  %s2824 = sadd.s32 1, %s2757
                  %p2825 = scmp.ge.s32.totalorder %s2824, %s2750
                  %s2826 = scalar_select %p2825, 0, %s2824
                  %s2827 = smul.u32 %s2826, 256
                  %s2828 = smul.u32 %s2826, 256
                  %s2829 = scalar_lea.vmem %s2709, %s2827 [#allocation3]
                  %s2830 = scalar_lea.vmem %s2720, %s2828
                $region87: #{vae_forward.3} parent=81 // loop_footer
                  %s2754 = sadd.s32 %s2752, 1
                $region88: #{vae_forward.3} parent=81 // loop_footer_branch
                  %2751 = sbr.rel target = $region84
                $region89: #{vae_forward.3} parent=81 // loop_exit
                  _
                %s2831 = sshrl.u32 %s2749, 5
                %s2832 = sand.u32 %s2749, 31
                %s2833 = smul.u32 %s2831, 32
                %s2834 = smul.u32 8, %s2833
                %s2835 = scalar_lea.vmem %s2709, %s2834 [#allocation3]
                %s2836 = smul.u32 8, %s2833
                %s2837 = scalar_lea.vmem %s2720, %s2836
                // While loop
                $region90: #{vae_forward.3} parent=81 // loop_pre_header
                  _
                $region91: #{vae_forward.3} parent=81 // loop_header
                  %s2839 = sphi 0, %s2841
                  %p2840 = scmp.ge.s32.totalorder %s2839, %s2832
                  %s2844 = sphi 0, %s2851
                  %s2845 = sphi %s2835, %s2854
                  %s2846 = sphi %s2837, %s2855
                $region92: #{vae_forward.3} parent=81 // loop_header_branch
                  %2843 = sbr.rel (%p2840) target = $region96
                $region93: #{vae_forward.3} parent=81 // loop_body
                  %v2847 = vld [vmem:[%s2845] sm:$0xff]
                  %2848 = vst [vmem:[%s2846] sm:$0xff] %v2847
                  %s2849 = sadd.s32 1, %s2844
                  %p2850 = scmp.ge.s32.totalorder %s2849, %s2832
                  %s2851 = scalar_select %p2850, 0, %s2849
                  %s2852 = smul.u32 %s2851, 8
                  %s2853 = smul.u32 %s2851, 8
                  %s2854 = scalar_lea.vmem %s2835, %s2852 [#allocation3]
                  %s2855 = scalar_lea.vmem %s2837, %s2853
                $region94: #{vae_forward.3} parent=81 // loop_footer
                  %s2841 = sadd.s32 %s2839, 1
                $region95: #{vae_forward.3} parent=81 // loop_footer_branch
                  %2838 = sbr.rel target = $region91
                $region96: #{vae_forward.3} parent=81 // loop_exit
                  _
              $region82: #{vae_forward.3} parent=66 // pred_fallthru
                _
              %p2856 = pneg %p2745
              // Predicated region
              $region97: #{vae_forward.3} parent=66 // pred_check
                _
              $region98: #{vae_forward.3} parent=66 // pred_check_branch
                %2858 = sbr.rel (%p2745) target = $region100
              $region99: #{vae_forward.3} parent=66 // pred_region
                %s2859 = sand.u32 %s2721, 7
                %s2860 = ssub.s32 %s2721, %s2859
                %s2861 = scalar_lea.vmem %s2709, %s2860 [#allocation3]
                %s2862 = ssub.s32 %s2721, %s2859
                %s2863 = scalar_lea.vmem %s2720, %s2862
                %s2864 = sshrl.u32 %s2721, 3
                %s2865 = sshrl.u32 %s2864, 5
                // While loop
                $region101: #{vae_forward.3} parent=99 // loop_pre_header
                  _
                $region102: #{vae_forward.3} parent=99 // loop_header
                  %s2867 = sphi 0, %s2869
                  %p2868 = scmp.ge.s32.totalorder %s2867, %s2865
                  %s2872 = sphi 0, %s2941
                  %s2873 = sphi %s2709, %s2944
                  %s2874 = sphi %s2720, %s2945
                $region103: #{vae_forward.3} parent=99 // loop_header_branch
                  %2871 = sbr.rel (%p2868) target = $region107
                $region104: #{vae_forward.3} parent=99 // loop_body
                  %v2875 = vld [vmem:[%s2873] sm:$0xff]
                  %2876 = vst [vmem:[%s2874] sm:$0xff] %v2875
                  %v2877 = vld [vmem:[%s2873 + $0x8] sm:$0xff]
                  %2878 = vst [vmem:[%s2874 + $0x8] sm:$0xff] %v2877
                  %v2879 = vld [vmem:[%s2873 + $0x10] sm:$0xff]
                  %2880 = vst [vmem:[%s2874 + $0x10] sm:$0xff] %v2879
                  %v2881 = vld [vmem:[%s2873 + $0x18] sm:$0xff]
                  %2882 = vst [vmem:[%s2874 + $0x18] sm:$0xff] %v2881
                  %v2883 = vld [vmem:[%s2873 + $0x20] sm:$0xff]
                  %2884 = vst [vmem:[%s2874 + $0x20] sm:$0xff] %v2883
                  %v2885 = vld [vmem:[%s2873 + $0x28] sm:$0xff]
                  %2886 = vst [vmem:[%s2874 + $0x28] sm:$0xff] %v2885
                  %v2887 = vld [vmem:[%s2873 + $0x30] sm:$0xff]
                  %2888 = vst [vmem:[%s2874 + $0x30] sm:$0xff] %v2887
                  %v2889 = vld [vmem:[%s2873 + $0x38] sm:$0xff]
                  %2890 = vst [vmem:[%s2874 + $0x38] sm:$0xff] %v2889
                  %v2891 = vld [vmem:[%s2873 + $0x40] sm:$0xff]
                  %2892 = vst [vmem:[%s2874 + $0x40] sm:$0xff] %v2891
                  %v2893 = vld [vmem:[%s2873 + $0x48] sm:$0xff]
                  %2894 = vst [vmem:[%s2874 + $0x48] sm:$0xff] %v2893
                  %v2895 = vld [vmem:[%s2873 + $0x50] sm:$0xff]
                  %2896 = vst [vmem:[%s2874 + $0x50] sm:$0xff] %v2895
                  %v2897 = vld [vmem:[%s2873 + $0x58] sm:$0xff]
                  %2898 = vst [vmem:[%s2874 + $0x58] sm:$0xff] %v2897
                  %v2899 = vld [vmem:[%s2873 + $0x60] sm:$0xff]
                  %2900 = vst [vmem:[%s2874 + $0x60] sm:$0xff] %v2899
                  %v2901 = vld [vmem:[%s2873 + $0x68] sm:$0xff]
                  %2902 = vst [vmem:[%s2874 + $0x68] sm:$0xff] %v2901
                  %v2903 = vld [vmem:[%s2873 + $0x70] sm:$0xff]
                  %2904 = vst [vmem:[%s2874 + $0x70] sm:$0xff] %v2903
                  %v2905 = vld [vmem:[%s2873 + $0x78] sm:$0xff]
                  %2906 = vst [vmem:[%s2874 + $0x78] sm:$0xff] %v2905
                  %v2907 = vld [vmem:[%s2873 + $0x80] sm:$0xff]
                  %2908 = vst [vmem:[%s2874 + $0x80] sm:$0xff] %v2907
                  %v2909 = vld [vmem:[%s2873 + $0x88] sm:$0xff]
                  %2910 = vst [vmem:[%s2874 + $0x88] sm:$0xff] %v2909
                  %v2911 = vld [vmem:[%s2873 + $0x90] sm:$0xff]
                  %2912 = vst [vmem:[%s2874 + $0x90] sm:$0xff] %v2911
                  %v2913 = vld [vmem:[%s2873 + $0x98] sm:$0xff]
                  %2914 = vst [vmem:[%s2874 + $0x98] sm:$0xff] %v2913
                  %v2915 = vld [vmem:[%s2873 + $0xa0] sm:$0xff]
                  %2916 = vst [vmem:[%s2874 + $0xa0] sm:$0xff] %v2915
                  %v2917 = vld [vmem:[%s2873 + $0xa8] sm:$0xff]
                  %2918 = vst [vmem:[%s2874 + $0xa8] sm:$0xff] %v2917
                  %v2919 = vld [vmem:[%s2873 + $0xb0] sm:$0xff]
                  %2920 = vst [vmem:[%s2874 + $0xb0] sm:$0xff] %v2919
                  %v2921 = vld [vmem:[%s2873 + $0xb8] sm:$0xff]
                  %2922 = vst [vmem:[%s2874 + $0xb8] sm:$0xff] %v2921
                  %v2923 = vld [vmem:[%s2873 + $0xc0] sm:$0xff]
                  %2924 = vst [vmem:[%s2874 + $0xc0] sm:$0xff] %v2923
                  %v2925 = vld [vmem:[%s2873 + $0xc8] sm:$0xff]
                  %2926 = vst [vmem:[%s2874 + $0xc8] sm:$0xff] %v2925
                  %v2927 = vld [vmem:[%s2873 + $0xd0] sm:$0xff]
                  %2928 = vst [vmem:[%s2874 + $0xd0] sm:$0xff] %v2927
                  %v2929 = vld [vmem:[%s2873 + $0xd8] sm:$0xff]
                  %2930 = vst [vmem:[%s2874 + $0xd8] sm:$0xff] %v2929
                  %v2931 = vld [vmem:[%s2873 + $0xe0] sm:$0xff]
                  %2932 = vst [vmem:[%s2874 + $0xe0] sm:$0xff] %v2931
                  %v2933 = vld [vmem:[%s2873 + $0xe8] sm:$0xff]
                  %2934 = vst [vmem:[%s2874 + $0xe8] sm:$0xff] %v2933
                  %v2935 = vld [vmem:[%s2873 + $0xf0] sm:$0xff]
                  %2936 = vst [vmem:[%s2874 + $0xf0] sm:$0xff] %v2935
                  %v2937 = vld [vmem:[%s2873 + $0xf8] sm:$0xff]
                  %2938 = vst [vmem:[%s2874 + $0xf8] sm:$0xff] %v2937
                  %s2939 = sadd.s32 1, %s2872
                  %p2940 = scmp.ge.s32.totalorder %s2939, %s2865
                  %s2941 = scalar_select %p2940, 0, %s2939
                  %s2942 = smul.u32 %s2941, 256
                  %s2943 = smul.u32 %s2941, 256
                  %s2944 = scalar_lea.vmem %s2709, %s2942 [#allocation3]
                  %s2945 = scalar_lea.vmem %s2720, %s2943
                $region105: #{vae_forward.3} parent=99 // loop_footer
                  %s2869 = sadd.s32 %s2867, 1
                $region106: #{vae_forward.3} parent=99 // loop_footer_branch
                  %2866 = sbr.rel target = $region102
                $region107: #{vae_forward.3} parent=99 // loop_exit
                  _
                %s2946 = sshrl.u32 %s2864, 5
                %s2947 = sand.u32 %s2864, 31
                %s2948 = smul.u32 %s2946, 32
                %s2949 = smul.u32 8, %s2948
                %s2950 = scalar_lea.vmem %s2709, %s2949 [#allocation3]
                %s2951 = smul.u32 8, %s2948
                %s2952 = scalar_lea.vmem %s2720, %s2951
                // While loop
                $region108: #{vae_forward.3} parent=99 // loop_pre_header
                  _
                $region109: #{vae_forward.3} parent=99 // loop_header
                  %s2954 = sphi 0, %s2956
                  %p2955 = scmp.ge.s32.totalorder %s2954, %s2947
                  %s2959 = sphi 0, %s2966
                  %s2960 = sphi %s2950, %s2969
                  %s2961 = sphi %s2952, %s2970
                $region110: #{vae_forward.3} parent=99 // loop_header_branch
                  %2958 = sbr.rel (%p2955) target = $region114
                $region111: #{vae_forward.3} parent=99 // loop_body
                  %v2962 = vld [vmem:[%s2960] sm:$0xff]
                  %2963 = vst [vmem:[%s2961] sm:$0xff] %v2962
                  %s2964 = sadd.s32 1, %s2959
                  %p2965 = scmp.ge.s32.totalorder %s2964, %s2947
                  %s2966 = scalar_select %p2965, 0, %s2964
                  %s2967 = smul.u32 %s2966, 8
                  %s2968 = smul.u32 %s2966, 8
                  %s2969 = scalar_lea.vmem %s2950, %s2967 [#allocation3]
                  %s2970 = scalar_lea.vmem %s2952, %s2968
                $region112: #{vae_forward.3} parent=99 // loop_footer
                  %s2956 = sadd.s32 %s2954, 1
                $region113: #{vae_forward.3} parent=99 // loop_footer_branch
                  %2953 = sbr.rel target = $region109
                $region114: #{vae_forward.3} parent=99 // loop_exit
                  _
                %s2971 = sshll.u32 1, %s2859
                %s2972 = ssub.s32 %s2971, 1
                loop: start=0, step=1, limit=1
                $region115: #{vae_forward.3} parent=99 // loop_pre_header
                  _
                $region116: #{vae_forward.3} parent=99 // loop_header
                  %s2974 = sphi 0, %s2978
                  %p2975 = scmp.ge.s32.totalorder %s2974, 1
                  %s2979 = sphi %s2861, %s2861
                  %s2980 = sphi %s2863, %s2863
                $region117: #{vae_forward.3} parent=99 // loop_header_branch
                  %2977 = sbr.rel (%p2975) target = $region121
                $region118: #{vae_forward.3} parent=99 // loop_body
                  %v2981 = vld [vmem:[%s2979] sm:%s2972]
                  %2982 = vst [vmem:[%s2980] sm:%s2972] %v2981
                $region119: #{vae_forward.3} parent=99 // loop_footer
                  %s2978 = sadd.s32 1, %s2974
                $region120: #{vae_forward.3} parent=99 // loop_footer_branch
                  %2973 = sbr.rel target = $region116
                $region121: #{vae_forward.3} parent=99 // loop_exit
                  _
              $region100: #{vae_forward.3} parent=66 // pred_fallthru
                _
            $region67: #{vae_forward.3} parent=62 // pred_fallthru
              _
            // Predicated region
            $region68: #{vae_forward.3} parent=62 // pred_check
              %p2729 = pneg %p2725
            $region69: #{vae_forward.3} parent=62 // pred_check_branch
              %2731 = sbr.rel (%p2729) target = $region71
            $region70: #{vae_forward.3} parent=62 // pred_region
              %s2732 = sshll.u32 1, %s2721
              %s2733 = ssub.s32 %s2732, 1
              loop: start=0, step=1, limit=1
              $region72: #{vae_forward.3} parent=70 // loop_pre_header
                _
              $region73: #{vae_forward.3} parent=70 // loop_header
                %s2735 = sphi 0, %s2739
                %p2736 = scmp.ge.s32.totalorder %s2735, 1
                %s2740 = sphi %s2709, %s2709
                %s2741 = sphi %s2720, %s2720
              $region74: #{vae_forward.3} parent=70 // loop_header_branch
                %2738 = sbr.rel (%p2736) target = $region78
              $region75: #{vae_forward.3} parent=70 // loop_body
                %v2742 = vld [vmem:[%s2740] sm:%s2733]
                %2743 = vst [vmem:[%s2741] sm:%s2733] %v2742
              $region76: #{vae_forward.3} parent=70 // loop_footer
                %s2739 = sadd.s32 1, %s2735
              $region77: #{vae_forward.3} parent=70 // loop_footer_branch
                %2734 = sbr.rel target = $region73
              $region78: #{vae_forward.3} parent=70 // loop_exit
                _
            $region71: #{vae_forward.3} parent=62 // pred_fallthru
              _
          $region63: #{vae_forward.3} parent=58 // pred_fallthru
            _
          %2983 = vnop
        $region59: #{vae_forward.3} parent=50 // pred_fallthru
          _
      $region51: #{vae_forward.3} parent=5 // pred_fallthru
        _
      %p2984 = scmp.le.s32.totalorder 2, %s9
      // Predicated region
      $region122: #{vae_forward.3} parent=5 // pred_check
        %p2985 = pneg %p2984
      $region123: #{vae_forward.3} parent=5 // pred_check_branch
        %2987 = sbr.rel (%p2985) target = $region125
      $region124: #{vae_forward.3} parent=5 // pred_region
        %s2988 = ssub.s32 %s9, 2
        // Predicated region
        $region126: #{vae_forward.3} parent=124 // pred_check
          %p2989 = pneg %p111
        $region127: #{vae_forward.3} parent=124 // pred_check_branch
          %2991 = sbr.rel (%p2989) target = $region129
        $region128: #{vae_forward.3} parent=124 // pred_region
          %s2992 = sand.u32 %s96, 1
          %s2993 = sand.u32 %s96, 1
          %s2994 = smul.addr %s2993, 64
          %s2995 = scalar_lea.vmem [#allocation3], %s2994
        $region129: #{vae_forward.3} parent=124 // pred_fallthru
          _
      $region125: #{vae_forward.3} parent=5 // pred_fallthru
        _
    $region6: #{vae_forward.3} parent=1 // loop_footer
      %s13 = sadd.s32 1, %s9
    $region7: #{vae_forward.3} parent=1 // loop_footer_branch
      %8 = sbr.rel target = $region3
    $region8: #{vae_forward.3} parent=1 // loop_exit
      _

// kernel: vae_forward.2
$region0: #{vae_forward.2}
  #allocation0 [shape = 'u32[]', space=smem, size = 0x4, offset = 0x4, fixed_abs, tag = 'smem constant byte address 0x4 - core index']
  #allocation1 [shape = 'u32[72,128]{1,0:T(1,128)}', space=vmem, size = 0x9000, scoped, tag = 'internal scratch']
  %s0 = inlined_call_operand.vmem [shape: f32[8,3606], index: 0, kind: input, shape index: {}]
  %s1 = inlined_call_operand.hbm [shape: bf16[4096,512], index: 1, kind: input, shape index: {}]
  %s2 = inlined_call_operand.hbm [shape: f32[1,512], index: 2, kind: input, shape index: {}]
  %s3 = inlined_call_operand.vmem [shape: f32[512,32], index: 3, kind: input, shape index: {}]
  %s4 = inlined_call_operand.hbm [shape: f32[1,32], index: 4, kind: input, shape index: {}]
  %s5 = inlined_call_operand.hbm [shape: f32[32,512], index: 5, kind: input, shape index: {}]
  %s6 = inlined_call_operand.hbm [shape: f32[1,512], index: 6, kind: input, shape index: {}]
  %s7 = inlined_call_operand.vmem [shape: f32[8,512], index: 7, kind: output, shape index: {}]
  %s8 = sld [smem:[#allocation0]]
  $region89: #{vae_forward.2} parent=0
    _
  %s10 = ssub.s32 1, %s8
  %s11 = scalar_select 0, %s10, %s8
  $region1: #{vae_forward.2} parent=0
    #allocation2 [shape = 'u8[2097152]{0}', space=vmem, size = 0x200000, scoped, tag = 'input window, operand 1']
    #allocation3 [shape = 's32[2]{0}', space=sflag, size = 0x8, scoped, tag = 'scoped memory for vae_forward.2']
    #allocation4 [shape = 'u8[2048]{0}', space=vmem, size = 0x800, scoped, tag = 'input window, operand 2, single buffered']
    #allocation5 [shape = 's32[1]{0}', space=sflag, size = 0x4, scoped, tag = 'scoped memory for vae_forward.2']
    #allocation6 [shape = 'u8[512]{0}', space=vmem, size = 0x400, scoped, tag = 'input window, operand 4, single buffered']
    #allocation7 [shape = 'u8[65536]{0}', space=vmem, size = 0x10000, scoped, tag = 'input window, operand 5, single buffered']
    #allocation8 [shape = 's32[1]{0}', space=sflag, size = 0x4, scoped, tag = 'scoped memory for vae_forward.2']
    #allocation9 [shape = 'u8[2048]{0}', space=vmem, size = 0x800, scoped, tag = 'input window, operand 6, single buffered']
    %12 = vsyncpa [#allocation3], 0
    %s13 = scalar_lea.sflag [#allocation3], 1
    %14 = vsyncpa %s13, 0
    %15 = vsyncpa [#allocation5], 0
    %16 = vsyncpa [#allocation8], 0
    loop: start=0, step=1, limit=6
    $region2: #{vae_forward.2} parent=1 // loop_pre_header
      _
    $region3: #{vae_forward.2} parent=1 // loop_header
      %s18 = sphi 0, %s22
      %p19 = scmp.ge.s32.totalorder %s18, 6
      %s28 = sphi 0, %s30
      %s31 = sphi 0, %s28
      %s32 = sphi 0, %s31
      %s48 = sphi 0, %s32
      %s54 = sphi 0, %s56
      %s57 = sphi 0, %s54
      %s58 = sphi 0, %s57
      %s74 = sphi 0, %s58
      %s78 = sphi 0, %s78
      %s80 = sphi 0, %s78
      %s81 = sphi 0, %s80
      %s95 = sphi 0, %s81
      %s99 = sphi 0, %s99
      %s101 = sphi 0, %s99
      %s102 = sphi 0, %s101
      %s116 = sphi 0, %s102
      %s120 = sphi 0, %s120
      %s122 = sphi 0, %s120
      %s123 = sphi 0, %s122
      %s137 = sphi 0, %s123
      %s141 = sphi 0, %s141
      %s143 = sphi 0, %s141
      %s144 = sphi 0, %s143
      %s158 = sphi 0, %s144
      %s162 = sphi 0, %s162
      %s164 = sphi 0, %s162
      %s165 = sphi 0, %s164
      %s179 = sphi 0, %s165
      %s183 = sphi 0, %s183
      %s185 = sphi 0, %s183
      %s186 = sphi 0, %s185
      %s200 = sphi 0, %s186
    $region4: #{vae_forward.2} parent=1 // loop_header_branch
      %21 = sbr.rel (%p19) target = $region8
    $region5: #{vae_forward.2} parent=1 // loop_body
      %s23 = ssub.s32 %s18, 1
      %s24 = ssub.s32 %s18, 2
      %s25 = sadd.s32 %s18, 1
      %s26 = ssub.s32 %s18, %s25
      %p27 = scmp.eq.s32.totalorder %s26, 0
      %s29 = sadd.s32 %s28, 1
      %s30 = scalar_select %p27, %s28, %s29
      %p33 = pneg %p27
      %p34 = scmp.eq.s32.totalorder %s18, 3
      %p35 = por %p33, %p34
      %p36 = scmp.ne.s32.totalorder %s28, %s31
      %p37 = scmp.eq.s32.totalorder %s18, 0
      %p38 = por %p36, %p37
      %p39 = scmp.ne.s32.totalorder %s28, %s31
      %p40 = scmp.eq.s32.totalorder %s23, 3
      %p41 = por %p39, %p40
      %p42 = scmp.ne.s32.totalorder %s31, %s32
      %p43 = scmp.eq.s32.totalorder %s23, 0
      %p44 = por %p42, %p43
      %p45 = scmp.ne.s32.totalorder %s31, %s32
      %p46 = scmp.eq.s32.totalorder %s24, 3
      %p47 = por %p45, %p46
      %p49 = scmp.ne.s32.totalorder %s32, %s48
      %p50 = scmp.eq.s32.totalorder %s24, 0
      %p51 = por %p49, %p50
      %s52 = ssub.s32 %s18, %s25
      %p53 = scmp.eq.s32.totalorder %s52, 0
      %s55 = sadd.s32 %s54, 1
      %s56 = scalar_select %p53, %s54, %s55
      %p59 = pneg %p53
      %p60 = scmp.eq.s32.totalorder %s18, 3
      %p61 = por %p59, %p60
      %p62 = scmp.ne.s32.totalorder %s54, %s57
      %p63 = scmp.eq.s32.totalorder %s18, 0
      %p64 = por %p62, %p63
      %p65 = scmp.ne.s32.totalorder %s54, %s57
      %p66 = scmp.eq.s32.totalorder %s23, 3
      %p67 = por %p65, %p66
      %p68 = scmp.ne.s32.totalorder %s57, %s58
      %p69 = scmp.eq.s32.totalorder %s23, 0
      %p70 = por %p68, %p69
      %p71 = scmp.ne.s32.totalorder %s57, %s58
      %p72 = scmp.eq.s32.totalorder %s24, 3
      %p73 = por %p71, %p72
      %p75 = scmp.ne.s32.totalorder %s58, %s74
      %p76 = scmp.eq.s32.totalorder %s24, 0
      %p77 = por %p75, %p76
      %s79 = sadd.s32 %s78, 1
      %p82 = scmp.eq.s32.totalorder %s18, 3
      %p83 = scmp.ne.s32.totalorder %s78, %s80
      %p84 = scmp.eq.s32.totalorder %s18, 0
      %p85 = por %p83, %p84
      %p86 = scmp.ne.s32.totalorder %s78, %s80
      %p87 = scmp.eq.s32.totalorder %s23, 3
      %p88 = por %p86, %p87
      %p89 = scmp.ne.s32.totalorder %s80, %s81
      %p90 = scmp.eq.s32.totalorder %s23, 0
      %p91 = por %p89, %p90
      %p92 = scmp.ne.s32.totalorder %s80, %s81
      %p93 = scmp.eq.s32.totalorder %s24, 3
      %p94 = por %p92, %p93
      %p96 = scmp.ne.s32.totalorder %s81, %s95
      %p97 = scmp.eq.s32.totalorder %s24, 0
      %p98 = por %p96, %p97
      %s100 = sadd.s32 %s99, 1
      %p103 = scmp.eq.s32.totalorder %s18, 3
      %p104 = scmp.ne.s32.totalorder %s99, %s101
      %p105 = scmp.eq.s32.totalorder %s18, 0
      %p106 = por %p104, %p105
      %p107 = scmp.ne.s32.totalorder %s99, %s101
      %p108 = scmp.eq.s32.totalorder %s23, 3
      %p109 = por %p107, %p108
      %p110 = scmp.ne.s32.totalorder %s101, %s102
      %p111 = scmp.eq.s32.totalorder %s23, 0
      %p112 = por %p110, %p111
      %p113 = scmp.ne.s32.totalorder %s101, %s102
      %p114 = scmp.eq.s32.totalorder %s24, 3
      %p115 = por %p113, %p114
      %p117 = scmp.ne.s32.totalorder %s102, %s116
      %p118 = scmp.eq.s32.totalorder %s24, 0
      %p119 = por %p117, %p118
      %s121 = sadd.s32 %s120, 1
      %p124 = scmp.eq.s32.totalorder %s18, 3
      %p125 = scmp.ne.s32.totalorder %s120, %s122
      %p126 = scmp.eq.s32.totalorder %s18, 0
      %p127 = por %p125, %p126
      %p128 = scmp.ne.s32.totalorder %s120, %s122
      %p129 = scmp.eq.s32.totalorder %s23, 3
      %p130 = por %p128, %p129
      %p131 = scmp.ne.s32.totalorder %s122, %s123
      %p132 = scmp.eq.s32.totalorder %s23, 0
      %p133 = por %p131, %p132
      %p134 = scmp.ne.s32.totalorder %s122, %s123
      %p135 = scmp.eq.s32.totalorder %s24, 3
      %p136 = por %p134, %p135
      %p138 = scmp.ne.s32.totalorder %s123, %s137
      %p139 = scmp.eq.s32.totalorder %s24, 0
      %p140 = por %p138, %p139
      %s142 = sadd.s32 %s141, 1
      %p145 = scmp.eq.s32.totalorder %s18, 3
      %p146 = scmp.ne.s32.totalorder %s141, %s143
      %p147 = scmp.eq.s32.totalorder %s18, 0
      %p148 = por %p146, %p147
      %p149 = scmp.ne.s32.totalorder %s141, %s143
      %p150 = scmp.eq.s32.totalorder %s23, 3
      %p151 = por %p149, %p150
      %p152 = scmp.ne.s32.totalorder %s143, %s144
      %p153 = scmp.eq.s32.totalorder %s23, 0
      %p154 = por %p152, %p153
      %p155 = scmp.ne.s32.totalorder %s143, %s144
      %p156 = scmp.eq.s32.totalorder %s24, 3
      %p157 = por %p155, %p156
      %p159 = scmp.ne.s32.totalorder %s144, %s158
      %p160 = scmp.eq.s32.totalorder %s24, 0
      %p161 = por %p159, %p160
      %s163 = sadd.s32 %s162, 1
      %p166 = scmp.eq.s32.totalorder %s18, 3
      %p167 = scmp.ne.s32.totalorder %s162, %s164
      %p168 = scmp.eq.s32.totalorder %s18, 0
      %p169 = por %p167, %p168
      %p170 = scmp.ne.s32.totalorder %s162, %s164
      %p171 = scmp.eq.s32.totalorder %s23, 3
      %p172 = por %p170, %p171
      %p173 = scmp.ne.s32.totalorder %s164, %s165
      %p174 = scmp.eq.s32.totalorder %s23, 0
      %p175 = por %p173, %p174
      %p176 = scmp.ne.s32.totalorder %s164, %s165
      %p177 = scmp.eq.s32.totalorder %s24, 3
      %p178 = por %p176, %p177
      %p180 = scmp.ne.s32.totalorder %s165, %s179
      %p181 = scmp.eq.s32.totalorder %s24, 0
      %p182 = por %p180, %p181
      %s184 = sadd.s32 %s183, 1
      %p187 = scmp.eq.s32.totalorder %s18, 3
      %p188 = scmp.ne.s32.totalorder %s183, %s185
      %p189 = scmp.eq.s32.totalorder %s18, 0
      %p190 = por %p188, %p189
      %p191 = scmp.ne.s32.totalorder %s183, %s185
      %p192 = scmp.eq.s32.totalorder %s23, 3
      %p193 = por %p191, %p192
      %p194 = scmp.ne.s32.totalorder %s185, %s186
      %p195 = scmp.eq.s32.totalorder %s23, 0
      %p196 = por %p194, %p195
      %p197 = scmp.ne.s32.totalorder %s185, %s186
      %p198 = scmp.eq.s32.totalorder %s24, 3
      %p199 = por %p197, %p198
      %p201 = scmp.ne.s32.totalorder %s186, %s200
      %p202 = scmp.eq.s32.totalorder %s24, 0
      %p203 = por %p201, %p202
      %p204 = scmp.le.s32.totalorder 1, %s18
      %p205 = scmp.lt.s32.totalorder %s18, 5
      %p206 = pnand %p204, %p205
      %p207 = pneg %p206
      // Predicated region
      $region9: #{vae_forward.2} parent=5 // pred_check
        _
      $region10: #{vae_forward.2} parent=5 // pred_check_branch
        %209 = sbr.rel (%p206) target = $region12
      $region11: #{vae_forward.2} parent=5 // pred_region
        %s210 = ssub.s32 %s18, 1
        // Predicated region
        $region13: #{vae_forward.2} parent=11 // pred_check
          %p211 = pneg %p91
        $region14: #{vae_forward.2} parent=11 // pred_check_branch
          %213 = sbr.rel (%p211) target = $region16
        $region15: #{vae_forward.2} parent=11 // pred_region
          %215 = vsyncadd [#allocation5], 0
          %s217 = sshll.u32 %s2, 4
          %s218 = int_to_ptr.hbm [resolvable:$true] %s217
          %s219 = sshll.u32 [#allocation4], 4
          %s220 = int_to_ptr.vmem [resolvable:$true] %s219
          %222 = dma.hbm_to_vmem [thread:$0]  %s218, 64, %s220, [#allocation5]
        $region16: #{vae_forward.2} parent=11 // pred_fallthru
          _
        // Predicated region
        $region17: #{vae_forward.2} parent=11 // pred_check
          %p223 = pneg %p112
        $region18: #{vae_forward.2} parent=11 // pred_check_branch
          %225 = sbr.rel (%p223) target = $region20
        $region19: #{vae_forward.2} parent=11 // pred_region
          _
        $region20: #{vae_forward.2} parent=11 // pred_fallthru
          _
        // Predicated region
        $region21: #{vae_forward.2} parent=11 // pred_check
          %p226 = pneg %p133
        $region22: #{vae_forward.2} parent=11 // pred_check_branch
          %228 = sbr.rel (%p226) target = $region24
        $region23: #{vae_forward.2} parent=11 // pred_region
          %230 = vsyncadd [#allocation5], 0
          %s232 = sshll.u32 %s4, 4
          %s233 = int_to_ptr.hbm [resolvable:$true] %s232
          %s234 = sshll.u32 [#allocation6], 4
          %s235 = int_to_ptr.vmem [resolvable:$true] %s234
          %237 = dma.hbm_to_vmem [thread:$0]  %s233, 16, %s235, [#allocation5]
        $region24: #{vae_forward.2} parent=11 // pred_fallthru
          _
        // Predicated region
        $region25: #{vae_forward.2} parent=11 // pred_check
          %p238 = pneg %p154
        $region26: #{vae_forward.2} parent=11 // pred_check_branch
          %240 = sbr.rel (%p238) target = $region28
        $region27: #{vae_forward.2} parent=11 // pred_region
          %242 = vsyncadd [#allocation8], 0
          %s243 = sshll.u32 %s5, 4
          %s244 = int_to_ptr.hbm [resolvable:$true] %s243
          %s245 = sshll.u32 [#allocation7], 4
          %s246 = int_to_ptr.vmem [resolvable:$true] %s245
          %251 = dma.hbm_to_vmem [thread:$0]  %s244, 2048, %s246, [#allocation8], 512, 512, 32
        $region28: #{vae_forward.2} parent=11 // pred_fallthru
          _
        // Predicated region
        $region29: #{vae_forward.2} parent=11 // pred_check
          %p252 = pneg %p175
        $region30: #{vae_forward.2} parent=11 // pred_check_branch
          %254 = sbr.rel (%p252) target = $region32
        $region31: #{vae_forward.2} parent=11 // pred_region
          %256 = vsyncadd [#allocation8], 0
          %s258 = sshll.u32 %s6, 4
          %s259 = int_to_ptr.hbm [resolvable:$true] %s258
          %s260 = sshll.u32 [#allocation9], 4
          %s261 = int_to_ptr.vmem [resolvable:$true] %s260
          %263 = dma.hbm_to_vmem [thread:$0]  %s259, 64, %s261, [#allocation8]
        $region32: #{vae_forward.2} parent=11 // pred_fallthru
          _
      $region12: #{vae_forward.2} parent=5 // pred_fallthru
        _
      %p264 = scmp.lt.s32.totalorder %s18, 4
      // Predicated region
      $region33: #{vae_forward.2} parent=5 // pred_check
        %p265 = pneg %p264
      $region34: #{vae_forward.2} parent=5 // pred_check_branch
        %267 = sbr.rel (%p265) target = $region36
      $region35: #{vae_forward.2} parent=5 // pred_region
        // Predicated region
        $region37: #{vae_forward.2} parent=35 // pred_check
          %p268 = pneg %p38
        $region38: #{vae_forward.2} parent=35 // pred_check_branch
          %270 = sbr.rel (%p268) target = $region40
        $region39: #{vae_forward.2} parent=35 // pred_region
          %s271 = smul.u32 8, %s18
          %s272 = ssub.s32 29, %s271
          %p273 = scmp.lt.s32.totalorder %s272, 8
          %s274 = scalar_select %p273, %s272, 8
          %s275 = smul.u32 8, %s274
          %p276 = scmp.lt.s32.totalorder %s271, 28
          %s277 = scalar_select %p276, %s271, 28
          %s278 = smul.addr %s277, 8
          %s279 = scalar_lea.vmem %s0, %s278
          %s280 = smul.u32 8, %s18
          %s281 = ssub.s32 29, %s280
          %p282 = scmp.lt.s32.totalorder %s281, 8
          %s283 = scalar_select %p282, %s281, 8
          %s284 = smul.u32 8, %s283
        $region40: #{vae_forward.2} parent=35 // pred_fallthru
          _
        // Predicated region
        $region41: #{vae_forward.2} parent=35 // pred_check
          %p285 = pneg %p64
        $region42: #{vae_forward.2} parent=35 // pred_check_branch
          %287 = sbr.rel (%p285) target = $region44
        $region43: #{vae_forward.2} parent=35 // pred_region
          %s288 = sand.u32 %s54, 1
          %s289 = scalar_lea.sflag [#allocation3], %s288
          %s290 = sand.u32 %s54, 1
          %s291 = smul.addr %s290, 2048
          %s292 = scalar_lea.vmem [#allocation2], %s291
          %s293 = smul.u32 128, %s18
          %295 = vsyncadd %s289, 0
          %s296 = smul.addr %s293, 4
          %s297 = smul.addr %s296, 4
          %s298 = scalar_lea.hbm %s1, %s297
          %s299 = sshll.u32 %s298, 4
          %s300 = int_to_ptr.hbm [resolvable:$true] %s299
          %s301 = sshll.u32 %s292, 4
          %s302 = int_to_ptr.vmem [resolvable:$true] %s301
          %307 = dma.hbm_to_vmem [thread:$0]  %s300, 32768, %s302, %s289, 256, 256, 16
        $region44: #{vae_forward.2} parent=35 // pred_fallthru
          _
      $region36: #{vae_forward.2} parent=5 // pred_fallthru
        _
      %p308 = scmp.le.s32.totalorder 1, %s18
      %p309 = scmp.lt.s32.totalorder %s18, 5
      %p310 = pnand %p308, %p309
      %p311 = pneg %p310
      // Predicated region
      $region45: #{vae_forward.2} parent=5 // pred_check
        _
      $region46: #{vae_forward.2} parent=5 // pred_check_branch
        %313 = sbr.rel (%p310) target = $region48
      $region47: #{vae_forward.2} parent=5 // pred_region
        %s314 = ssub.s32 %s18, 1
        %s315 = sand.u32 %s57, 1
        %s316 = scalar_lea.sflag [#allocation3], %s315
        %s317 = sand.u32 %s57, 1
        %s318 = smul.addr %s317, 2048
        %s319 = scalar_lea.vmem [#allocation2], %s318
        // Predicated region
        $region49: #{vae_forward.2} parent=47 // pred_check
          %p320 = pneg %p70
        $region50: #{vae_forward.2} parent=47 // pred_check_branch
          %322 = sbr.rel (%p320) target = $region52
        $region51: #{vae_forward.2} parent=47 // pred_region
          %324 = dma.done %s316, 32768
        $region52: #{vae_forward.2} parent=47 // pred_fallthru
          _
        // Predicated region
        $region53: #{vae_forward.2} parent=47 // pred_check
          %p325 = pneg %p91
        $region54: #{vae_forward.2} parent=47 // pred_check_branch
          %327 = sbr.rel (%p325) target = $region56
        $region55: #{vae_forward.2} parent=47 // pred_region
          %329 = dma.done [#allocation5], 64
        $region56: #{vae_forward.2} parent=47 // pred_fallthru
          _
        // Predicated region
        $region57: #{vae_forward.2} parent=47 // pred_check
          %p330 = pneg %p133
        $region58: #{vae_forward.2} parent=47 // pred_check_branch
          %332 = sbr.rel (%p330) target = $region60
        $region59: #{vae_forward.2} parent=47 // pred_region
          %334 = dma.done [#allocation5], 16
        $region60: #{vae_forward.2} parent=47 // pred_fallthru
          _
        // Predicated region
        $region61: #{vae_forward.2} parent=47 // pred_check
          %p335 = pneg %p154
        $region62: #{vae_forward.2} parent=47 // pred_check_branch
          %337 = sbr.rel (%p335) target = $region64
        $region63: #{vae_forward.2} parent=47 // pred_region
          %339 = dma.done [#allocation8], 2048
        $region64: #{vae_forward.2} parent=47 // pred_fallthru
          _
        // Predicated region
        $region65: #{vae_forward.2} parent=47 // pred_check
          %p340 = pneg %p175
        $region66: #{vae_forward.2} parent=47 // pred_check_branch
          %342 = sbr.rel (%p340) target = $region68
        $region67: #{vae_forward.2} parent=47 // pred_region
          %344 = dma.done [#allocation8], 64
        $region68: #{vae_forward.2} parent=47 // pred_fallthru
          _
        %s345 = smul.u32 8, %s23
        %s346 = ssub.s32 29, %s345
        %p347 = scmp.lt.s32.totalorder %s346, 8
        %s348 = scalar_select %p347, %s346, 8
        %s349 = smul.u32 8, %s348
        %p350 = scmp.lt.s32.totalorder %s345, 28
        %s351 = scalar_select %p350, %s345, 28
        %s352 = smul.addr %s351, 8
        %s353 = scalar_lea.vmem %s0, %s352
        %p354 = pneg %p44
        %p355 = pneg %p41
        %s356 = sand.u32 %s57, 1
        %s357 = scalar_lea.sflag [#allocation3], %s356
        %s358 = sand.u32 %s57, 1
        %s359 = smul.addr %s358, 2048
        %s360 = scalar_lea.vmem [#allocation2], %s359
        %p361 = pneg %p70
        %p362 = pneg %p67
        %p363 = pneg %p91
        %p364 = pneg %p88
        %p365 = pneg %p112
        %p366 = pneg %p109
        %p367 = pneg %p133
        %p368 = pneg %p130
        %p369 = pneg %p154
        %p370 = pneg %p151
        %p371 = pneg %p175
        %p372 = pneg %p172
        %p373 = pneg %p196
        %p374 = pneg %p193
        %s375 = smul.u32 8, %s23
        %s376 = ssub.s32 29, %s375
        %p377 = scmp.lt.s32.totalorder %s376, 8
        %s378 = scalar_select %p377, %s376, 8
        %s379 = smul.u32 8, %s378
        %p380 = scmp.lt.s32.totalorder %s375, 28
        %s381 = scalar_select %p380, %s375, 28
        %s382 = smul.addr %s381, 8
        %s383 = scalar_lea.vmem %s0, %s382
        %s384 = smul.u32 8, %s23
        %s385 = ssub.s32 29, %s384
        %p386 = scmp.lt.s32.totalorder %s385, 8
        %s387 = scalar_select %p386, %s385, 8
        %s388 = smul.u32 8, %s387
        %s389 = smul.u32 128, %s23
        %p390 = scmp.eq.s32.totalorder %s23, 0
        // Predicated region
        $region69: #{vae_forward.2} parent=47 // pred_check
          %p391 = pneg %p390
        $region70: #{vae_forward.2} parent=47 // pred_check_branch
          %393 = sbr.rel (%p391) target = $region72
        $region71: #{vae_forward.2} parent=47 // pred_region
          %394 = vst [vmem:[%s7] sm:$0xff] 0.0
          %395 = vst [vmem:[%s7 + $0x8] sm:$0xff] 0.0
          %396 = vst [vmem:[%s7 + $0x10] sm:$0xff] 0.0
          %397 = vst [vmem:[%s7 + $0x18] sm:$0xff] 0.0
        $region72: #{vae_forward.2} parent=47 // pred_fallthru
          _
        %s398 = smul.u32 %s23, 1024
        %v399 = vlaneseq
        %v400 = vand.u32 %v399, 127
        %v401 = vadd.s32 %v400, 128
        %v402 = vadd.s32 %v400, 256
        %v403 = vadd.s32 %v400, 384
        %v404 = vadd.s32 %v400, 512
        %v405 = vadd.s32 %v400, 640
        %v406 = vadd.s32 %v400, 768
        %v407 = vadd.s32 %v400, 896
        %v408 = vstv %s398
        %v409 = vadd.s32 %v408, %v400
        %v410 = vadd.s32 %v408, %v401
        %v411 = vadd.s32 %v408, %v402
        %v412 = vadd.s32 %v408, %v403
        %v413 = vadd.s32 %v408, %v404
        %v414 = vadd.s32 %v408, %v405
        %v415 = vadd.s32 %v408, %v406
        %v416 = vadd.s32 %v408, %v407
        %vm417 = vcmp.lt.s32.totalorder %v409, 3606
        %vm418 = vcmp.lt.s32.totalorder %v410, 3606
        %vm419 = vcmp.lt.s32.totalorder %v411, 3606
        %vm420 = vcmp.lt.s32.totalorder %v412, 3606
        %vm421 = vcmp.lt.s32.totalorder %v413, 3606
        %vm422 = vcmp.lt.s32.totalorder %v414, 3606
        %vm423 = vcmp.lt.s32.totalorder %v415, 3606
        %vm424 = vcmp.lt.s32.totalorder %v416, 3606
        %v425 = vld [vmem:[%s383] sm:$0xff]
        %v426 = vld [vmem:[%s383 + $0x8] sm:$0xff]
        %v427 = vld [vmem:[%s383 + $0x10] sm:$0xff]
        %v428 = vld [vmem:[%s383 + $0x18] sm:$0xff]
        %v429 = vld [vmem:[%s383 + $0x20] sm:$0xff]
        %v430 = vld [vmem:[%s383 + $0x28] sm:$0xff]
        %v431 = vld [vmem:[%s383 + $0x30] sm:$0xff]
        %v432 = vld [vmem:[%s383 + $0x38] sm:$0xff]
        %v433 = vsel %vm417, 1, 0
        %v434 = vsel %vm418, 1, 0
        %v435 = vsel %vm419, 1, 0
        %v436 = vsel %vm420, 1, 0
        %v437 = vsel %vm421, 1, 0
        %v438 = vsel %vm422, 1, 0
        %v439 = vsel %vm423, 1, 0
        %v440 = vsel %vm424, 1, 0
        %vm441 = vcmp.eq.s32.totalorder %v433, 1
        %vm442 = vcmp.eq.s32.totalorder %v434, 1
        %vm443 = vcmp.eq.s32.totalorder %v435, 1
        %vm444 = vcmp.eq.s32.totalorder %v436, 1
        %vm445 = vcmp.eq.s32.totalorder %v437, 1
        %vm446 = vcmp.eq.s32.totalorder %v438, 1
        %vm447 = vcmp.eq.s32.totalorder %v439, 1
        %vm448 = vcmp.eq.s32.totalorder %v440, 1
        %v449 = vsel %vm441, %v425, 0.0
        %v450 = vsel %vm442, %v426, 0.0
        %v451 = vsel %vm443, %v427, 0.0
        %v452 = vsel %vm444, %v428, 0.0
        %v453 = vsel %vm445, %v429, 0.0
        %v454 = vsel %vm446, %v430, 0.0
        %v455 = vsel %vm447, %v431, 0.0
        %v456 = vsel %vm448, %v432, 0.0
        %v457 = vpack.c.bf16 %v449, %v449
        %v458 = vpack.c.bf16 %v450, %v450
        %v459 = vpack.c.bf16 %v451, %v451
        %v460 = vpack.c.bf16 %v452, %v452
        %v461 = vpack.c.bf16 %v453, %v453
        %v462 = vpack.c.bf16 %v454, %v454
        %v463 = vpack.c.bf16 %v455, %v455
        %v464 = vpack.c.bf16 %v456, %v456
        %v465 = vld [vmem:[%s7] sm:$0xff]
        %v466 = vld [vmem:[%s7 + $0x8] sm:$0xff]
        %v467 = vld [vmem:[%s7 + $0x10] sm:$0xff]
        %v468 = vld [vmem:[%s7 + $0x18] sm:$0xff]
        %v469 = vld [vmem:[%s319] sm:$0xff]
        %v470 = vld [vmem:[%s319 + $0x8] sm:$0xff]
        %v471 = vld [vmem:[%s319 + $0x10] sm:$0xff]
        %v472 = vld [vmem:[%s319 + $0x18] sm:$0xff]
        %v473 = vld [vmem:[%s319 + $0x20] sm:$0xff]
        %v474 = vld [vmem:[%s319 + $0x28] sm:$0xff]
        %v475 = vld [vmem:[%s319 + $0x30] sm:$0xff]
        %v476 = vld [vmem:[%s319 + $0x38] sm:$0xff]
        %v477 = vld [vmem:[%s319 + $0x40] sm:$0xff]
        %v478 = vld [vmem:[%s319 + $0x48] sm:$0xff]
        %v479 = vld [vmem:[%s319 + $0x50] sm:$0xff]
        %v480 = vld [vmem:[%s319 + $0x58] sm:$0xff]
        %v481 = vld [vmem:[%s319 + $0x60] sm:$0xff]
        %v482 = vld [vmem:[%s319 + $0x68] sm:$0xff]
        %v483 = vld [vmem:[%s319 + $0x70] sm:$0xff]
        %v484 = vld [vmem:[%s319 + $0x78] sm:$0xff]
        %v485 = vld [vmem:[%s319 + $0x80] sm:$0xff]
        %v486 = vld [vmem:[%s319 + $0x88] sm:$0xff]
        %v487 = vld [vmem:[%s319 + $0x90] sm:$0xff]
        %v488 = vld [vmem:[%s319 + $0x98] sm:$0xff]
        %v489 = vld [vmem:[%s319 + $0xa0] sm:$0xff]
        %v490 = vld [vmem:[%s319 + $0xa8] sm:$0xff]
        %v491 = vld [vmem:[%s319 + $0xb0] sm:$0xff]
        %v492 = vld [vmem:[%s319 + $0xb8] sm:$0xff]
        %v493 = vld [vmem:[%s319 + $0xc0] sm:$0xff]
        %v494 = vld [vmem:[%s319 + $0xc8] sm:$0xff]
        %v495 = vld [vmem:[%s319 + $0xd0] sm:$0xff]
        %v496 = vld [vmem:[%s319 + $0xd8] sm:$0xff]
        %v497 = vld [vmem:[%s319 + $0xe0] sm:$0xff]
        %v498 = vld [vmem:[%s319 + $0xe8] sm:$0xff]
        %v499 = vld [vmem:[%s319 + $0xf0] sm:$0xff]
        %v500 = vld [vmem:[%s319 + $0xf8] sm:$0xff]
        %v501 = vld [vmem:[%s319 + $0x100] sm:$0xff]
        %v502 = vld [vmem:[%s319 + $0x108] sm:$0xff]
        %v503 = vld [vmem:[%s319 + $0x110] sm:$0xff]
        %v504 = vld [vmem:[%s319 + $0x118] sm:$0xff]
        %v505 = vld [vmem:[%s319 + $0x120] sm:$0xff]
        %v506 = vld [vmem:[%s319 + $0x128] sm:$0xff]
        %v507 = vld [vmem:[%s319 + $0x130] sm:$0xff]
        %v508 = vld [vmem:[%s319 + $0x138] sm:$0xff]
        %v509 = vld [vmem:[%s319 + $0x140] sm:$0xff]
        %v510 = vld [vmem:[%s319 + $0x148] sm:$0xff]
        %v511 = vld [vmem:[%s319 + $0x150] sm:$0xff]
        %v512 = vld [vmem:[%s319 + $0x158] sm:$0xff]
        %v513 = vld [vmem:[%s319 + $0x160] sm:$0xff]
        %v514 = vld [vmem:[%s319 + $0x168] sm:$0xff]
        %v515 = vld [vmem:[%s319 + $0x170] sm:$0xff]
        %v516 = vld [vmem:[%s319 + $0x178] sm:$0xff]
        %v517 = vld [vmem:[%s319 + $0x180] sm:$0xff]
        %v518 = vld [vmem:[%s319 + $0x188] sm:$0xff]
        %v519 = vld [vmem:[%s319 + $0x190] sm:$0xff]
        %v520 = vld [vmem:[%s319 + $0x198] sm:$0xff]
        %v521 = vld [vmem:[%s319 + $0x1a0] sm:$0xff]
        %v522 = vld [vmem:[%s319 + $0x1a8] sm:$0xff]
        %v523 = vld [vmem:[%s319 + $0x1b0] sm:$0xff]
        %v524 = vld [vmem:[%s319 + $0x1b8] sm:$0xff]
        %v525 = vld [vmem:[%s319 + $0x1c0] sm:$0xff]
        %v526 = vld [vmem:[%s319 + $0x1c8] sm:$0xff]
        %v527 = vld [vmem:[%s319 + $0x1d0] sm:$0xff]
        %v528 = vld [vmem:[%s319 + $0x1d8] sm:$0xff]
        %v529 = vld [vmem:[%s319 + $0x1e0] sm:$0xff]
        %v530 = vld [vmem:[%s319 + $0x1e8] sm:$0xff]
        %v531 = vld [vmem:[%s319 + $0x1f0] sm:$0xff]
        %v532 = vld [vmem:[%s319 + $0x1f8] sm:$0xff]
        %v533 = vld [vmem:[%s319 + $0x200] sm:$0xff]
        %v534 = vld [vmem:[%s319 + $0x208] sm:$0xff]
        %v535 = vld [vmem:[%s319 + $0x210] sm:$0xff]
        %v536 = vld [vmem:[%s319 + $0x218] sm:$0xff]
        %v537 = vld [vmem:[%s319 + $0x220] sm:$0xff]
        %v538 = vld [vmem:[%s319 + $0x228] sm:$0xff]
        %v539 = vld [vmem:[%s319 + $0x230] sm:$0xff]
        %v540 = vld [vmem:[%s319 + $0x238] sm:$0xff]
        %v541 = vld [vmem:[%s319 + $0x240] sm:$0xff]
        %v542 = vld [vmem:[%s319 + $0x248] sm:$0xff]
        %v543 = vld [vmem:[%s319 + $0x250] sm:$0xff]
        %v544 = vld [vmem:[%s319 + $0x258] sm:$0xff]
        %v545 = vld [vmem:[%s319 + $0x260] sm:$0xff]
        %v546 = vld [vmem:[%s319 + $0x268] sm:$0xff]
        %v547 = vld [vmem:[%s319 + $0x270] sm:$0xff]
        %v548 = vld [vmem:[%s319 + $0x278] sm:$0xff]
        %v549 = vld [vmem:[%s319 + $0x280] sm:$0xff]
        %v550 = vld [vmem:[%s319 + $0x288] sm:$0xff]
        %v551 = vld [vmem:[%s319 + $0x290] sm:$0xff]
        %v552 = vld [vmem:[%s319 + $0x298] sm:$0xff]
        %v553 = vld [vmem:[%s319 + $0x2a0] sm:$0xff]
        %v554 = vld [vmem:[%s319 + $0x2a8] sm:$0xff]
        %v555 = vld [vmem:[%s319 + $0x2b0] sm:$0xff]
        %v556 = vld [vmem:[%s319 + $0x2b8] sm:$0xff]
        %v557 = vld [vmem:[%s319 + $0x2c0] sm:$0xff]
        %v558 = vld [vmem:[%s319 + $0x2c8] sm:$0xff]
        %v559 = vld [vmem:[%s319 + $0x2d0] sm:$0xff]
        %v560 = vld [vmem:[%s319 + $0x2d8] sm:$0xff]
        %v561 = vld [vmem:[%s319 + $0x2e0] sm:$0xff]
        %v562 = vld [vmem:[%s319 + $0x2e8] sm:$0xff]
        %v563 = vld [vmem:[%s319 + $0x2f0] sm:$0xff]
        %v564 = vld [vmem:[%s319 + $0x2f8] sm:$0xff]
        %v565 = vld [vmem:[%s319 + $0x300] sm:$0xff]
        %v566 = vld [vmem:[%s319 + $0x308] sm:$0xff]
        %v567 = vld [vmem:[%s319 + $0x310] sm:$0xff]
        %v568 = vld [vmem:[%s319 + $0x318] sm:$0xff]
        %v569 = vld [vmem:[%s319 + $0x320] sm:$0xff]
        %v570 = vld [vmem:[%s319 + $0x328] sm:$0xff]
        %v571 = vld [vmem:[%s319 + $0x330] sm:$0xff]
        %v572 = vld [vmem:[%s319 + $0x338] sm:$0xff]
        %v573 = vld [vmem:[%s319 + $0x340] sm:$0xff]
        %v574 = vld [vmem:[%s319 + $0x348] sm:$0xff]
        %v575 = vld [vmem:[%s319 + $0x350] sm:$0xff]
        %v576 = vld [vmem:[%s319 + $0x358] sm:$0xff]
        %v577 = vld [vmem:[%s319 + $0x360] sm:$0xff]
        %v578 = vld [vmem:[%s319 + $0x368] sm:$0xff]
        %v579 = vld [vmem:[%s319 + $0x370] sm:$0xff]
        %v580 = vld [vmem:[%s319 + $0x378] sm:$0xff]
        %v581 = vld [vmem:[%s319 + $0x380] sm:$0xff]
        %v582 = vld [vmem:[%s319 + $0x388] sm:$0xff]
        %v583 = vld [vmem:[%s319 + $0x390] sm:$0xff]
        %v584 = vld [vmem:[%s319 + $0x398] sm:$0xff]
        %v585 = vld [vmem:[%s319 + $0x3a0] sm:$0xff]
        %v586 = vld [vmem:[%s319 + $0x3a8] sm:$0xff]
        %v587 = vld [vmem:[%s319 + $0x3b0] sm:$0xff]
        %v588 = vld [vmem:[%s319 + $0x3b8] sm:$0xff]
        %v589 = vld [vmem:[%s319 + $0x3c0] sm:$0xff]
        %v590 = vld [vmem:[%s319 + $0x3c8] sm:$0xff]
        %v591 = vld [vmem:[%s319 + $0x3d0] sm:$0xff]
        %v592 = vld [vmem:[%s319 + $0x3d8] sm:$0xff]
        %v593 = vld [vmem:[%s319 + $0x3e0] sm:$0xff]
        %v594 = vld [vmem:[%s319 + $0x3e8] sm:$0xff]
        %v595 = vld [vmem:[%s319 + $0x3f0] sm:$0xff]
        %v596 = vld [vmem:[%s319 + $0x3f8] sm:$0xff]
        %v597 = vld [vmem:[%s319 + $0x400] sm:$0xff]
        %v598 = vld [vmem:[%s319 + $0x408] sm:$0xff]
        %v599 = vld [vmem:[%s319 + $0x410] sm:$0xff]
        %v600 = vld [vmem:[%s319 + $0x418] sm:$0xff]
        %v601 = vld [vmem:[%s319 + $0x420] sm:$0xff]
        %v602 = vld [vmem:[%s319 + $0x428] sm:$0xff]
        %v603 = vld [vmem:[%s319 + $0x430] sm:$0xff]
        %v604 = vld [vmem:[%s319 + $0x438] sm:$0xff]
        %v605 = vld [vmem:[%s319 + $0x440] sm:$0xff]
        %v606 = vld [vmem:[%s319 + $0x448] sm:$0xff]
        %v607 = vld [vmem:[%s319 + $0x450] sm:$0xff]
        %v608 = vld [vmem:[%s319 + $0x458] sm:$0xff]
        %v609 = vld [vmem:[%s319 + $0x460] sm:$0xff]
        %v610 = vld [vmem:[%s319 + $0x468] sm:$0xff]
        %v611 = vld [vmem:[%s319 + $0x470] sm:$0xff]
        %v612 = vld [vmem:[%s319 + $0x478] sm:$0xff]
        %v613 = vld [vmem:[%s319 + $0x480] sm:$0xff]
        %v614 = vld [vmem:[%s319 + $0x488] sm:$0xff]
        %v615 = vld [vmem:[%s319 + $0x490] sm:$0xff]
        %v616 = vld [vmem:[%s319 + $0x498] sm:$0xff]
        %v617 = vld [vmem:[%s319 + $0x4a0] sm:$0xff]
        %v618 = vld [vmem:[%s319 + $0x4a8] sm:$0xff]
        %v619 = vld [vmem:[%s319 + $0x4b0] sm:$0xff]
        %v620 = vld [vmem:[%s319 + $0x4b8] sm:$0xff]
        %v621 = vld [vmem:[%s319 + $0x4c0] sm:$0xff]
        %v622 = vld [vmem:[%s319 + $0x4c8] sm:$0xff]
        %v623 = vld [vmem:[%s319 + $0x4d0] sm:$0xff]
        %v624 = vld [vmem:[%s319 + $0x4d8] sm:$0xff]
        %v625 = vld [vmem:[%s319 + $0x4e0] sm:$0xff]
        %v626 = vld [vmem:[%s319 + $0x4e8] sm:$0xff]
        %v627 = vld [vmem:[%s319 + $0x4f0] sm:$0xff]
        %v628 = vld [vmem:[%s319 + $0x4f8] sm:$0xff]
        %v629 = vld [vmem:[%s319 + $0x500] sm:$0xff]
        %v630 = vld [vmem:[%s319 + $0x508] sm:$0xff]
        %v631 = vld [vmem:[%s319 + $0x510] sm:$0xff]
        %v632 = vld [vmem:[%s319 + $0x518] sm:$0xff]
        %v633 = vld [vmem:[%s319 + $0x520] sm:$0xff]
        %v634 = vld [vmem:[%s319 + $0x528] sm:$0xff]
        %v635 = vld [vmem:[%s319 + $0x530] sm:$0xff]
        %v636 = vld [vmem:[%s319 + $0x538] sm:$0xff]
        %v637 = vld [vmem:[%s319 + $0x540] sm:$0xff]
        %v638 = vld [vmem:[%s319 + $0x548] sm:$0xff]
        %v639 = vld [vmem:[%s319 + $0x550] sm:$0xff]
        %v640 = vld [vmem:[%s319 + $0x558] sm:$0xff]
        %v641 = vld [vmem:[%s319 + $0x560] sm:$0xff]
        %v642 = vld [vmem:[%s319 + $0x568] sm:$0xff]
        %v643 = vld [vmem:[%s319 + $0x570] sm:$0xff]
        %v644 = vld [vmem:[%s319 + $0x578] sm:$0xff]
        %v645 = vld [vmem:[%s319 + $0x580] sm:$0xff]
        %v646 = vld [vmem:[%s319 + $0x588] sm:$0xff]
        %v647 = vld [vmem:[%s319 + $0x590] sm:$0xff]
        %v648 = vld [vmem:[%s319 + $0x598] sm:$0xff]
        %v649 = vld [vmem:[%s319 + $0x5a0] sm:$0xff]
        %v650 = vld [vmem:[%s319 + $0x5a8] sm:$0xff]
        %v651 = vld [vmem:[%s319 + $0x5b0] sm:$0xff]
        %v652 = vld [vmem:[%s319 + $0x5b8] sm:$0xff]
        %v653 = vld [vmem:[%s319 + $0x5c0] sm:$0xff]
        %v654 = vld [vmem:[%s319 + $0x5c8] sm:$0xff]
        %v655 = vld [vmem:[%s319 + $0x5d0] sm:$0xff]
        %v656 = vld [vmem:[%s319 + $0x5d8] sm:$0xff]
        %v657 = vld [vmem:[%s319 + $0x5e0] sm:$0xff]
        %v658 = vld [vmem:[%s319 + $0x5e8] sm:$0xff]
        %v659 = vld [vmem:[%s319 + $0x5f0] sm:$0xff]
        %v660 = vld [vmem:[%s319 + $0x5f8] sm:$0xff]
        %v661 = vld [vmem:[%s319 + $0x600] sm:$0xff]
        %v662 = vld [vmem:[%s319 + $0x608] sm:$0xff]
        %v663 = vld [vmem:[%s319 + $0x610] sm:$0xff]
        %v664 = vld [vmem:[%s319 + $0x618] sm:$0xff]
        %v665 = vld [vmem:[%s319 + $0x620] sm:$0xff]
        %v666 = vld [vmem:[%s319 + $0x628] sm:$0xff]
        %v667 = vld [vmem:[%s319 + $0x630] sm:$0xff]
        %v668 = vld [vmem:[%s319 + $0x638] sm:$0xff]
        %v669 = vld [vmem:[%s319 + $0x640] sm:$0xff]
        %v670 = vld [vmem:[%s319 + $0x648] sm:$0xff]
        %v671 = vld [vmem:[%s319 + $0x650] sm:$0xff]
        %v672 = vld [vmem:[%s319 + $0x658] sm:$0xff]
        %v673 = vld [vmem:[%s319 + $0x660] sm:$0xff]
        %v674 = vld [vmem:[%s319 + $0x668] sm:$0xff]
        %v675 = vld [vmem:[%s319 + $0x670] sm:$0xff]
        %v676 = vld [vmem:[%s319 + $0x678] sm:$0xff]
        %v677 = vld [vmem:[%s319 + $0x680] sm:$0xff]
        %v678 = vld [vmem:[%s319 + $0x688] sm:$0xff]
        %v679 = vld [vmem:[%s319 + $0x690] sm:$0xff]
        %v680 = vld [vmem:[%s319 + $0x698] sm:$0xff]
        %v681 = vld [vmem:[%s319 + $0x6a0] sm:$0xff]
        %v682 = vld [vmem:[%s319 + $0x6a8] sm:$0xff]
        %v683 = vld [vmem:[%s319 + $0x6b0] sm:$0xff]
        %v684 = vld [vmem:[%s319 + $0x6b8] sm:$0xff]
        %v685 = vld [vmem:[%s319 + $0x6c0] sm:$0xff]
        %v686 = vld [vmem:[%s319 + $0x6c8] sm:$0xff]
        %v687 = vld [vmem:[%s319 + $0x6d0] sm:$0xff]
        %v688 = vld [vmem:[%s319 + $0x6d8] sm:$0xff]
        %v689 = vld [vmem:[%s319 + $0x6e0] sm:$0xff]
        %v690 = vld [vmem:[%s319 + $0x6e8] sm:$0xff]
        %v691 = vld [vmem:[%s319 + $0x6f0] sm:$0xff]
        %v692 = vld [vmem:[%s319 + $0x6f8] sm:$0xff]
        %v693 = vld [vmem:[%s319 + $0x700] sm:$0xff]
        %v694 = vld [vmem:[%s319 + $0x708] sm:$0xff]
        %v695 = vld [vmem:[%s319 + $0x710] sm:$0xff]
        %v696 = vld [vmem:[%s319 + $0x718] sm:$0xff]
        %v697 = vld [vmem:[%s319 + $0x720] sm:$0xff]
        %v698 = vld [vmem:[%s319 + $0x728] sm:$0xff]
        %v699 = vld [vmem:[%s319 + $0x730] sm:$0xff]
        %v700 = vld [vmem:[%s319 + $0x738] sm:$0xff]
        %v701 = vld [vmem:[%s319 + $0x740] sm:$0xff]
        %v702 = vld [vmem:[%s319 + $0x748] sm:$0xff]
        %v703 = vld [vmem:[%s319 + $0x750] sm:$0xff]
        %v704 = vld [vmem:[%s319 + $0x758] sm:$0xff]
        %v705 = vld [vmem:[%s319 + $0x760] sm:$0xff]
        %v706 = vld [vmem:[%s319 + $0x768] sm:$0xff]
        %v707 = vld [vmem:[%s319 + $0x770] sm:$0xff]
        %v708 = vld [vmem:[%s319 + $0x778] sm:$0xff]
        %v709 = vld [vmem:[%s319 + $0x780] sm:$0xff]
        %v710 = vld [vmem:[%s319 + $0x788] sm:$0xff]
        %v711 = vld [vmem:[%s319 + $0x790] sm:$0xff]
        %v712 = vld [vmem:[%s319 + $0x798] sm:$0xff]
        %v713 = vld [vmem:[%s319 + $0x7a0] sm:$0xff]
        %v714 = vld [vmem:[%s319 + $0x7a8] sm:$0xff]
        %v715 = vld [vmem:[%s319 + $0x7b0] sm:$0xff]
        %v716 = vld [vmem:[%s319 + $0x7b8] sm:$0xff]
        %v717 = vld [vmem:[%s319 + $0x7c0] sm:$0xff]
        %v718 = vld [vmem:[%s319 + $0x7c8] sm:$0xff]
        %v719 = vld [vmem:[%s319 + $0x7d0] sm:$0xff]
        %v720 = vld [vmem:[%s319 + $0x7d8] sm:$0xff]
        %v721 = vld [vmem:[%s319 + $0x7e0] sm:$0xff]
        %v722 = vld [vmem:[%s319 + $0x7e8] sm:$0xff]
        %v723 = vld [vmem:[%s319 + $0x7f0] sm:$0xff]
        %v724 = vld [vmem:[%s319 + $0x7f8] sm:$0xff]
        %v981 = vunpack.c.l.b16 %v469
        %v982 = vunpack.c.h.b16 %v469
        %v983 = vunpack.c.l.b16 %v470
        %v984 = vunpack.c.h.b16 %v470
        %v985 = vunpack.c.l.b16 %v471
        %v986 = vunpack.c.h.b16 %v471
        %v987 = vunpack.c.l.b16 %v472
        %v988 = vunpack.c.h.b16 %v472
        %v989 = vunpack.c.l.b16 %v473
        %v990 = vunpack.c.h.b16 %v473
        %v991 = vunpack.c.l.b16 %v474
        %v992 = vunpack.c.h.b16 %v474
        %v993 = vunpack.c.l.b16 %v475
        %v994 = vunpack.c.h.b16 %v475
        %v995 = vunpack.c.l.b16 %v476
        %v996 = vunpack.c.h.b16 %v476
        %v997 = vunpack.c.l.b16 %v477
        %v998 = vunpack.c.h.b16 %v477
        %v999 = vunpack.c.l.b16 %v478
        %v1000 = vunpack.c.h.b16 %v478
        %v1001 = vunpack.c.l.b16 %v479
        %v1002 = vunpack.c.h.b16 %v479
        %v1003 = vunpack.c.l.b16 %v480
        %v1004 = vunpack.c.h.b16 %v480
        %v1005 = vunpack.c.l.b16 %v481
        %v1006 = vunpack.c.h.b16 %v481
        %v1007 = vunpack.c.l.b16 %v482
        %v1008 = vunpack.c.h.b16 %v482
        %v1009 = vunpack.c.l.b16 %v483
        %v1010 = vunpack.c.h.b16 %v483
        %v1011 = vunpack.c.l.b16 %v484
        %v1012 = vunpack.c.h.b16 %v484
        %v1013 = vunpack.c.l.b16 %v485
        %v1014 = vunpack.c.h.b16 %v485
        %v1015 = vunpack.c.l.b16 %v486
        %v1016 = vunpack.c.h.b16 %v486
        %v1017 = vunpack.c.l.b16 %v487
        %v1018 = vunpack.c.h.b16 %v487
        %v1019 = vunpack.c.l.b16 %v488
        %v1020 = vunpack.c.h.b16 %v488
        %v1021 = vunpack.c.l.b16 %v489
        %v1022 = vunpack.c.h.b16 %v489
        %v1023 = vunpack.c.l.b16 %v490
        %v1024 = vunpack.c.h.b16 %v490
        %v1025 = vunpack.c.l.b16 %v491
        %v1026 = vunpack.c.h.b16 %v491
        %v1027 = vunpack.c.l.b16 %v492
        %v1028 = vunpack.c.h.b16 %v492
        %v1029 = vunpack.c.l.b16 %v493
        %v1030 = vunpack.c.h.b16 %v493
        %v1031 = vunpack.c.l.b16 %v494
        %v1032 = vunpack.c.h.b16 %v494
        %v1033 = vunpack.c.l.b16 %v495
        %v1034 = vunpack.c.h.b16 %v495
        %v1035 = vunpack.c.l.b16 %v496
        %v1036 = vunpack.c.h.b16 %v496
        %v1037 = vunpack.c.l.b16 %v497
        %v1038 = vunpack.c.h.b16 %v497
        %v1039 = vunpack.c.l.b16 %v498
        %v1040 = vunpack.c.h.b16 %v498
        %v1041 = vunpack.c.l.b16 %v499
        %v1042 = vunpack.c.h.b16 %v499
        %v1043 = vunpack.c.l.b16 %v500
        %v1044 = vunpack.c.h.b16 %v500
        %v1045 = vunpack.c.l.b16 %v501
        %v1046 = vunpack.c.h.b16 %v501
        %v1047 = vunpack.c.l.b16 %v502
        %v1048 = vunpack.c.h.b16 %v502
        %v1049 = vunpack.c.l.b16 %v503
        %v1050 = vunpack.c.h.b16 %v503
        %v1051 = vunpack.c.l.b16 %v504
        %v1052 = vunpack.c.h.b16 %v504
        %v1053 = vunpack.c.l.b16 %v505
        %v1054 = vunpack.c.h.b16 %v505
        %v1055 = vunpack.c.l.b16 %v506
        %v1056 = vunpack.c.h.b16 %v506
        %v1057 = vunpack.c.l.b16 %v507
        %v1058 = vunpack.c.h.b16 %v507
        %v1059 = vunpack.c.l.b16 %v508
        %v1060 = vunpack.c.h.b16 %v508
        %v1061 = vunpack.c.l.b16 %v509
        %v1062 = vunpack.c.h.b16 %v509
        %v1063 = vunpack.c.l.b16 %v510
        %v1064 = vunpack.c.h.b16 %v510
        %v1065 = vunpack.c.l.b16 %v511
        %v1066 = vunpack.c.h.b16 %v511
        %v1067 = vunpack.c.l.b16 %v512
        %v1068 = vunpack.c.h.b16 %v512
        %v1069 = vunpack.c.l.b16 %v513
        %v1070 = vunpack.c.h.b16 %v513
        %v1071 = vunpack.c.l.b16 %v514
        %v1072 = vunpack.c.h.b16 %v514
        %v1073 = vunpack.c.l.b16 %v515
        %v1074 = vunpack.c.h.b16 %v515
        %v1075 = vunpack.c.l.b16 %v516
        %v1076 = vunpack.c.h.b16 %v516
        %v1077 = vunpack.c.l.b16 %v517
        %v1078 = vunpack.c.h.b16 %v517
        %v1079 = vunpack.c.l.b16 %v518
        %v1080 = vunpack.c.h.b16 %v518
        %v1081 = vunpack.c.l.b16 %v519
        %v1082 = vunpack.c.h.b16 %v519
        %v1083 = vunpack.c.l.b16 %v520
        %v1084 = vunpack.c.h.b16 %v520
        %v1085 = vunpack.c.l.b16 %v521
        %v1086 = vunpack.c.h.b16 %v521
        %v1087 = vunpack.c.l.b16 %v522
        %v1088 = vunpack.c.h.b16 %v522
        %v1089 = vunpack.c.l.b16 %v523
        %v1090 = vunpack.c.h.b16 %v523
        %v1091 = vunpack.c.l.b16 %v524
        %v1092 = vunpack.c.h.b16 %v524
        %v1093 = vunpack.c.l.b16 %v525
        %v1094 = vunpack.c.h.b16 %v525
        %v1095 = vunpack.c.l.b16 %v526
        %v1096 = vunpack.c.h.b16 %v526
        %v1097 = vunpack.c.l.b16 %v527
        %v1098 = vunpack.c.h.b16 %v527
        %v1099 = vunpack.c.l.b16 %v528
        %v1100 = vunpack.c.h.b16 %v528
        %v1101 = vunpack.c.l.b16 %v529
        %v1102 = vunpack.c.h.b16 %v529
        %v1103 = vunpack.c.l.b16 %v530
        %v1104 = vunpack.c.h.b16 %v530
        %v1105 = vunpack.c.l.b16 %v531
        %v1106 = vunpack.c.h.b16 %v531
        %v1107 = vunpack.c.l.b16 %v532
        %v1108 = vunpack.c.h.b16 %v532
        %v1109 = vunpack.c.l.b16 %v533
        %v1110 = vunpack.c.h.b16 %v533
        %v1111 = vunpack.c.l.b16 %v534
        %v1112 = vunpack.c.h.b16 %v534
        %v1113 = vunpack.c.l.b16 %v535
        %v1114 = vunpack.c.h.b16 %v535
        %v1115 = vunpack.c.l.b16 %v536
        %v1116 = vunpack.c.h.b16 %v536
        %v1117 = vunpack.c.l.b16 %v537
        %v1118 = vunpack.c.h.b16 %v537
        %v1119 = vunpack.c.l.b16 %v538
        %v1120 = vunpack.c.h.b16 %v538
        %v1121 = vunpack.c.l.b16 %v539
        %v1122 = vunpack.c.h.b16 %v539
        %v1123 = vunpack.c.l.b16 %v540
        %v1124 = vunpack.c.h.b16 %v540
        %v1125 = vunpack.c.l.b16 %v541
        %v1126 = vunpack.c.h.b16 %v541
        %v1127 = vunpack.c.l.b16 %v542
        %v1128 = vunpack.c.h.b16 %v542
        %v1129 = vunpack.c.l.b16 %v543
        %v1130 = vunpack.c.h.b16 %v543
        %v1131 = vunpack.c.l.b16 %v544
        %v1132 = vunpack.c.h.b16 %v544
        %v1133 = vunpack.c.l.b16 %v545
        %v1134 = vunpack.c.h.b16 %v545
        %v1135 = vunpack.c.l.b16 %v546
        %v1136 = vunpack.c.h.b16 %v546
        %v1137 = vunpack.c.l.b16 %v547
        %v1138 = vunpack.c.h.b16 %v547
        %v1139 = vunpack.c.l.b16 %v548
        %v1140 = vunpack.c.h.b16 %v548
        %v1141 = vunpack.c.l.b16 %v549
        %v1142 = vunpack.c.h.b16 %v549
        %v1143 = vunpack.c.l.b16 %v550
        %v1144 = vunpack.c.h.b16 %v550
        %v1145 = vunpack.c.l.b16 %v551
        %v1146 = vunpack.c.h.b16 %v551
        %v1147 = vunpack.c.l.b16 %v552
        %v1148 = vunpack.c.h.b16 %v552
        %v1149 = vunpack.c.l.b16 %v553
        %v1150 = vunpack.c.h.b16 %v553
        %v1151 = vunpack.c.l.b16 %v554
        %v1152 = vunpack.c.h.b16 %v554
        %v1153 = vunpack.c.l.b16 %v555
        %v1154 = vunpack.c.h.b16 %v555
        %v1155 = vunpack.c.l.b16 %v556
        %v1156 = vunpack.c.h.b16 %v556
        %v1157 = vunpack.c.l.b16 %v557
        %v1158 = vunpack.c.h.b16 %v557
        %v1159 = vunpack.c.l.b16 %v558
        %v1160 = vunpack.c.h.b16 %v558
        %v1161 = vunpack.c.l.b16 %v559
        %v1162 = vunpack.c.h.b16 %v559
        %v1163 = vunpack.c.l.b16 %v560
        %v1164 = vunpack.c.h.b16 %v560
        %v1165 = vunpack.c.l.b16 %v561
        %v1166 = vunpack.c.h.b16 %v561
        %v1167 = vunpack.c.l.b16 %v562
        %v1168 = vunpack.c.h.b16 %v562
        %v1169 = vunpack.c.l.b16 %v563
        %v1170 = vunpack.c.h.b16 %v563
        %v1171 = vunpack.c.l.b16 %v564
        %v1172 = vunpack.c.h.b16 %v564
        %v1173 = vunpack.c.l.b16 %v565
        %v1174 = vunpack.c.h.b16 %v565
        %v1175 = vunpack.c.l.b16 %v566
        %v1176 = vunpack.c.h.b16 %v566
        %v1177 = vunpack.c.l.b16 %v567
        %v1178 = vunpack.c.h.b16 %v567
        %v1179 = vunpack.c.l.b16 %v568
        %v1180 = vunpack.c.h.b16 %v568
        %v1181 = vunpack.c.l.b16 %v569
        %v1182 = vunpack.c.h.b16 %v569
        %v1183 = vunpack.c.l.b16 %v570
        %v1184 = vunpack.c.h.b16 %v570
        %v1185 = vunpack.c.l.b16 %v571
        %v1186 = vunpack.c.h.b16 %v571
        %v1187 = vunpack.c.l.b16 %v572
        %v1188 = vunpack.c.h.b16 %v572
        %v1189 = vunpack.c.l.b16 %v573
        %v1190 = vunpack.c.h.b16 %v573
        %v1191 = vunpack.c.l.b16 %v574
        %v1192 = vunpack.c.h.b16 %v574
        %v1193 = vunpack.c.l.b16 %v575
        %v1194 = vunpack.c.h.b16 %v575
        %v1195 = vunpack.c.l.b16 %v576
        %v1196 = vunpack.c.h.b16 %v576
        %v1197 = vunpack.c.l.b16 %v577
        %v1198 = vunpack.c.h.b16 %v577
        %v1199 = vunpack.c.l.b16 %v578
        %v1200 = vunpack.c.h.b16 %v578
        %v1201 = vunpack.c.l.b16 %v579
        %v1202 = vunpack.c.h.b16 %v579
        %v1203 = vunpack.c.l.b16 %v580
        %v1204 = vunpack.c.h.b16 %v580
        %v1205 = vunpack.c.l.b16 %v581
        %v1206 = vunpack.c.h.b16 %v581
        %v1207 = vunpack.c.l.b16 %v582
        %v1208 = vunpack.c.h.b16 %v582
        %v1209 = vunpack.c.l.b16 %v583
        %v1210 = vunpack.c.h.b16 %v583
        %v1211 = vunpack.c.l.b16 %v584
        %v1212 = vunpack.c.h.b16 %v584
        %v1213 = vunpack.c.l.b16 %v585
        %v1214 = vunpack.c.h.b16 %v585
        %v1215 = vunpack.c.l.b16 %v586
        %v1216 = vunpack.c.h.b16 %v586
        %v1217 = vunpack.c.l.b16 %v587
        %v1218 = vunpack.c.h.b16 %v587
        %v1219 = vunpack.c.l.b16 %v588
        %v1220 = vunpack.c.h.b16 %v588
        %v1221 = vunpack.c.l.b16 %v589
        %v1222 = vunpack.c.h.b16 %v589
        %v1223 = vunpack.c.l.b16 %v590
        %v1224 = vunpack.c.h.b16 %v590
        %v1225 = vunpack.c.l.b16 %v591
        %v1226 = vunpack.c.h.b16 %v591
        %v1227 = vunpack.c.l.b16 %v592
        %v1228 = vunpack.c.h.b16 %v592
        %v1229 = vunpack.c.l.b16 %v593
        %v1230 = vunpack.c.h.b16 %v593
        %v1231 = vunpack.c.l.b16 %v594
        %v1232 = vunpack.c.h.b16 %v594
        %v1233 = vunpack.c.l.b16 %v595
        %v1234 = vunpack.c.h.b16 %v595
        %v1235 = vunpack.c.l.b16 %v596
        %v1236 = vunpack.c.h.b16 %v596
        %v1237 = vunpack.c.l.b16 %v597
        %v1238 = vunpack.c.h.b16 %v597
        %v1239 = vunpack.c.l.b16 %v598
        %v1240 = vunpack.c.h.b16 %v598
        %v1241 = vunpack.c.l.b16 %v599
        %v1242 = vunpack.c.h.b16 %v599
        %v1243 = vunpack.c.l.b16 %v600
        %v1244 = vunpack.c.h.b16 %v600
        %v1245 = vunpack.c.l.b16 %v601
        %v1246 = vunpack.c.h.b16 %v601
        %v1247 = vunpack.c.l.b16 %v602
        %v1248 = vunpack.c.h.b16 %v602
        %v1249 = vunpack.c.l.b16 %v603
        %v1250 = vunpack.c.h.b16 %v603
        %v1251 = vunpack.c.l.b16 %v604
        %v1252 = vunpack.c.h.b16 %v604
        %v1253 = vunpack.c.l.b16 %v605
        %v1254 = vunpack.c.h.b16 %v605
        %v1255 = vunpack.c.l.b16 %v606
        %v1256 = vunpack.c.h.b16 %v606
        %v1257 = vunpack.c.l.b16 %v607
        %v1258 = vunpack.c.h.b16 %v607
        %v1259 = vunpack.c.l.b16 %v608
        %v1260 = vunpack.c.h.b16 %v608
        %v1261 = vunpack.c.l.b16 %v609
        %v1262 = vunpack.c.h.b16 %v609
        %v1263 = vunpack.c.l.b16 %v610
        %v1264 = vunpack.c.h.b16 %v610
        %v1265 = vunpack.c.l.b16 %v611
        %v1266 = vunpack.c.h.b16 %v611
        %v1267 = vunpack.c.l.b16 %v612
        %v1268 = vunpack.c.h.b16 %v612
        %v1269 = vunpack.c.l.b16 %v613
        %v1270 = vunpack.c.h.b16 %v613
        %v1271 = vunpack.c.l.b16 %v614
        %v1272 = vunpack.c.h.b16 %v614
        %v1273 = vunpack.c.l.b16 %v615
        %v1274 = vunpack.c.h.b16 %v615
        %v1275 = vunpack.c.l.b16 %v616
        %v1276 = vunpack.c.h.b16 %v616
        %v1277 = vunpack.c.l.b16 %v617
        %v1278 = vunpack.c.h.b16 %v617
        %v1279 = vunpack.c.l.b16 %v618
        %v1280 = vunpack.c.h.b16 %v618
        %v1281 = vunpack.c.l.b16 %v619
        %v1282 = vunpack.c.h.b16 %v619
        %v1283 = vunpack.c.l.b16 %v620
        %v1284 = vunpack.c.h.b16 %v620
        %v1285 = vunpack.c.l.b16 %v621
        %v1286 = vunpack.c.h.b16 %v621
        %v1287 = vunpack.c.l.b16 %v622
        %v1288 = vunpack.c.h.b16 %v622
        %v1289 = vunpack.c.l.b16 %v623
        %v1290 = vunpack.c.h.b16 %v623
        %v1291 = vunpack.c.l.b16 %v624
        %v1292 = vunpack.c.h.b16 %v624
        %v1293 = vunpack.c.l.b16 %v625
        %v1294 = vunpack.c.h.b16 %v625
        %v1295 = vunpack.c.l.b16 %v626
        %v1296 = vunpack.c.h.b16 %v626
        %v1297 = vunpack.c.l.b16 %v627
        %v1298 = vunpack.c.h.b16 %v627
        %v1299 = vunpack.c.l.b16 %v628
        %v1300 = vunpack.c.h.b16 %v628
        %v1301 = vunpack.c.l.b16 %v629
        %v1302 = vunpack.c.h.b16 %v629
        %v1303 = vunpack.c.l.b16 %v630
        %v1304 = vunpack.c.h.b16 %v630
        %v1305 = vunpack.c.l.b16 %v631
        %v1306 = vunpack.c.h.b16 %v631
        %v1307 = vunpack.c.l.b16 %v632
        %v1308 = vunpack.c.h.b16 %v632
        %v1309 = vunpack.c.l.b16 %v633
        %v1310 = vunpack.c.h.b16 %v633
        %v1311 = vunpack.c.l.b16 %v634
        %v1312 = vunpack.c.h.b16 %v634
        %v1313 = vunpack.c.l.b16 %v635
        %v1314 = vunpack.c.h.b16 %v635
        %v1315 = vunpack.c.l.b16 %v636
        %v1316 = vunpack.c.h.b16 %v636
        %v1317 = vunpack.c.l.b16 %v637
        %v1318 = vunpack.c.h.b16 %v637
        %v1319 = vunpack.c.l.b16 %v638
        %v1320 = vunpack.c.h.b16 %v638
        %v1321 = vunpack.c.l.b16 %v639
        %v1322 = vunpack.c.h.b16 %v639
        %v1323 = vunpack.c.l.b16 %v640
        %v1324 = vunpack.c.h.b16 %v640
        %v1325 = vunpack.c.l.b16 %v641
        %v1326 = vunpack.c.h.b16 %v641
        %v1327 = vunpack.c.l.b16 %v642
        %v1328 = vunpack.c.h.b16 %v642
        %v1329 = vunpack.c.l.b16 %v643
        %v1330 = vunpack.c.h.b16 %v643
        %v1331 = vunpack.c.l.b16 %v644
        %v1332 = vunpack.c.h.b16 %v644
        %v1333 = vunpack.c.l.b16 %v645
        %v1334 = vunpack.c.h.b16 %v645
        %v1335 = vunpack.c.l.b16 %v646
        %v1336 = vunpack.c.h.b16 %v646
        %v1337 = vunpack.c.l.b16 %v647
        %v1338 = vunpack.c.h.b16 %v647
        %v1339 = vunpack.c.l.b16 %v648
        %v1340 = vunpack.c.h.b16 %v648
        %v1341 = vunpack.c.l.b16 %v649
        %v1342 = vunpack.c.h.b16 %v649
        %v1343 = vunpack.c.l.b16 %v650
        %v1344 = vunpack.c.h.b16 %v650
        %v1345 = vunpack.c.l.b16 %v651
        %v1346 = vunpack.c.h.b16 %v651
        %v1347 = vunpack.c.l.b16 %v652
        %v1348 = vunpack.c.h.b16 %v652
        %v1349 = vunpack.c.l.b16 %v653
        %v1350 = vunpack.c.h.b16 %v653
        %v1351 = vunpack.c.l.b16 %v654
        %v1352 = vunpack.c.h.b16 %v654
        %v1353 = vunpack.c.l.b16 %v655
        %v1354 = vunpack.c.h.b16 %v655
        %v1355 = vunpack.c.l.b16 %v656
        %v1356 = vunpack.c.h.b16 %v656
        %v1357 = vunpack.c.l.b16 %v657
        %v1358 = vunpack.c.h.b16 %v657
        %v1359 = vunpack.c.l.b16 %v658
        %v1360 = vunpack.c.h.b16 %v658
        %v1361 = vunpack.c.l.b16 %v659
        %v1362 = vunpack.c.h.b16 %v659
        %v1363 = vunpack.c.l.b16 %v660
        %v1364 = vunpack.c.h.b16 %v660
        %v1365 = vunpack.c.l.b16 %v661
        %v1366 = vunpack.c.h.b16 %v661
        %v1367 = vunpack.c.l.b16 %v662
        %v1368 = vunpack.c.h.b16 %v662
        %v1369 = vunpack.c.l.b16 %v663
        %v1370 = vunpack.c.h.b16 %v663
        %v1371 = vunpack.c.l.b16 %v664
        %v1372 = vunpack.c.h.b16 %v664
        %v1373 = vunpack.c.l.b16 %v665
        %v1374 = vunpack.c.h.b16 %v665
        %v1375 = vunpack.c.l.b16 %v666
        %v1376 = vunpack.c.h.b16 %v666
        %v1377 = vunpack.c.l.b16 %v667
        %v1378 = vunpack.c.h.b16 %v667
        %v1379 = vunpack.c.l.b16 %v668
        %v1380 = vunpack.c.h.b16 %v668
        %v1381 = vunpack.c.l.b16 %v669
        %v1382 = vunpack.c.h.b16 %v669
        %v1383 = vunpack.c.l.b16 %v670
        %v1384 = vunpack.c.h.b16 %v670
        %v1385 = vunpack.c.l.b16 %v671
        %v1386 = vunpack.c.h.b16 %v671
        %v1387 = vunpack.c.l.b16 %v672
        %v1388 = vunpack.c.h.b16 %v672
        %v1389 = vunpack.c.l.b16 %v673
        %v1390 = vunpack.c.h.b16 %v673
        %v1391 = vunpack.c.l.b16 %v674
        %v1392 = vunpack.c.h.b16 %v674
        %v1393 = vunpack.c.l.b16 %v675
        %v1394 = vunpack.c.h.b16 %v675
        %v1395 = vunpack.c.l.b16 %v676
        %v1396 = vunpack.c.h.b16 %v676
        %v1397 = vunpack.c.l.b16 %v677
        %v1398 = vunpack.c.h.b16 %v677
        %v1399 = vunpack.c.l.b16 %v678
        %v1400 = vunpack.c.h.b16 %v678
        %v1401 = vunpack.c.l.b16 %v679
        %v1402 = vunpack.c.h.b16 %v679
        %v1403 = vunpack.c.l.b16 %v680
        %v1404 = vunpack.c.h.b16 %v680
        %v1405 = vunpack.c.l.b16 %v681
        %v1406 = vunpack.c.h.b16 %v681
        %v1407 = vunpack.c.l.b16 %v682
        %v1408 = vunpack.c.h.b16 %v682
        %v1409 = vunpack.c.l.b16 %v683
        %v1410 = vunpack.c.h.b16 %v683
        %v1411 = vunpack.c.l.b16 %v684
        %v1412 = vunpack.c.h.b16 %v684
        %v1413 = vunpack.c.l.b16 %v685
        %v1414 = vunpack.c.h.b16 %v685
        %v1415 = vunpack.c.l.b16 %v686
        %v1416 = vunpack.c.h.b16 %v686
        %v1417 = vunpack.c.l.b16 %v687
        %v1418 = vunpack.c.h.b16 %v687
        %v1419 = vunpack.c.l.b16 %v688
        %v1420 = vunpack.c.h.b16 %v688
        %v1421 = vunpack.c.l.b16 %v689
        %v1422 = vunpack.c.h.b16 %v689
        %v1423 = vunpack.c.l.b16 %v690
        %v1424 = vunpack.c.h.b16 %v690
        %v1425 = vunpack.c.l.b16 %v691
        %v1426 = vunpack.c.h.b16 %v691
        %v1427 = vunpack.c.l.b16 %v692
        %v1428 = vunpack.c.h.b16 %v692
        %v1429 = vunpack.c.l.b16 %v693
        %v1430 = vunpack.c.h.b16 %v693
        %v1431 = vunpack.c.l.b16 %v694
        %v1432 = vunpack.c.h.b16 %v694
        %v1433 = vunpack.c.l.b16 %v695
        %v1434 = vunpack.c.h.b16 %v695
        %v1435 = vunpack.c.l.b16 %v696
        %v1436 = vunpack.c.h.b16 %v696
        %v1437 = vunpack.c.l.b16 %v697
        %v1438 = vunpack.c.h.b16 %v697
        %v1439 = vunpack.c.l.b16 %v698
        %v1440 = vunpack.c.h.b16 %v698
        %v1441 = vunpack.c.l.b16 %v699
        %v1442 = vunpack.c.h.b16 %v699
        %v1443 = vunpack.c.l.b16 %v700
        %v1444 = vunpack.c.h.b16 %v700
        %v1445 = vunpack.c.l.b16 %v701
        %v1446 = vunpack.c.h.b16 %v701
        %v1447 = vunpack.c.l.b16 %v702
        %v1448 = vunpack.c.h.b16 %v702
        %v1449 = vunpack.c.l.b16 %v703
        %v1450 = vunpack.c.h.b16 %v703
        %v1451 = vunpack.c.l.b16 %v704
        %v1452 = vunpack.c.h.b16 %v704
        %v1453 = vunpack.c.l.b16 %v705
        %v1454 = vunpack.c.h.b16 %v705
        %v1455 = vunpack.c.l.b16 %v706
        %v1456 = vunpack.c.h.b16 %v706
        %v1457 = vunpack.c.l.b16 %v707
        %v1458 = vunpack.c.h.b16 %v707
        %v1459 = vunpack.c.l.b16 %v708
        %v1460 = vunpack.c.h.b16 %v708
        %v1461 = vunpack.c.l.b16 %v709
        %v1462 = vunpack.c.h.b16 %v709
        %v1463 = vunpack.c.l.b16 %v710
        %v1464 = vunpack.c.h.b16 %v710
        %v1465 = vunpack.c.l.b16 %v711
        %v1466 = vunpack.c.h.b16 %v711
        %v1467 = vunpack.c.l.b16 %v712
        %v1468 = vunpack.c.h.b16 %v712
        %v1469 = vunpack.c.l.b16 %v713
        %v1470 = vunpack.c.h.b16 %v713
        %v1471 = vunpack.c.l.b16 %v714
        %v1472 = vunpack.c.h.b16 %v714
        %v1473 = vunpack.c.l.b16 %v715
        %v1474 = vunpack.c.h.b16 %v715
        %v1475 = vunpack.c.l.b16 %v716
        %v1476 = vunpack.c.h.b16 %v716
        %v1477 = vunpack.c.l.b16 %v717
        %v1478 = vunpack.c.h.b16 %v717
        %v1479 = vunpack.c.l.b16 %v718
        %v1480 = vunpack.c.h.b16 %v718
        %v1481 = vunpack.c.l.b16 %v719
        %v1482 = vunpack.c.h.b16 %v719
        %v1483 = vunpack.c.l.b16 %v720
        %v1484 = vunpack.c.h.b16 %v720
        %v1485 = vunpack.c.l.b16 %v721
        %v1486 = vunpack.c.h.b16 %v721
        %v1487 = vunpack.c.l.b16 %v722
        %v1488 = vunpack.c.h.b16 %v722
        %v1489 = vunpack.c.l.b16 %v723
        %v1490 = vunpack.c.h.b16 %v723
        %v1491 = vunpack.c.l.b16 %v724
        %v1492 = vunpack.c.h.b16 %v724
        %v1493 = vpack.c.b16 %v985, %v981
        %v1494 = vpack.c.b16 %v986, %v982
        %v1495 = vpack.c.b16 %v987, %v983
        %v1496 = vpack.c.b16 %v988, %v984
        %v1497 = vpack.c.b16 %v993, %v989
        %v1498 = vpack.c.b16 %v994, %v990
        %v1499 = vpack.c.b16 %v995, %v991
        %v1500 = vpack.c.b16 %v996, %v992
        %v1501 = vpack.c.b16 %v1001, %v997
        %v1502 = vpack.c.b16 %v1002, %v998
        %v1503 = vpack.c.b16 %v1003, %v999
        %v1504 = vpack.c.b16 %v1004, %v1000
        %v1505 = vpack.c.b16 %v1009, %v1005
        %v1506 = vpack.c.b16 %v1010, %v1006
        %v1507 = vpack.c.b16 %v1011, %v1007
        %v1508 = vpack.c.b16 %v1012, %v1008
        %v1509 = vpack.c.b16 %v1017, %v1013
        %v1510 = vpack.c.b16 %v1018, %v1014
        %v1511 = vpack.c.b16 %v1019, %v1015
        %v1512 = vpack.c.b16 %v1020, %v1016
        %v1513 = vpack.c.b16 %v1025, %v1021
        %v1514 = vpack.c.b16 %v1026, %v1022
        %v1515 = vpack.c.b16 %v1027, %v1023
        %v1516 = vpack.c.b16 %v1028, %v1024
        %v1517 = vpack.c.b16 %v1033, %v1029
        %v1518 = vpack.c.b16 %v1034, %v1030
        %v1519 = vpack.c.b16 %v1035, %v1031
        %v1520 = vpack.c.b16 %v1036, %v1032
        %v1521 = vpack.c.b16 %v1041, %v1037
        %v1522 = vpack.c.b16 %v1042, %v1038
        %v1523 = vpack.c.b16 %v1043, %v1039
        %v1524 = vpack.c.b16 %v1044, %v1040
        %v1525 = vpack.c.b16 %v1049, %v1045
        %v1526 = vpack.c.b16 %v1050, %v1046
        %v1527 = vpack.c.b16 %v1051, %v1047
        %v1528 = vpack.c.b16 %v1052, %v1048
        %v1529 = vpack.c.b16 %v1057, %v1053
        %v1530 = vpack.c.b16 %v1058, %v1054
        %v1531 = vpack.c.b16 %v1059, %v1055
        %v1532 = vpack.c.b16 %v1060, %v1056
        %v1533 = vpack.c.b16 %v1065, %v1061
        %v1534 = vpack.c.b16 %v1066, %v1062
        %v1535 = vpack.c.b16 %v1067, %v1063
        %v1536 = vpack.c.b16 %v1068, %v1064
        %v1537 = vpack.c.b16 %v1073, %v1069
        %v1538 = vpack.c.b16 %v1074, %v1070
        %v1539 = vpack.c.b16 %v1075, %v1071
        %v1540 = vpack.c.b16 %v1076, %v1072
        %v1541 = vpack.c.b16 %v1081, %v1077
        %v1542 = vpack.c.b16 %v1082, %v1078
        %v1543 = vpack.c.b16 %v1083, %v1079
        %v1544 = vpack.c.b16 %v1084, %v1080
        %v1545 = vpack.c.b16 %v1089, %v1085
        %v1546 = vpack.c.b16 %v1090, %v1086
        %v1547 = vpack.c.b16 %v1091, %v1087
        %v1548 = vpack.c.b16 %v1092, %v1088
        %v1549 = vpack.c.b16 %v1097, %v1093
        %v1550 = vpack.c.b16 %v1098, %v1094
        %v1551 = vpack.c.b16 %v1099, %v1095
        %v1552 = vpack.c.b16 %v1100, %v1096
        %v1553 = vpack.c.b16 %v1105, %v1101
        %v1554 = vpack.c.b16 %v1106, %v1102
        %v1555 = vpack.c.b16 %v1107, %v1103
        %v1556 = vpack.c.b16 %v1108, %v1104
        %v1557 = vpack.c.b16 %v1113, %v1109
        %v1558 = vpack.c.b16 %v1114, %v1110
        %v1559 = vpack.c.b16 %v1115, %v1111
        %v1560 = vpack.c.b16 %v1116, %v1112
        %v1561 = vpack.c.b16 %v1121, %v1117
        %v1562 = vpack.c.b16 %v1122, %v1118
        %v1563 = vpack.c.b16 %v1123, %v1119
        %v1564 = vpack.c.b16 %v1124, %v1120
        %v1565 = vpack.c.b16 %v1129, %v1125
        %v1566 = vpack.c.b16 %v1130, %v1126
        %v1567 = vpack.c.b16 %v1131, %v1127
        %v1568 = vpack.c.b16 %v1132, %v1128
        %v1569 = vpack.c.b16 %v1137, %v1133
        %v1570 = vpack.c.b16 %v1138, %v1134
        %v1571 = vpack.c.b16 %v1139, %v1135
        %v1572 = vpack.c.b16 %v1140, %v1136
        %v1573 = vpack.c.b16 %v1145, %v1141
        %v1574 = vpack.c.b16 %v1146, %v1142
        %v1575 = vpack.c.b16 %v1147, %v1143
        %v1576 = vpack.c.b16 %v1148, %v1144
        %v1577 = vpack.c.b16 %v1153, %v1149
        %v1578 = vpack.c.b16 %v1154, %v1150
        %v1579 = vpack.c.b16 %v1155, %v1151
        %v1580 = vpack.c.b16 %v1156, %v1152
        %v1581 = vpack.c.b16 %v1161, %v1157
        %v1582 = vpack.c.b16 %v1162, %v1158
        %v1583 = vpack.c.b16 %v1163, %v1159
        %v1584 = vpack.c.b16 %v1164, %v1160
        %v1585 = vpack.c.b16 %v1169, %v1165
        %v1586 = vpack.c.b16 %v1170, %v1166
        %v1587 = vpack.c.b16 %v1171, %v1167
        %v1588 = vpack.c.b16 %v1172, %v1168
        %v1589 = vpack.c.b16 %v1177, %v1173
        %v1590 = vpack.c.b16 %v1178, %v1174
        %v1591 = vpack.c.b16 %v1179, %v1175
        %v1592 = vpack.c.b16 %v1180, %v1176
        %v1593 = vpack.c.b16 %v1185, %v1181
        %v1594 = vpack.c.b16 %v1186, %v1182
        %v1595 = vpack.c.b16 %v1187, %v1183
        %v1596 = vpack.c.b16 %v1188, %v1184
        %v1597 = vpack.c.b16 %v1193, %v1189
        %v1598 = vpack.c.b16 %v1194, %v1190
        %v1599 = vpack.c.b16 %v1195, %v1191
        %v1600 = vpack.c.b16 %v1196, %v1192
        %v1601 = vpack.c.b16 %v1201, %v1197
        %v1602 = vpack.c.b16 %v1202, %v1198
        %v1603 = vpack.c.b16 %v1203, %v1199
        %v1604 = vpack.c.b16 %v1204, %v1200
        %v1605 = vpack.c.b16 %v1209, %v1205
        %v1606 = vpack.c.b16 %v1210, %v1206
        %v1607 = vpack.c.b16 %v1211, %v1207
        %v1608 = vpack.c.b16 %v1212, %v1208
        %v1609 = vpack.c.b16 %v1217, %v1213
        %v1610 = vpack.c.b16 %v1218, %v1214
        %v1611 = vpack.c.b16 %v1219, %v1215
        %v1612 = vpack.c.b16 %v1220, %v1216
        %v1613 = vpack.c.b16 %v1225, %v1221
        %v1614 = vpack.c.b16 %v1226, %v1222
        %v1615 = vpack.c.b16 %v1227, %v1223
        %v1616 = vpack.c.b16 %v1228, %v1224
        %v1617 = vpack.c.b16 %v1233, %v1229
        %v1618 = vpack.c.b16 %v1234, %v1230
        %v1619 = vpack.c.b16 %v1235, %v1231
        %v1620 = vpack.c.b16 %v1236, %v1232
        %v1621 = vpack.c.b16 %v1241, %v1237
        %v1622 = vpack.c.b16 %v1242, %v1238
        %v1623 = vpack.c.b16 %v1243, %v1239
        %v1624 = vpack.c.b16 %v1244, %v1240
        %v1625 = vpack.c.b16 %v1249, %v1245
        %v1626 = vpack.c.b16 %v1250, %v1246
        %v1627 = vpack.c.b16 %v1251, %v1247
        %v1628 = vpack.c.b16 %v1252, %v1248
        %v1629 = vpack.c.b16 %v1257, %v1253
        %v1630 = vpack.c.b16 %v1258, %v1254
        %v1631 = vpack.c.b16 %v1259, %v1255
        %v1632 = vpack.c.b16 %v1260, %v1256
        %v1633 = vpack.c.b16 %v1265, %v1261
        %v1634 = vpack.c.b16 %v1266, %v1262
        %v1635 = vpack.c.b16 %v1267, %v1263
        %v1636 = vpack.c.b16 %v1268, %v1264
        %v1637 = vpack.c.b16 %v1273, %v1269
        %v1638 = vpack.c.b16 %v1274, %v1270
        %v1639 = vpack.c.b16 %v1275, %v1271
        %v1640 = vpack.c.b16 %v1276, %v1272
        %v1641 = vpack.c.b16 %v1281, %v1277
        %v1642 = vpack.c.b16 %v1282, %v1278
        %v1643 = vpack.c.b16 %v1283, %v1279
        %v1644 = vpack.c.b16 %v1284, %v1280
        %v1645 = vpack.c.b16 %v1289, %v1285
        %v1646 = vpack.c.b16 %v1290, %v1286
        %v1647 = vpack.c.b16 %v1291, %v1287
        %v1648 = vpack.c.b16 %v1292, %v1288
        %v1649 = vpack.c.b16 %v1297, %v1293
        %v1650 = vpack.c.b16 %v1298, %v1294
        %v1651 = vpack.c.b16 %v1299, %v1295
        %v1652 = vpack.c.b16 %v1300, %v1296
        %v1653 = vpack.c.b16 %v1305, %v1301
        %v1654 = vpack.c.b16 %v1306, %v1302
        %v1655 = vpack.c.b16 %v1307, %v1303
        %v1656 = vpack.c.b16 %v1308, %v1304
        %v1657 = vpack.c.b16 %v1313, %v1309
        %v1658 = vpack.c.b16 %v1314, %v1310
        %v1659 = vpack.c.b16 %v1315, %v1311
        %v1660 = vpack.c.b16 %v1316, %v1312
        %v1661 = vpack.c.b16 %v1321, %v1317
        %v1662 = vpack.c.b16 %v1322, %v1318
        %v1663 = vpack.c.b16 %v1323, %v1319
        %v1664 = vpack.c.b16 %v1324, %v1320
        %v1665 = vpack.c.b16 %v1329, %v1325
        %v1666 = vpack.c.b16 %v1330, %v1326
        %v1667 = vpack.c.b16 %v1331, %v1327
        %v1668 = vpack.c.b16 %v1332, %v1328
        %v1669 = vpack.c.b16 %v1337, %v1333
        %v1670 = vpack.c.b16 %v1338, %v1334
        %v1671 = vpack.c.b16 %v1339, %v1335
        %v1672 = vpack.c.b16 %v1340, %v1336
        %v1673 = vpack.c.b16 %v1345, %v1341
        %v1674 = vpack.c.b16 %v1346, %v1342
        %v1675 = vpack.c.b16 %v1347, %v1343
        %v1676 = vpack.c.b16 %v1348, %v1344
        %v1677 = vpack.c.b16 %v1353, %v1349
        %v1678 = vpack.c.b16 %v1354, %v1350
        %v1679 = vpack.c.b16 %v1355, %v1351
        %v1680 = vpack.c.b16 %v1356, %v1352
        %v1681 = vpack.c.b16 %v1361, %v1357
        %v1682 = vpack.c.b16 %v1362, %v1358
        %v1683 = vpack.c.b16 %v1363, %v1359
        %v1684 = vpack.c.b16 %v1364, %v1360
        %v1685 = vpack.c.b16 %v1369, %v1365
        %v1686 = vpack.c.b16 %v1370, %v1366
        %v1687 = vpack.c.b16 %v1371, %v1367
        %v1688 = vpack.c.b16 %v1372, %v1368
        %v1689 = vpack.c.b16 %v1377, %v1373
        %v1690 = vpack.c.b16 %v1378, %v1374
        %v1691 = vpack.c.b16 %v1379, %v1375
        %v1692 = vpack.c.b16 %v1380, %v1376
        %v1693 = vpack.c.b16 %v1385, %v1381
        %v1694 = vpack.c.b16 %v1386, %v1382
        %v1695 = vpack.c.b16 %v1387, %v1383
        %v1696 = vpack.c.b16 %v1388, %v1384
        %v1697 = vpack.c.b16 %v1393, %v1389
        %v1698 = vpack.c.b16 %v1394, %v1390
        %v1699 = vpack.c.b16 %v1395, %v1391
        %v1700 = vpack.c.b16 %v1396, %v1392
        %v1701 = vpack.c.b16 %v1401, %v1397
        %v1702 = vpack.c.b16 %v1402, %v1398
        %v1703 = vpack.c.b16 %v1403, %v1399
        %v1704 = vpack.c.b16 %v1404, %v1400
        %v1705 = vpack.c.b16 %v1409, %v1405
        %v1706 = vpack.c.b16 %v1410, %v1406
        %v1707 = vpack.c.b16 %v1411, %v1407
        %v1708 = vpack.c.b16 %v1412, %v1408
        %v1709 = vpack.c.b16 %v1417, %v1413
        %v1710 = vpack.c.b16 %v1418, %v1414
        %v1711 = vpack.c.b16 %v1419, %v1415
        %v1712 = vpack.c.b16 %v1420, %v1416
        %v1713 = vpack.c.b16 %v1425, %v1421
        %v1714 = vpack.c.b16 %v1426, %v1422
        %v1715 = vpack.c.b16 %v1427, %v1423
        %v1716 = vpack.c.b16 %v1428, %v1424
        %v1717 = vpack.c.b16 %v1433, %v1429
        %v1718 = vpack.c.b16 %v1434, %v1430
        %v1719 = vpack.c.b16 %v1435, %v1431
        %v1720 = vpack.c.b16 %v1436, %v1432
        %v1721 = vpack.c.b16 %v1441, %v1437
        %v1722 = vpack.c.b16 %v1442, %v1438
        %v1723 = vpack.c.b16 %v1443, %v1439
        %v1724 = vpack.c.b16 %v1444, %v1440
        %v1725 = vpack.c.b16 %v1449, %v1445
        %v1726 = vpack.c.b16 %v1450, %v1446
        %v1727 = vpack.c.b16 %v1451, %v1447
        %v1728 = vpack.c.b16 %v1452, %v1448
        %v1729 = vpack.c.b16 %v1457, %v1453
        %v1730 = vpack.c.b16 %v1458, %v1454
        %v1731 = vpack.c.b16 %v1459, %v1455
        %v1732 = vpack.c.b16 %v1460, %v1456
        %v1733 = vpack.c.b16 %v1465, %v1461
        %v1734 = vpack.c.b16 %v1466, %v1462
        %v1735 = vpack.c.b16 %v1467, %v1463
        %v1736 = vpack.c.b16 %v1468, %v1464
        %v1737 = vpack.c.b16 %v1473, %v1469
        %v1738 = vpack.c.b16 %v1474, %v1470
        %v1739 = vpack.c.b16 %v1475, %v1471
        %v1740 = vpack.c.b16 %v1476, %v1472
        %v1741 = vpack.c.b16 %v1481, %v1477
        %v1742 = vpack.c.b16 %v1482, %v1478
        %v1743 = vpack.c.b16 %v1483, %v1479
        %v1744 = vpack.c.b16 %v1484, %v1480
        %v1745 = vpack.c.b16 %v1489, %v1485
        %v1746 = vpack.c.b16 %v1490, %v1486
        %v1747 = vpack.c.b16 %v1491, %v1487
        %v1748 = vpack.c.b16 %v1492, %v1488
        %2005 = vmatpush.bf16.msra.mxu0 %v1521
        %2006 = vmatpush.bf16.msra.mxu0 %v1517
        %2007 = vmatpush.bf16.msra.mxu0 %v1513
        %2008 = vmatpush.bf16.msra.mxu0 %v1509
        %2009 = vmatpush.bf16.msra.mxu0 %v1505
        %2010 = vmatpush.bf16.msra.mxu0 %v1501
        %2011 = vmatpush.bf16.msra.mxu0 %v1497
        %2012 = vmatpush.bf16.msra.mxu0 %v1493
        %2013 = vmatmul.bf16.gmra.mxu0 %v457
        %v2014 = vpop.f32.mrf.mxu0
        %v2015 = vadd.f32 0.0, %v2014
        %v2016 = vpop.f32.mrf.mxu0
        %2017 = vdwg.mxu0
        %2018 = vmatpush.bf16.msra.mxu0 %v1553
        %2019 = vmatpush.bf16.msra.mxu0 %v1549
        %2020 = vmatpush.bf16.msra.mxu0 %v1545
        %2021 = vmatpush.bf16.msra.mxu0 %v1541
        %2022 = vmatpush.bf16.msra.mxu0 %v1537
        %2023 = vmatpush.bf16.msra.mxu0 %v1533
        %2024 = vmatpush.bf16.msra.mxu0 %v1529
        %2025 = vmatpush.bf16.msra.mxu0 %v1525
        %2026 = vmatmul.bf16.gmra.mxu0 %v458
        %v2027 = vpop.f32.mrf.mxu0
        %v2028 = vadd.f32 %v2015, %v2027
        %v2029 = vpop.f32.mrf.mxu0
        %2030 = vdwg.mxu0
        %2031 = vmatpush.bf16.msra.mxu0 %v1585
        %2032 = vmatpush.bf16.msra.mxu0 %v1581
        %2033 = vmatpush.bf16.msra.mxu0 %v1577
        %2034 = vmatpush.bf16.msra.mxu0 %v1573
        %2035 = vmatpush.bf16.msra.mxu0 %v1569
        %2036 = vmatpush.bf16.msra.mxu0 %v1565
        %2037 = vmatpush.bf16.msra.mxu0 %v1561
        %2038 = vmatpush.bf16.msra.mxu0 %v1557
        %2039 = vmatmul.bf16.gmra.mxu0 %v459
        %v2040 = vpop.f32.mrf.mxu0
        %v2041 = vadd.f32 %v2028, %v2040
        %v2042 = vpop.f32.mrf.mxu0
        %2043 = vdwg.mxu0
        %2044 = vmatpush.bf16.msra.mxu0 %v1617
        %2045 = vmatpush.bf16.msra.mxu0 %v1613
        %2046 = vmatpush.bf16.msra.mxu0 %v1609
        %2047 = vmatpush.bf16.msra.mxu0 %v1605
        %2048 = vmatpush.bf16.msra.mxu0 %v1601
        %2049 = vmatpush.bf16.msra.mxu0 %v1597
        %2050 = vmatpush.bf16.msra.mxu0 %v1593
        %2051 = vmatpush.bf16.msra.mxu0 %v1589
        %2052 = vmatmul.bf16.gmra.mxu0 %v460
        %v2053 = vpop.f32.mrf.mxu0
        %v2054 = vadd.f32 %v2041, %v2053
        %v2055 = vpop.f32.mrf.mxu0
        %2056 = vdwg.mxu0
        %2057 = vmatpush.bf16.msra.mxu0 %v1649
        %2058 = vmatpush.bf16.msra.mxu0 %v1645
        %2059 = vmatpush.bf16.msra.mxu0 %v1641
        %2060 = vmatpush.bf16.msra.mxu0 %v1637
        %2061 = vmatpush.bf16.msra.mxu0 %v1633
        %2062 = vmatpush.bf16.msra.mxu0 %v1629
        %2063 = vmatpush.bf16.msra.mxu0 %v1625
        %2064 = vmatpush.bf16.msra.mxu0 %v1621
        %2065 = vmatmul.bf16.gmra.mxu0 %v461
        %v2066 = vpop.f32.mrf.mxu0
        %v2067 = vadd.f32 %v2054, %v2066
        %v2068 = vpop.f32.mrf.mxu0
        %2069 = vdwg.mxu0
        %2070 = vmatpush.bf16.msra.mxu0 %v1681
        %2071 = vmatpush.bf16.msra.mxu0 %v1677
        %2072 = vmatpush.bf16.msra.mxu0 %v1673
        %2073 = vmatpush.bf16.msra.mxu0 %v1669
        %2074 = vmatpush.bf16.msra.mxu0 %v1665
        %2075 = vmatpush.bf16.msra.mxu0 %v1661
        %2076 = vmatpush.bf16.msra.mxu0 %v1657
        %2077 = vmatpush.bf16.msra.mxu0 %v1653
        %2078 = vmatmul.bf16.gmra.mxu0 %v462
        %v2079 = vpop.f32.mrf.mxu0
        %v2080 = vadd.f32 %v2067, %v2079
        %v2081 = vpop.f32.mrf.mxu0
        %2082 = vdwg.mxu0
        %2083 = vmatpush.bf16.msra.mxu0 %v1713
        %2084 = vmatpush.bf16.msra.mxu0 %v1709
        %2085 = vmatpush.bf16.msra.mxu0 %v1705
        %2086 = vmatpush.bf16.msra.mxu0 %v1701
        %2087 = vmatpush.bf16.msra.mxu0 %v1697
        %2088 = vmatpush.bf16.msra.mxu0 %v1693
        %2089 = vmatpush.bf16.msra.mxu0 %v1689
        %2090 = vmatpush.bf16.msra.mxu0 %v1685
        %2091 = vmatmul.bf16.gmra.mxu0 %v463
        %v2092 = vpop.f32.mrf.mxu0
        %v2093 = vadd.f32 %v2080, %v2092
        %v2094 = vpop.f32.mrf.mxu0
        %2095 = vdwg.mxu0
        %2096 = vmatpush.bf16.msra.mxu0 %v1745
        %2097 = vmatpush.bf16.msra.mxu0 %v1741
        %2098 = vmatpush.bf16.msra.mxu0 %v1737
        %2099 = vmatpush.bf16.msra.mxu0 %v1733
        %2100 = vmatpush.bf16.msra.mxu0 %v1729
        %2101 = vmatpush.bf16.msra.mxu0 %v1725
        %2102 = vmatpush.bf16.msra.mxu0 %v1721
        %2103 = vmatpush.bf16.msra.mxu0 %v1717
        %2104 = vmatmul.bf16.gmra.mxu0 %v464
        %v2105 = vpop.f32.mrf.mxu0
        %v2106 = vadd.f32 %v2093, %v2105
        %v2107 = vpop.f32.mrf.mxu0
        %2108 = vdwg.mxu0
        %2109 = vmatpush.bf16.msra.mxu0 %v1522
        %2110 = vmatpush.bf16.msra.mxu0 %v1518
        %2111 = vmatpush.bf16.msra.mxu0 %v1514
        %2112 = vmatpush.bf16.msra.mxu0 %v1510
        %2113 = vmatpush.bf16.msra.mxu0 %v1506
        %2114 = vmatpush.bf16.msra.mxu0 %v1502
        %2115 = vmatpush.bf16.msra.mxu0 %v1498
        %2116 = vmatpush.bf16.msra.mxu0 %v1494
        %2117 = vmatmul.bf16.gmra.mxu0 %v457
        %v2118 = vpop.f32.mrf.mxu0
        %v2119 = vadd.f32 0.0, %v2118
        %v2120 = vpop.f32.mrf.mxu0
        %2121 = vdwg.mxu0
        %2122 = vmatpush.bf16.msra.mxu0 %v1554
        %2123 = vmatpush.bf16.msra.mxu0 %v1550
        %2124 = vmatpush.bf16.msra.mxu0 %v1546
        %2125 = vmatpush.bf16.msra.mxu0 %v1542
        %2126 = vmatpush.bf16.msra.mxu0 %v1538
        %2127 = vmatpush.bf16.msra.mxu0 %v1534
        %2128 = vmatpush.bf16.msra.mxu0 %v1530
        %2129 = vmatpush.bf16.msra.mxu0 %v1526
        %2130 = vmatmul.bf16.gmra.mxu0 %v458
        %v2131 = vpop.f32.mrf.mxu0
        %v2132 = vadd.f32 %v2119, %v2131
        %v2133 = vpop.f32.mrf.mxu0
        %2134 = vdwg.mxu0
        %2135 = vmatpush.bf16.msra.mxu0 %v1586
        %2136 = vmatpush.bf16.msra.mxu0 %v1582
        %2137 = vmatpush.bf16.msra.mxu0 %v1578
        %2138 = vmatpush.bf16.msra.mxu0 %v1574
        %2139 = vmatpush.bf16.msra.mxu0 %v1570
        %2140 = vmatpush.bf16.msra.mxu0 %v1566
        %2141 = vmatpush.bf16.msra.mxu0 %v1562
        %2142 = vmatpush.bf16.msra.mxu0 %v1558
        %2143 = vmatmul.bf16.gmra.mxu0 %v459
        %v2144 = vpop.f32.mrf.mxu0
        %v2145 = vadd.f32 %v2132, %v2144
        %v2146 = vpop.f32.mrf.mxu0
        %2147 = vdwg.mxu0
        %2148 = vmatpush.bf16.msra.mxu0 %v1618
        %2149 = vmatpush.bf16.msra.mxu0 %v1614
        %2150 = vmatpush.bf16.msra.mxu0 %v1610
        %2151 = vmatpush.bf16.msra.mxu0 %v1606
        %2152 = vmatpush.bf16.msra.mxu0 %v1602
        %2153 = vmatpush.bf16.msra.mxu0 %v1598
        %2154 = vmatpush.bf16.msra.mxu0 %v1594
        %2155 = vmatpush.bf16.msra.mxu0 %v1590
        %2156 = vmatmul.bf16.gmra.mxu0 %v460
        %v2157 = vpop.f32.mrf.mxu0
        %v2158 = vadd.f32 %v2145, %v2157
        %v2159 = vpop.f32.mrf.mxu0
        %2160 = vdwg.mxu0
        %2161 = vmatpush.bf16.msra.mxu0 %v1650
        %2162 = vmatpush.bf16.msra.mxu0 %v1646
        %2163 = vmatpush.bf16.msra.mxu0 %v1642
        %2164 = vmatpush.bf16.msra.mxu0 %v1638
        %2165 = vmatpush.bf16.msra.mxu0 %v1634
        %2166 = vmatpush.bf16.msra.mxu0 %v1630
        %2167 = vmatpush.bf16.msra.mxu0 %v1626
        %2168 = vmatpush.bf16.msra.mxu0 %v1622
        %2169 = vmatmul.bf16.gmra.mxu0 %v461
        %v2170 = vpop.f32.mrf.mxu0
        %v2171 = vadd.f32 %v2158, %v2170
        %v2172 = vpop.f32.mrf.mxu0
        %2173 = vdwg.mxu0
        %2174 = vmatpush.bf16.msra.mxu0 %v1682
        %2175 = vmatpush.bf16.msra.mxu0 %v1678
        %2176 = vmatpush.bf16.msra.mxu0 %v1674
        %2177 = vmatpush.bf16.msra.mxu0 %v1670
        %2178 = vmatpush.bf16.msra.mxu0 %v1666
        %2179 = vmatpush.bf16.msra.mxu0 %v1662
        %2180 = vmatpush.bf16.msra.mxu0 %v1658
        %2181 = vmatpush.bf16.msra.mxu0 %v1654
        %2182 = vmatmul.bf16.gmra.mxu0 %v462
        %v2183 = vpop.f32.mrf.mxu0
        %v2184 = vadd.f32 %v2171, %v2183
        %v2185 = vpop.f32.mrf.mxu0
        %2186 = vdwg.mxu0
        %2187 = vmatpush.bf16.msra.mxu0 %v1714
        %2188 = vmatpush.bf16.msra.mxu0 %v1710
        %2189 = vmatpush.bf16.msra.mxu0 %v1706
        %2190 = vmatpush.bf16.msra.mxu0 %v1702
        %2191 = vmatpush.bf16.msra.mxu0 %v1698
        %2192 = vmatpush.bf16.msra.mxu0 %v1694
        %2193 = vmatpush.bf16.msra.mxu0 %v1690
        %2194 = vmatpush.bf16.msra.mxu0 %v1686
        %2195 = vmatmul.bf16.gmra.mxu0 %v463
        %v2196 = vpop.f32.mrf.mxu0
        %v2197 = vadd.f32 %v2184, %v2196
        %v2198 = vpop.f32.mrf.mxu0
        %2199 = vdwg.mxu0
        %2200 = vmatpush.bf16.msra.mxu0 %v1746
        %2201 = vmatpush.bf16.msra.mxu0 %v1742
        %2202 = vmatpush.bf16.msra.mxu0 %v1738
        %2203 = vmatpush.bf16.msra.mxu0 %v1734
        %2204 = vmatpush.bf16.msra.mxu0 %v1730
        %2205 = vmatpush.bf16.msra.mxu0 %v1726
        %2206 = vmatpush.bf16.msra.mxu0 %v1722
        %2207 = vmatpush.bf16.msra.mxu0 %v1718
        %2208 = vmatmul.bf16.gmra.mxu0 %v464
        %v2209 = vpop.f32.mrf.mxu0
        %v2210 = vadd.f32 %v2197, %v2209
        %v2211 = vpop.f32.mrf.mxu0
        %2212 = vdwg.mxu0
        %2213 = vmatpush.bf16.msra.mxu0 %v1523
        %2214 = vmatpush.bf16.msra.mxu0 %v1519
        %2215 = vmatpush.bf16.msra.mxu0 %v1515
        %2216 = vmatpush.bf16.msra.mxu0 %v1511
        %2217 = vmatpush.bf16.msra.mxu0 %v1507
        %2218 = vmatpush.bf16.msra.mxu0 %v1503
        %2219 = vmatpush.bf16.msra.mxu0 %v1499
        %2220 = vmatpush.bf16.msra.mxu0 %v1495
        %2221 = vmatmul.bf16.gmra.mxu0 %v457
        %v2222 = vpop.f32.mrf.mxu0
        %v2223 = vadd.f32 0.0, %v2222
        %v2224 = vpop.f32.mrf.mxu0
        %2225 = vdwg.mxu0
        %2226 = vmatpush.bf16.msra.mxu0 %v1555
        %2227 = vmatpush.bf16.msra.mxu0 %v1551
        %2228 = vmatpush.bf16.msra.mxu0 %v1547
        %2229 = vmatpush.bf16.msra.mxu0 %v1543
        %2230 = vmatpush.bf16.msra.mxu0 %v1539
        %2231 = vmatpush.bf16.msra.mxu0 %v1535
        %2232 = vmatpush.bf16.msra.mxu0 %v1531
        %2233 = vmatpush.bf16.msra.mxu0 %v1527
        %2234 = vmatmul.bf16.gmra.mxu0 %v458
        %v2235 = vpop.f32.mrf.mxu0
        %v2236 = vadd.f32 %v2223, %v2235
        %v2237 = vpop.f32.mrf.mxu0
        %2238 = vdwg.mxu0
        %2239 = vmatpush.bf16.msra.mxu0 %v1587
        %2240 = vmatpush.bf16.msra.mxu0 %v1583
        %2241 = vmatpush.bf16.msra.mxu0 %v1579
        %2242 = vmatpush.bf16.msra.mxu0 %v1575
        %2243 = vmatpush.bf16.msra.mxu0 %v1571
        %2244 = vmatpush.bf16.msra.mxu0 %v1567
        %2245 = vmatpush.bf16.msra.mxu0 %v1563
        %2246 = vmatpush.bf16.msra.mxu0 %v1559
        %2247 = vmatmul.bf16.gmra.mxu0 %v459
        %v2248 = vpop.f32.mrf.mxu0
        %v2249 = vadd.f32 %v2236, %v2248
        %v2250 = vpop.f32.mrf.mxu0
        %2251 = vdwg.mxu0
        %2252 = vmatpush.bf16.msra.mxu0 %v1619
        %2253 = vmatpush.bf16.msra.mxu0 %v1615
        %2254 = vmatpush.bf16.msra.mxu0 %v1611
        %2255 = vmatpush.bf16.msra.mxu0 %v1607
        %2256 = vmatpush.bf16.msra.mxu0 %v1603
        %2257 = vmatpush.bf16.msra.mxu0 %v1599
        %2258 = vmatpush.bf16.msra.mxu0 %v1595
        %2259 = vmatpush.bf16.msra.mxu0 %v1591
        %2260 = vmatmul.bf16.gmra.mxu0 %v460
        %v2261 = vpop.f32.mrf.mxu0
        %v2262 = vadd.f32 %v2249, %v2261
        %v2263 = vpop.f32.mrf.mxu0
        %2264 = vdwg.mxu0
        %2265 = vmatpush.bf16.msra.mxu0 %v1651
        %2266 = vmatpush.bf16.msra.mxu0 %v1647
        %2267 = vmatpush.bf16.msra.mxu0 %v1643
        %2268 = vmatpush.bf16.msra.mxu0 %v1639
        %2269 = vmatpush.bf16.msra.mxu0 %v1635
        %2270 = vmatpush.bf16.msra.mxu0 %v1631
        %2271 = vmatpush.bf16.msra.mxu0 %v1627
        %2272 = vmatpush.bf16.msra.mxu0 %v1623
        %2273 = vmatmul.bf16.gmra.mxu0 %v461
        %v2274 = vpop.f32.mrf.mxu0
        %v2275 = vadd.f32 %v2262, %v2274
        %v2276 = vpop.f32.mrf.mxu0
        %2277 = vdwg.mxu0
        %2278 = vmatpush.bf16.msra.mxu0 %v1683
        %2279 = vmatpush.bf16.msra.mxu0 %v1679
        %2280 = vmatpush.bf16.msra.mxu0 %v1675
        %2281 = vmatpush.bf16.msra.mxu0 %v1671
        %2282 = vmatpush.bf16.msra.mxu0 %v1667
        %2283 = vmatpush.bf16.msra.mxu0 %v1663
        %2284 = vmatpush.bf16.msra.mxu0 %v1659
        %2285 = vmatpush.bf16.msra.mxu0 %v1655
        %2286 = vmatmul.bf16.gmra.mxu0 %v462
        %v2287 = vpop.f32.mrf.mxu0
        %v2288 = vadd.f32 %v2275, %v2287
        %v2289 = vpop.f32.mrf.mxu0
        %2290 = vdwg.mxu0
        %2291 = vmatpush.bf16.msra.mxu0 %v1715
        %2292 = vmatpush.bf16.msra.mxu0 %v1711
        %2293 = vmatpush.bf16.msra.mxu0 %v1707
        %2294 = vmatpush.bf16.msra.mxu0 %v1703
        %2295 = vmatpush.bf16.msra.mxu0 %v1699
        %2296 = vmatpush.bf16.msra.mxu0 %v1695
        %2297 = vmatpush.bf16.msra.mxu0 %v1691
        %2298 = vmatpush.bf16.msra.mxu0 %v1687
        %2299 = vmatmul.bf16.gmra.mxu0 %v463
        %v2300 = vpop.f32.mrf.mxu0
        %v2301 = vadd.f32 %v2288, %v2300
        %v2302 = vpop.f32.mrf.mxu0
        %2303 = vdwg.mxu0
        %2304 = vmatpush.bf16.msra.mxu0 %v1747
        %2305 = vmatpush.bf16.msra.mxu0 %v1743
        %2306 = vmatpush.bf16.msra.mxu0 %v1739
        %2307 = vmatpush.bf16.msra.mxu0 %v1735
        %2308 = vmatpush.bf16.msra.mxu0 %v1731
        %2309 = vmatpush.bf16.msra.mxu0 %v1727
        %2310 = vmatpush.bf16.msra.mxu0 %v1723
        %2311 = vmatpush.bf16.msra.mxu0 %v1719
        %2312 = vmatmul.bf16.gmra.mxu0 %v464
        %v2313 = vpop.f32.mrf.mxu0
        %v2314 = vadd.f32 %v2301, %v2313
        %v2315 = vpop.f32.mrf.mxu0
        %2316 = vdwg.mxu0
        %2317 = vmatpush.bf16.msra.mxu0 %v1524
        %2318 = vmatpush.bf16.msra.mxu0 %v1520
        %2319 = vmatpush.bf16.msra.mxu0 %v1516
        %2320 = vmatpush.bf16.msra.mxu0 %v1512
        %2321 = vmatpush.bf16.msra.mxu0 %v1508
        %2322 = vmatpush.bf16.msra.mxu0 %v1504
        %2323 = vmatpush.bf16.msra.mxu0 %v1500
        %2324 = vmatpush.bf16.msra.mxu0 %v1496
        %2325 = vmatmul.bf16.gmra.mxu0 %v457
        %v2326 = vpop.f32.mrf.mxu0
        %v2327 = vadd.f32 0.0, %v2326
        %v2328 = vpop.f32.mrf.mxu0
        %2329 = vdwg.mxu0
        %2330 = vmatpush.bf16.msra.mxu0 %v1556
        %2331 = vmatpush.bf16.msra.mxu0 %v1552
        %2332 = vmatpush.bf16.msra.mxu0 %v1548
        %2333 = vmatpush.bf16.msra.mxu0 %v1544
        %2334 = vmatpush.bf16.msra.mxu0 %v1540
        %2335 = vmatpush.bf16.msra.mxu0 %v1536
        %2336 = vmatpush.bf16.msra.mxu0 %v1532
        %2337 = vmatpush.bf16.msra.mxu0 %v1528
        %2338 = vmatmul.bf16.gmra.mxu0 %v458
        %v2339 = vpop.f32.mrf.mxu0
        %v2340 = vadd.f32 %v2327, %v2339
        %v2341 = vpop.f32.mrf.mxu0
        %2342 = vdwg.mxu0
        %2343 = vmatpush.bf16.msra.mxu0 %v1588
        %2344 = vmatpush.bf16.msra.mxu0 %v1584
        %2345 = vmatpush.bf16.msra.mxu0 %v1580
        %2346 = vmatpush.bf16.msra.mxu0 %v1576
        %2347 = vmatpush.bf16.msra.mxu0 %v1572
        %2348 = vmatpush.bf16.msra.mxu0 %v1568
        %2349 = vmatpush.bf16.msra.mxu0 %v1564
        %2350 = vmatpush.bf16.msra.mxu0 %v1560
        %2351 = vmatmul.bf16.gmra.mxu0 %v459
        %v2352 = vpop.f32.mrf.mxu0
        %v2353 = vadd.f32 %v2340, %v2352
        %v2354 = vpop.f32.mrf.mxu0
        %2355 = vdwg.mxu0
        %2356 = vmatpush.bf16.msra.mxu0 %v1620
        %2357 = vmatpush.bf16.msra.mxu0 %v1616
        %2358 = vmatpush.bf16.msra.mxu0 %v1612
        %2359 = vmatpush.bf16.msra.mxu0 %v1608
        %2360 = vmatpush.bf16.msra.mxu0 %v1604
        %2361 = vmatpush.bf16.msra.mxu0 %v1600
        %2362 = vmatpush.bf16.msra.mxu0 %v1596
        %2363 = vmatpush.bf16.msra.mxu0 %v1592
        %2364 = vmatmul.bf16.gmra.mxu0 %v460
        %v2365 = vpop.f32.mrf.mxu0
        %v2366 = vadd.f32 %v2353, %v2365
        %v2367 = vpop.f32.mrf.mxu0
        %2368 = vdwg.mxu0
        %2369 = vmatpush.bf16.msra.mxu0 %v1652
        %2370 = vmatpush.bf16.msra.mxu0 %v1648
        %2371 = vmatpush.bf16.msra.mxu0 %v1644
        %2372 = vmatpush.bf16.msra.mxu0 %v1640
        %2373 = vmatpush.bf16.msra.mxu0 %v1636
        %2374 = vmatpush.bf16.msra.mxu0 %v1632
        %2375 = vmatpush.bf16.msra.mxu0 %v1628
        %2376 = vmatpush.bf16.msra.mxu0 %v1624
        %2377 = vmatmul.bf16.gmra.mxu0 %v461
        %v2378 = vpop.f32.mrf.mxu0
        %v2379 = vadd.f32 %v2366, %v2378
        %v2380 = vpop.f32.mrf.mxu0
        %2381 = vdwg.mxu0
        %2382 = vmatpush.bf16.msra.mxu0 %v1684
        %2383 = vmatpush.bf16.msra.mxu0 %v1680
        %2384 = vmatpush.bf16.msra.mxu0 %v1676
        %2385 = vmatpush.bf16.msra.mxu0 %v1672
        %2386 = vmatpush.bf16.msra.mxu0 %v1668
        %2387 = vmatpush.bf16.msra.mxu0 %v1664
        %2388 = vmatpush.bf16.msra.mxu0 %v1660
        %2389 = vmatpush.bf16.msra.mxu0 %v1656
        %2390 = vmatmul.bf16.gmra.mxu0 %v462
        %v2391 = vpop.f32.mrf.mxu0
        %v2392 = vadd.f32 %v2379, %v2391
        %v2393 = vpop.f32.mrf.mxu0
        %2394 = vdwg.mxu0
        %2395 = vmatpush.bf16.msra.mxu0 %v1716
        %2396 = vmatpush.bf16.msra.mxu0 %v1712
        %2397 = vmatpush.bf16.msra.mxu0 %v1708
        %2398 = vmatpush.bf16.msra.mxu0 %v1704
        %2399 = vmatpush.bf16.msra.mxu0 %v1700
        %2400 = vmatpush.bf16.msra.mxu0 %v1696
        %2401 = vmatpush.bf16.msra.mxu0 %v1692
        %2402 = vmatpush.bf16.msra.mxu0 %v1688
        %2403 = vmatmul.bf16.gmra.mxu0 %v463
        %v2404 = vpop.f32.mrf.mxu0
        %v2405 = vadd.f32 %v2392, %v2404
        %v2406 = vpop.f32.mrf.mxu0
        %2407 = vdwg.mxu0
        %2408 = vmatpush.bf16.msra.mxu0 %v1748
        %2409 = vmatpush.bf16.msra.mxu0 %v1744
        %2410 = vmatpush.bf16.msra.mxu0 %v1740
        %2411 = vmatpush.bf16.msra.mxu0 %v1736
        %2412 = vmatpush.bf16.msra.mxu0 %v1732
        %2413 = vmatpush.bf16.msra.mxu0 %v1728
        %2414 = vmatpush.bf16.msra.mxu0 %v1724
        %2415 = vmatpush.bf16.msra.mxu0 %v1720
        %2416 = vmatmul.bf16.gmra.mxu0 %v464
        %v2417 = vpop.f32.mrf.mxu0
        %v2418 = vadd.f32 %v2405, %v2417
        %v2419 = vpop.f32.mrf.mxu0
        %2420 = vdwg.mxu0
        %v2421 = vadd.f32 %v465, %v2106
        %v2422 = vadd.f32 %v466, %v2210
        %v2423 = vadd.f32 %v467, %v2314
        %v2424 = vadd.f32 %v468, %v2418
        %2425 = vst [vmem:[%s7] sm:$0xff] %v2421
        %2426 = vst [vmem:[%s7 + $0x8] sm:$0xff] %v2422
        %2427 = vst [vmem:[%s7 + $0x10] sm:$0xff] %v2423
        %2428 = vst [vmem:[%s7 + $0x18] sm:$0xff] %v2424
        %p2429 = scmp.eq.s32.totalorder %s23, 3
        // Predicated region
        $region73: #{vae_forward.2} parent=47 // pred_check
          %p2430 = pneg %p2429
        $region74: #{vae_forward.2} parent=47 // pred_check_branch
          %2432 = sbr.rel (%p2430) target = $region76
        $region75: #{vae_forward.2} parent=47 // pred_region
          %v2433 = vld [vmem:[%s7] sm:$0xff]
          %v2434 = vld [vmem:[%s7 + $0x8] sm:$0xff]
          %v2435 = vld [vmem:[%s7 + $0x10] sm:$0xff]
          %v2436 = vld [vmem:[%s7 + $0x18] sm:$0xff]
          %v2437 = vld [vmem:[#allocation4] sm:$0xf]
          %v2439 = vperm.slane %v2437, 0
          %v2440 = vperm.slane %v2437, 1
          %v2441 = vperm.slane %v2437, 2
          %v2442 = vperm.slane %v2437, 3
          %v2447 = vadd.f32 %v2433, %v2439
          %v2448 = vadd.f32 %v2434, %v2440
          %v2449 = vadd.f32 %v2435, %v2441
          %v2450 = vadd.f32 %v2436, %v2442
          %vm2451 = vcmp.gt.f32.partialorder %v2447, 0.0
          %vm2452 = vcmp.gt.f32.partialorder %v2448, 0.0
          %vm2453 = vcmp.gt.f32.partialorder %v2449, 0.0
          %vm2454 = vcmp.gt.f32.partialorder %v2450, 0.0
          %v2455 = vmul.f32 %v2447, 0.2
          %v2456 = vmul.f32 %v2448, 0.2
          %v2457 = vmul.f32 %v2449, 0.2
          %v2458 = vmul.f32 %v2450, 0.2
          %v2459 = vsel %vm2451, %v2447, %v2455
          %v2460 = vsel %vm2452, %v2448, %v2456
          %v2461 = vsel %vm2453, %v2449, %v2457
          %v2462 = vsel %vm2454, %v2450, %v2458
          %v2463 = vld [vmem:[%s3] sm:$0xff]
          %v2464 = vld [vmem:[%s3 + $0x8] sm:$0xff]
          %v2465 = vld [vmem:[%s3 + $0x10] sm:$0xff]
          %v2466 = vld [vmem:[%s3 + $0x18] sm:$0xff]
          %v2467 = vld [vmem:[%s3 + $0x20] sm:$0xff]
          %v2468 = vld [vmem:[%s3 + $0x28] sm:$0xff]
          %v2469 = vld [vmem:[%s3 + $0x30] sm:$0xff]
          %v2470 = vld [vmem:[%s3 + $0x38] sm:$0xff]
          %v2471 = vld [vmem:[%s3 + $0x40] sm:$0xff]
          %v2472 = vld [vmem:[%s3 + $0x48] sm:$0xff]
          %v2473 = vld [vmem:[%s3 + $0x50] sm:$0xff]
          %v2474 = vld [vmem:[%s3 + $0x58] sm:$0xff]
          %v2475 = vld [vmem:[%s3 + $0x60] sm:$0xff]
          %v2476 = vld [vmem:[%s3 + $0x68] sm:$0xff]
          %v2477 = vld [vmem:[%s3 + $0x70] sm:$0xff]
          %v2478 = vld [vmem:[%s3 + $0x78] sm:$0xff]
          %v2479 = vld [vmem:[%s3 + $0x80] sm:$0xff]
          %v2480 = vld [vmem:[%s3 + $0x88] sm:$0xff]
          %v2481 = vld [vmem:[%s3 + $0x90] sm:$0xff]
          %v2482 = vld [vmem:[%s3 + $0x98] sm:$0xff]
          %v2483 = vld [vmem:[%s3 + $0xa0] sm:$0xff]
          %v2484 = vld [vmem:[%s3 + $0xa8] sm:$0xff]
          %v2485 = vld [vmem:[%s3 + $0xb0] sm:$0xff]
          %v2486 = vld [vmem:[%s3 + $0xb8] sm:$0xff]
          %v2487 = vld [vmem:[%s3 + $0xc0] sm:$0xff]
          %v2488 = vld [vmem:[%s3 + $0xc8] sm:$0xff]
          %v2489 = vld [vmem:[%s3 + $0xd0] sm:$0xff]
          %v2490 = vld [vmem:[%s3 + $0xd8] sm:$0xff]
          %v2491 = vld [vmem:[%s3 + $0xe0] sm:$0xff]
          %v2492 = vld [vmem:[%s3 + $0xe8] sm:$0xff]
          %v2493 = vld [vmem:[%s3 + $0xf0] sm:$0xff]
          %v2494 = vld [vmem:[%s3 + $0xf8] sm:$0xff]
          %v2495 = vld [vmem:[%s3 + $0x100] sm:$0xff]
          %v2496 = vld [vmem:[%s3 + $0x108] sm:$0xff]
          %v2497 = vld [vmem:[%s3 + $0x110] sm:$0xff]
          %v2498 = vld [vmem:[%s3 + $0x118] sm:$0xff]
          %v2499 = vld [vmem:[%s3 + $0x120] sm:$0xff]
          %v2500 = vld [vmem:[%s3 + $0x128] sm:$0xff]
          %v2501 = vld [vmem:[%s3 + $0x130] sm:$0xff]
          %v2502 = vld [vmem:[%s3 + $0x138] sm:$0xff]
          %v2503 = vld [vmem:[%s3 + $0x140] sm:$0xff]
          %v2504 = vld [vmem:[%s3 + $0x148] sm:$0xff]
          %v2505 = vld [vmem:[%s3 + $0x150] sm:$0xff]
          %v2506 = vld [vmem:[%s3 + $0x158] sm:$0xff]
          %v2507 = vld [vmem:[%s3 + $0x160] sm:$0xff]
          %v2508 = vld [vmem:[%s3 + $0x168] sm:$0xff]
          %v2509 = vld [vmem:[%s3 + $0x170] sm:$0xff]
          %v2510 = vld [vmem:[%s3 + $0x178] sm:$0xff]
          %v2511 = vld [vmem:[%s3 + $0x180] sm:$0xff]
          %v2512 = vld [vmem:[%s3 + $0x188] sm:$0xff]
          %v2513 = vld [vmem:[%s3 + $0x190] sm:$0xff]
          %v2514 = vld [vmem:[%s3 + $0x198] sm:$0xff]
          %v2515 = vld [vmem:[%s3 + $0x1a0] sm:$0xff]
          %v2516 = vld [vmem:[%s3 + $0x1a8] sm:$0xff]
          %v2517 = vld [vmem:[%s3 + $0x1b0] sm:$0xff]
          %v2518 = vld [vmem:[%s3 + $0x1b8] sm:$0xff]
          %v2519 = vld [vmem:[%s3 + $0x1c0] sm:$0xff]
          %v2520 = vld [vmem:[%s3 + $0x1c8] sm:$0xff]
          %v2521 = vld [vmem:[%s3 + $0x1d0] sm:$0xff]
          %v2522 = vld [vmem:[%s3 + $0x1d8] sm:$0xff]
          %v2523 = vld [vmem:[%s3 + $0x1e0] sm:$0xff]
          %v2524 = vld [vmem:[%s3 + $0x1e8] sm:$0xff]
          %v2525 = vld [vmem:[%s3 + $0x1f0] sm:$0xff]
          %v2526 = vld [vmem:[%s3 + $0x1f8] sm:$0xff]
          %v2527 = vld [vmem:[#allocation6] sm:$0x1]
          %v2529 = vperm.slane %v2527, 0
          %2531 = vmatpush.msra.mxu0 %v2478
          %2532 = vmatpush.msra.mxu0 %v2477
          %2533 = vmatpush.msra.mxu0 %v2476
          %2534 = vmatpush.msra.mxu0 %v2475
          %2535 = vmatpush.msra.mxu0 %v2474
          %2536 = vmatpush.msra.mxu0 %v2473
          %2537 = vmatpush.msra.mxu0 %v2472
          %2538 = vmatpush.msra.mxu0 %v2471
          %2539 = vmatpush.msra.mxu0 %v2470
          %2540 = vmatpush.msra.mxu0 %v2469
          %2541 = vmatpush.msra.mxu0 %v2468
          %2542 = vmatpush.msra.mxu0 %v2467
          %2543 = vmatpush.msra.mxu0 %v2466
          %2544 = vmatpush.msra.mxu0 %v2465
          %2545 = vmatpush.msra.mxu0 %v2464
          %2546 = vmatpush.msra.mxu0 %v2463
          %2547 = vmatmul.f32.gmra.mxu0 %v2459
          %v2548 = vpop.f32.mrf.mxu0
          %v2549 = vadd.f32 %v2529, %v2548
          %2550 = vdwg.mxu0
          %2551 = vmatpush.msra.mxu0 %v2494
          %2552 = vmatpush.msra.mxu0 %v2493
          %2553 = vmatpush.msra.mxu0 %v2492
          %2554 = vmatpush.msra.mxu0 %v2491
          %2555 = vmatpush.msra.mxu0 %v2490
          %2556 = vmatpush.msra.mxu0 %v2489
          %2557 = vmatpush.msra.mxu0 %v2488
          %2558 = vmatpush.msra.mxu0 %v2487
          %2559 = vmatpush.msra.mxu0 %v2486
          %2560 = vmatpush.msra.mxu0 %v2485
          %2561 = vmatpush.msra.mxu0 %v2484
          %2562 = vmatpush.msra.mxu0 %v2483
          %2563 = vmatpush.msra.mxu0 %v2482
          %2564 = vmatpush.msra.mxu0 %v2481
          %2565 = vmatpush.msra.mxu0 %v2480
          %2566 = vmatpush.msra.mxu0 %v2479
          %2567 = vmatmul.f32.gmra.mxu0 %v2460
          %v2568 = vpop.f32.mrf.mxu0
          %v2569 = vadd.f32 %v2549, %v2568
          %2570 = vdwg.mxu0
          %2571 = vmatpush.msra.mxu0 %v2510
          %2572 = vmatpush.msra.mxu0 %v2509
          %2573 = vmatpush.msra.mxu0 %v2508
          %2574 = vmatpush.msra.mxu0 %v2507
          %2575 = vmatpush.msra.mxu0 %v2506
          %2576 = vmatpush.msra.mxu0 %v2505
          %2577 = vmatpush.msra.mxu0 %v2504
          %2578 = vmatpush.msra.mxu0 %v2503
          %2579 = vmatpush.msra.mxu0 %v2502
          %2580 = vmatpush.msra.mxu0 %v2501
          %2581 = vmatpush.msra.mxu0 %v2500
          %2582 = vmatpush.msra.mxu0 %v2499
          %2583 = vmatpush.msra.mxu0 %v2498
          %2584 = vmatpush.msra.mxu0 %v2497
          %2585 = vmatpush.msra.mxu0 %v2496
          %2586 = vmatpush.msra.mxu0 %v2495
          %2587 = vmatmul.f32.gmra.mxu0 %v2461
          %v2588 = vpop.f32.mrf.mxu0
          %v2589 = vadd.f32 %v2569, %v2588
          %2590 = vdwg.mxu0
          %2591 = vmatpush.msra.mxu0 %v2526
          %2592 = vmatpush.msra.mxu0 %v2525
          %2593 = vmatpush.msra.mxu0 %v2524
          %2594 = vmatpush.msra.mxu0 %v2523
          %2595 = vmatpush.msra.mxu0 %v2522
          %2596 = vmatpush.msra.mxu0 %v2521
          %2597 = vmatpush.msra.mxu0 %v2520
          %2598 = vmatpush.msra.mxu0 %v2519
          %2599 = vmatpush.msra.mxu0 %v2518
          %2600 = vmatpush.msra.mxu0 %v2517
          %2601 = vmatpush.msra.mxu0 %v2516
          %2602 = vmatpush.msra.mxu0 %v2515
          %2603 = vmatpush.msra.mxu0 %v2514
          %2604 = vmatpush.msra.mxu0 %v2513
          %2605 = vmatpush.msra.mxu0 %v2512
          %2606 = vmatpush.msra.mxu0 %v2511
          %2607 = vmatmul.f32.gmra.mxu0 %v2462
          %v2608 = vpop.f32.mrf.mxu0
          %v2609 = vadd.f32 %v2589, %v2608
          %2610 = vdwg.mxu0
          %v2611 = vtanh.pop %v2609
          %v2612 = vld [vmem:[#allocation7] sm:$0xff]
          %v2613 = vld [vmem:[#allocation7 + $0x8] sm:$0xff]
          %v2614 = vld [vmem:[#allocation7 + $0x10] sm:$0xff]
          %v2615 = vld [vmem:[#allocation7 + $0x18] sm:$0xff]
          %v2616 = vld [vmem:[#allocation7 + $0x20] sm:$0xff]
          %v2617 = vld [vmem:[#allocation7 + $0x28] sm:$0xff]
          %v2618 = vld [vmem:[#allocation7 + $0x30] sm:$0xff]
          %v2619 = vld [vmem:[#allocation7 + $0x38] sm:$0xff]
          %v2620 = vld [vmem:[#allocation7 + $0x40] sm:$0xff]
          %v2621 = vld [vmem:[#allocation7 + $0x48] sm:$0xff]
          %v2622 = vld [vmem:[#allocation7 + $0x50] sm:$0xff]
          %v2623 = vld [vmem:[#allocation7 + $0x58] sm:$0xff]
          %v2624 = vld [vmem:[#allocation7 + $0x60] sm:$0xff]
          %v2625 = vld [vmem:[#allocation7 + $0x68] sm:$0xff]
          %v2626 = vld [vmem:[#allocation7 + $0x70] sm:$0xff]
          %v2627 = vld [vmem:[#allocation7 + $0x78] sm:$0xff]
          %v2628 = vld [vmem:[#allocation9] sm:$0xf]
          %v2630 = vperm.slane %v2628, 0
          %v2631 = vperm.slane %v2628, 1
          %v2632 = vperm.slane %v2628, 2
          %v2633 = vperm.slane %v2628, 3
          %vm2638 = vcmask 261120
          %v2640 = vsel %vm2638, %v2611, 0
          %2642 = vmatpush.msra.mxu0 0.0
          %2643 = vmatpush.msra.mxu0 0.0
          %2644 = vmatpush.msra.mxu0 0.0
          %2645 = vmatpush.msra.mxu0 0.0
          %2646 = vmatpush.msra.mxu0 0.0
          %2647 = vmatpush.msra.mxu0 0.0
          %2648 = vmatpush.msra.mxu0 0.0
          %2649 = vmatpush.msra.mxu0 0.0
          %2650 = vmatpush.msra.mxu0 0.0
          %2651 = vmatpush.msra.mxu0 0.0
          %2652 = vmatpush.msra.mxu0 0.0
          %2653 = vmatpush.msra.mxu0 0.0
          %2654 = vmatpush.msra.mxu0 %v2624
          %2655 = vmatpush.msra.mxu0 %v2620
          %2656 = vmatpush.msra.mxu0 %v2616
          %2657 = vmatpush.msra.mxu0 %v2612
          %2658 = vmatmul.f32.gmra.mxu0 %v2640
          %v2659 = vpop.f32.mrf.mxu0
          %v2660 = vadd.f32 %v2630, %v2659
          %2661 = vdwg.mxu0
          %2662 = vmatpush.msra.mxu0 0.0
          %2663 = vmatpush.msra.mxu0 0.0
          %2664 = vmatpush.msra.mxu0 0.0
          %2665 = vmatpush.msra.mxu0 0.0
          %2666 = vmatpush.msra.mxu0 0.0
          %2667 = vmatpush.msra.mxu0 0.0
          %2668 = vmatpush.msra.mxu0 0.0
          %2669 = vmatpush.msra.mxu0 0.0
          %2670 = vmatpush.msra.mxu0 0.0
          %2671 = vmatpush.msra.mxu0 0.0
          %2672 = vmatpush.msra.mxu0 0.0
          %2673 = vmatpush.msra.mxu0 0.0
          %2674 = vmatpush.msra.mxu0 %v2625
          %2675 = vmatpush.msra.mxu0 %v2621
          %2676 = vmatpush.msra.mxu0 %v2617
          %2677 = vmatpush.msra.mxu0 %v2613
          %2678 = vmatmul.f32.gmra.mxu0 %v2640
          %v2679 = vpop.f32.mrf.mxu0
          %v2680 = vadd.f32 %v2631, %v2679
          %2681 = vdwg.mxu0
          %2682 = vmatpush.msra.mxu0 0.0
          %2683 = vmatpush.msra.mxu0 0.0
          %2684 = vmatpush.msra.mxu0 0.0
          %2685 = vmatpush.msra.mxu0 0.0
          %2686 = vmatpush.msra.mxu0 0.0
          %2687 = vmatpush.msra.mxu0 0.0
          %2688 = vmatpush.msra.mxu0 0.0
          %2689 = vmatpush.msra.mxu0 0.0
          %2690 = vmatpush.msra.mxu0 0.0
          %2691 = vmatpush.msra.mxu0 0.0
          %2692 = vmatpush.msra.mxu0 0.0
          %2693 = vmatpush.msra.mxu0 0.0
          %2694 = vmatpush.msra.mxu0 %v2626
          %2695 = vmatpush.msra.mxu0 %v2622
          %2696 = vmatpush.msra.mxu0 %v2618
          %2697 = vmatpush.msra.mxu0 %v2614
          %2698 = vmatmul.f32.gmra.mxu0 %v2640
          %v2699 = vpop.f32.mrf.mxu0
          %v2700 = vadd.f32 %v2632, %v2699
          %2701 = vdwg.mxu0
          %2702 = vmatpush.msra.mxu0 0.0
          %2703 = vmatpush.msra.mxu0 0.0
          %2704 = vmatpush.msra.mxu0 0.0
          %2705 = vmatpush.msra.mxu0 0.0
          %2706 = vmatpush.msra.mxu0 0.0
          %2707 = vmatpush.msra.mxu0 0.0
          %2708 = vmatpush.msra.mxu0 0.0
          %2709 = vmatpush.msra.mxu0 0.0
          %2710 = vmatpush.msra.mxu0 0.0
          %2711 = vmatpush.msra.mxu0 0.0
          %2712 = vmatpush.msra.mxu0 0.0
          %2713 = vmatpush.msra.mxu0 0.0
          %2714 = vmatpush.msra.mxu0 %v2627
          %2715 = vmatpush.msra.mxu0 %v2623
          %2716 = vmatpush.msra.mxu0 %v2619
          %2717 = vmatpush.msra.mxu0 %v2615
          %2718 = vmatmul.f32.gmra.mxu0 %v2640
          %v2719 = vpop.f32.mrf.mxu0
          %v2720 = vadd.f32 %v2633, %v2719
          %2721 = vdwg.mxu0
          %v2722 = vmax.f32 %v2660, 0.0
          %v2723 = vmax.f32 %v2680, 0.0
          %v2724 = vmax.f32 %v2700, 0.0
          %v2725 = vmax.f32 %v2720, 0.0
          %2726 = vst [vmem:[%s7] sm:$0xff] %v2722
          %2727 = vst [vmem:[%s7 + $0x8] sm:$0xff] %v2723
          %2728 = vst [vmem:[%s7 + $0x10] sm:$0xff] %v2724
          %2729 = vst [vmem:[%s7 + $0x18] sm:$0xff] %v2725
        $region76: #{vae_forward.2} parent=47 // pred_fallthru
          _
        // Predicated region
        $region77: #{vae_forward.2} parent=47 // pred_check
          %p2730 = pneg %p193
        $region78: #{vae_forward.2} parent=47 // pred_check_branch
          %2732 = sbr.rel (%p2730) target = $region80
        $region79: #{vae_forward.2} parent=47 // pred_region
          _
        $region80: #{vae_forward.2} parent=47 // pred_fallthru
          _
        // Predicated region
        $region81: #{vae_forward.2} parent=47 // pred_check
          %p2733 = pneg %p193
        $region82: #{vae_forward.2} parent=47 // pred_check_branch
          %2735 = sbr.rel (%p2733) target = $region84
        $region83: #{vae_forward.2} parent=47 // pred_region
          _
        $region84: #{vae_forward.2} parent=47 // pred_fallthru
          _
      $region48: #{vae_forward.2} parent=5 // pred_fallthru
        _
      %p2736 = scmp.le.s32.totalorder 2, %s18
      // Predicated region
      $region85: #{vae_forward.2} parent=5 // pred_check
        %p2737 = pneg %p2736
      $region86: #{vae_forward.2} parent=5 // pred_check_branch
        %2739 = sbr.rel (%p2737) target = $region88
      $region87: #{vae_forward.2} parent=5 // pred_region
        %s2740 = ssub.s32 %s18, 2
      $region88: #{vae_forward.2} parent=5 // pred_fallthru
        _
    $region6: #{vae_forward.2} parent=1 // loop_footer
      %s22 = sadd.s32 1, %s18
    $region7: #{vae_forward.2} parent=1 // loop_footer_branch
      %17 = sbr.rel target = $region3
    $region8: #{vae_forward.2} parent=1 // loop_exit
      _
    %2741 = vsyncpa [#allocation3], 1
    %s2742 = scalar_lea.sflag [#allocation3], 1
    %2743 = vsyncpa %s2742, 1
    %2744 = vsyncpa [#allocation5], 1
    %2745 = vsyncpa [#allocation8], 1

</llo_original>
